<compile_context>
chip_gen: v7x
topology: tpu7x:2x2x1
jax: 0.10.0
libtpu: 0.0.40
codegen_flags: <defaults>
</compile_context>

<pallas_src>
import numpy as np

import jax
import jax.numpy as jnp
from jax import lax
from jax.experimental import pallas as pl
from jax.experimental.pallas import tpu as pltpu

# ---- model hyper-parameters (module defaults, small line_length so the
#      synthetic encoding table stays tiny) ----
DIM_POLICY = 16
DIM_VALUE = 32
DIM_EMBED = DIM_POLICY + DIM_VALUE
MAP_MAX = 32.0          # map_max
MAP_BOUND = 6.0         # mapping_activation ChannelWiseLeakyReLU bound
LINE_LENGTH = 5         # small table for the synthetic test


def get_total_num_line_encoding(length):
    half = length // 2
    code = 2 * 3 ** length
    for i in range(0, half + 1):
        code += 2 * 3 ** i
    for i in range(half + 2, length):
        code += 1 * 3 ** i
    return code + 1


def _shift_matrices(H, W):
  """S[t] is (HW, HW) with S[t, li, lo] = 1 iff input position li is the
  zero-padded 3x3 neighbour (dy-1, dx-1) of output position lo (t = dy*3+dx).
  Then x @ (sum_t w[t] * S[t]) is the zero-padded depthwise 3x3 conv."""
  HW = H * W
  S = np.zeros((9, HW, HW), np.float32)
  t = 0
  for a in (-1, 0, 1):        # row offset  (dy - 1)
    for b in (-1, 0, 1):      # col offset  (dx - 1)
      for lo in range(HW):
        h, w = divmod(lo, W)
        hs, ws = h + a, w + b
        if 0 <= hs < H and 0 <= ws < W:
          S[t, hs * W + ws, lo] = 1.0
      t += 1
  return S


def _tile_config():
  """Per-generation batch-tile / scoped-VMEM defaults (review guidance)."""
  kind = ""
  try:
    kind = jax.devices()[0].device_kind.lower()
  except Exception:
    pass
  if any(t in kind for t in ("v5 lite", "v5e", "v5lite", "v6 lite", "v6e")):
    return 512, 96 * 1024 * 1024        # 128 MiB VMEM parts: big tiles
  # v7x (64 MiB / TensorCore) and unknown parts: conservative.
  return 256, 40 * 1024 * 1024


def linennue_kernel(feat_ref, chp_ref, convb_ref, rmat_ref, psum_ref,
                    vmean_ref, vrow_ref, w1_ref, w2_ref, w3_ref,
                    pa_ref, b3_ref, out_ref):
  bt = feat_ref.shape[0]
  ng, ghw, _ = rmat_ref.shape            # conv groups, lanes per group
  hw = psum_ref.shape[2]                 # spatial positions (policy lanes)
  phw = ng * ghw                         # policy feature lanes (= P * HW)
  f32 = jnp.float32

  def leaky(x, slope_m1_row):
    # ChannelWiseLeakyReLU core: x + min(x, 0) * (slope - 1)
    return x + (-jax.nn.relu(-x)) * slope_m1_row

  # ---- policy head: mapping activation + depthwise 3x3 conv (+bias, ReLU)
  #      + 1x1 conv channel sum, all as lane-aligned slices / MXU dots ----
  pol = jnp.zeros((bt, hw), f32)
  for g in range(ng):                    # static unroll, ng == 4
    lo = g * ghw
    fg = feat_ref[:, lo:lo + ghw].astype(f32)                    # (bt, ghw)
    fg = leaky(fg, chp_ref[0:1, lo:lo + ghw]) + chp_ref[1:2, lo:lo + ghw]
    xg = jnp.dot(fg.astype(jnp.bfloat16), rmat_ref[g],           # bf16 MXU
                 preferred_element_type=f32)                     # (bt, ghw)
    xg = jax.nn.relu(xg + convb_ref[g:g + 1, :])                 # Conv2dBlock
    pol = pol + jnp.dot(xg, psum_ref[g],                         # plin folded
                        preferred_element_type=f32)              # f32 (tiny)
  pol = leaky(pol, pa_ref[...])                                  # policy act.

  # ---- value head ----
  fv = feat_ref[:, phw:].astype(f32)                             # (bt, V*HW)
  fv = leaky(fv, chp_ref[0:1, phw:]) + chp_ref[1:2, phw:]
  v = jnp.dot(fv.astype(jnp.bfloat16), vmean_ref[...],           # spatial mean
              preferred_element_type=f32)                        # (bt, V)
  v = leaky(v, vrow_ref[0:1, :])                                 # value act.
  v = jax.nn.relu(jnp.dot(v, w1_ref[...], preferred_element_type=f32)
                  + vrow_ref[1:2, :])
  v = jax.nn.relu(jnp.dot(v, w2_ref[...], preferred_element_type=f32)
                  + vrow_ref[2:3, :])
  v = jnp.dot(v, w3_ref[...], preferred_element_type=f32) + b3_ref[...]

  # Lane-dense combined output slab: policy in lanes [0, hw), value after it.
  out_ref[...] = jnp.concatenate([pol, v], axis=-1).astype(out_ref.dtype)


def linennue_forward(line_encoding, params, b_tile=None):
  """line_encoding: (B, L, H, W) int32 indices (== data['line_encoding'])."""
  B, L, H, W = line_encoding.shape
  C, P, V = DIM_EMBED, DIM_POLICY, DIM_VALUE
  HW = H * W

  # Conv channel groups sized so each group spans ~256 lanes (128-aligned
  # slices for HW=64); falls back gracefully for other spatial sizes.
  GC = max(1, min(P, 256 // HW))
  while P % GC:
    GC -= 1
  NG = P // GC
  GHW = GC * HW

  # Value output padded so policy+value packs into a lane-dense slab
  # (HW=64 -> VPAD=64 -> 128-lane output rows).
  VPAD = max(8, ((HW + 127) // 128) * 128 - HW)

  bt_def, vmem_limit = _tile_config()
  bt = bt_def if b_tile is None else b_tile
  bt = min(bt, B)
  if bt < B:
    bt = max(8, (bt // 8) * 8)
  B_pad = -(-B // bt) * bt

  # ---- embedding gather with the map_max soft clamp baked into the table,
  #      mean over line directions done here too; stream (B, C*HW) bf16 ----
  table = MAP_MAX * jnp.tanh(params['embed'].astype(jnp.float32) / MAP_MAX)
  feat = jnp.take(table, line_encoding, axis=0)          # (B, L, H, W, C) f32
  feat = jnp.mean(feat, axis=1)                          # (B, H, W, C)
  feat = jnp.transpose(feat, (0, 3, 1, 2)).reshape(B, C * HW)  # channel-major
  feat = feat.astype(jnp.bfloat16)
  if B_pad != B:
    feat = jnp.pad(feat, ((0, B_pad - B), (0, 0)))

  # ---- mapping_activation params, lane-broadcast over HW (no trailing-1) ----
  slope_m1 = jnp.tanh(params['ns_map'] / MAP_BOUND) * MAP_BOUND - 1.0
  chp = jnp.stack([jnp.repeat(slope_m1, HW),
                   jnp.repeat(params['bias_map'], HW)])          # (2, C*HW)

  # ---- depthwise conv taps folded into per-channel (HW, HW) matrices, then
  #      grouped into NG block-diagonal (GHW, GHW) bf16 matrices ----
  S = jnp.asarray(_shift_matrices(H, W))                         # (9, HW, HW)
  Rc = jnp.einsum('ct,tij->cij', params['dw_w'].reshape(P, 9), S)
  rmat = jnp.zeros((NG, GHW, GHW), jnp.float32)
  for g in range(NG):
    for j in range(GC):
      rmat = rmat.at[g, j * HW:(j + 1) * HW, j * HW:(j + 1) * HW].set(
          Rc[g * GC + j])
  rmat = rmat.astype(jnp.bfloat16)

  convb = jnp.repeat(params['dw_b'].reshape(NG, GC), HW, axis=1)  # (NG, GHW)

  # 1x1 policy conv (plin, no bias) folded into per-group channel-sum mats.
  eye = jnp.eye(HW, dtype=jnp.float32)
  psum = jnp.stack([
      jnp.concatenate([params['plin_w'][g * GC + j] * eye for j in range(GC)],
                      axis=0)
      for g in range(NG)])                                        # (NG,GHW,HW)

  # Value spatial mean as a (V*HW, V) bf16 matmul (entries 1/HW are exact).
  vmean = (jnp.kron(jnp.eye(V), jnp.ones((HW, 1))) / HW).astype(jnp.bfloat16)

  vrow = jnp.stack([params['va_ns'] - 1.0, params['b1'], params['b2']])  # (3,V)
  pa_row = (params['pa_ns'][0] - 1.0) * jnp.ones((1, HW), jnp.float32)
  w3p = jnp.pad(params['w3'], ((0, 0), (0, VPAD - params['w3'].shape[1])))
  b3_row = jnp.pad(params['b3'], (0, VPAD - params['b3'].shape[0])
                   ).reshape(1, VPAD)

  args = (feat, chp, convb, rmat, psum, vmean, vrow,
          params['w1'], params['w2'], w3p, pa_row, b3_row)

  def resident(a):   # whole array, constant index_map -> stays VMEM-resident
    return pl.BlockSpec(a.shape, lambda i, _n=a.ndim: (0,) * _n)

  in_specs = [pl.BlockSpec((bt, C * HW), lambda i: (i, 0))]
  in_specs += [resident(a) for a in args[1:]]

  out_shape = jax.ShapeDtypeStruct((B_pad, HW + VPAD), jnp.float32)
  out_specs = pl.BlockSpec((bt, HW + VPAD), lambda i: (i, 0))

  # NOTE(v7x): keep B large enough that B_pad // bt >= 2 (ideally even) so the
  # "parallel" batch-tile axis actually shards across both TensorCores.
  out = pl.pallas_call(
      linennue_kernel,
      out_shape=out_shape,
      grid_spec=pltpu.PrefetchScalarGridSpec(
          num_scalar_prefetch=0,
          grid=(B_pad // bt,),
          in_specs=in_specs,
          out_specs=out_specs),
      compiler_params=pltpu.CompilerParams(
          dimension_semantics=("parallel",),
          vmem_limit_bytes=vmem_limit),
  )(*args)

  value = out[:B, HW:HW + 3]
  policy = out[:B, :HW].reshape(B, 1, H, W)
  return value, policy


# ---------------- pure-JAX reference (for correctness check) ----------------
def reference_forward(line_encoding, params):
  feat = jnp.take(params['embed'], line_encoding, axis=0).astype(jnp.float32)
  feat = jnp.transpose(feat, (0, 1, 4, 2, 3))                   # (B,L,C,H,W)
  feat = MAP_MAX * jnp.tanh(feat / MAP_MAX)
  feat = jnp.mean(feat, axis=1)                                 # (B,C,H,W)
  slope = (jnp.tanh(params['ns_map'] / MAP_BOUND) * MAP_BOUND)[None, :, None, None]
  feat = feat + (-jax.nn.relu(-feat)) * (slope - 1.0)
  feat = feat + params['bias_map'][None, :, None, None]

  pol = feat[:, :DIM_POLICY]
  w = params['dw_w'][:, None, :, :]                             # (P,1,3,3)
  pol = lax.conv_general_dilated(
      pol, w, window_strides=(1, 1), padding=((1, 1), (1, 1)),
      feature_group_count=DIM_POLICY,
      dimension_numbers=('NCHW', 'OIHW', 'NCHW'))
  pol = jax.nn.relu(pol + params['dw_b'][None, :, None, None])
  pol = jnp.einsum('bchw,c->bhw', pol, params['plin_w'])[:, None]
  pol = pol + (-jax.nn.relu(-pol)) * (params['pa_ns'][0] - 1.0)

  val = jnp.mean(feat[:, DIM_POLICY:], axis=(2, 3))             # (B,V)
  val = val + (-jax.nn.relu(-val)) * (params['va_ns'][None, :] - 1.0)
  val = jax.nn.relu(val @ params['w1'] + params['b1'])
  val = jax.nn.relu(val @ params['w2'] + params['b2'])
  val = val @ params['w3'] + params['b3']
  return val, pol


def init_params(key, num_codes):
  ks = jax.random.split(key, 12)

  def rn(k, shape, scale=0.1):
    return jax.random.normal(k, shape, dtype=jnp.float32) * scale

  return dict(
      # bf16 table: halves HBM traffic of the streamed features.
      embed=rn(ks[0], (num_codes, DIM_EMBED), 1.0).astype(jnp.bfloat16),
      ns_map=jnp.full((DIM_EMBED,), 0.5, jnp.float32) + rn(ks[1], (DIM_EMBED,)),
      bias_map=rn(ks[2], (DIM_EMBED,)),
      dw_w=rn(ks[3], (DIM_POLICY, 3, 3), 0.3),
      dw_b=rn(ks[4], (DIM_POLICY,)),
      plin_w=rn(ks[5], (DIM_POLICY,), 0.3),
      pa_ns=jnp.full((1,), 0.5, jnp.float32),
      va_ns=jnp.full((DIM_VALUE,), 0.5, jnp.float32) + rn(ks[6], (DIM_VALUE,)),
      w1=rn(ks[7], (DIM_VALUE, DIM_VALUE), 0.2),
      b1=rn(ks[8], (DIM_VALUE,)),
      w2=rn(ks[9], (DIM_VALUE, DIM_VALUE), 0.2),
      b2=rn(ks[10], (DIM_VALUE,)),
      w3=rn(ks[11], (DIM_VALUE, 3), 0.2),
      b3=jnp.zeros((3,), jnp.float32),
  )


if __name__ == "__main__":
  B, L, H, W = 2, 4, 8, 8          # batch, line directions, board spatial dims
  num_codes = get_total_num_line_encoding(LINE_LENGTH)

  key = jax.random.PRNGKey(0)
  k_param, k_idx = jax.random.split(key)
  params = init_params(k_param, num_codes)
  line_encoding = jax.random.randint(
      k_idx, (B, L, H, W), 0, num_codes, dtype=jnp.int32)

  value, policy = jax.block_until_ready(
      jax.jit(linennue_forward)(line_encoding, params))

  v_ref, p_ref = reference_forward(line_encoding, params)
  assert value.shape == (B, 3) and policy.shape == (B, 1, H, W)
  # Kernel streams bf16 features and feeds the conv / spatial-mean matmuls in
  # bf16 (f32 accumulation); all remaining math is f32.
  assert bool(jnp.allclose(value, v_ref, rtol=1e-2, atol=1e-2)), "value mismatch"
  assert bool(jnp.allclose(policy, p_ref, rtol=1e-2, atol=1e-2)), "policy mismatch"

  print("KERNEL_OK")
</pallas_src>

<mosaic_0001>
module attributes {stable_mosaic.version = 11 : i64} {
  func.func @linennue_kernel(%arg0: i32, %arg1: memref<2x3072xbf16, #tpu.memory_space<vmem>>, %arg2: memref<2x3072xf32, #tpu.memory_space<vmem>>, %arg3: memref<4x256xf32, #tpu.memory_space<vmem>>, %arg4: memref<4x256x256xbf16, #tpu.memory_space<vmem>>, %arg5: memref<4x256x64xf32, #tpu.memory_space<vmem>>, %arg6: memref<2048x32xbf16, #tpu.memory_space<vmem>>, %arg7: memref<3x32xf32, #tpu.memory_space<vmem>>, %arg8: memref<32x32xf32, #tpu.memory_space<vmem>>, %arg9: memref<32x32xf32, #tpu.memory_space<vmem>>, %arg10: memref<32x64xf32, #tpu.memory_space<vmem>>, %arg11: memref<1x64xf32, #tpu.memory_space<vmem>>, %arg12: memref<1x64xf32, #tpu.memory_space<vmem>>, %arg13: memref<2x128xf32, #tpu.memory_space<vmem>>) attributes {dimension_semantics = [#tpu.dimension_semantics<parallel>], iteration_bounds = array<i64: 1>, scalar_prefetch = 0 : i64, scratch_operands = 0 : i64, tpu.core_type = #tpu.core_type<tc>, window_params = [{transform_indices = @transform_0, window_bounds = array<i64: 2, 3072>}, {pipeline_mode = #tpu.pipeline_mode<synchronous>, transform_indices = @transform_1, window_bounds = array<i64: 2, 3072>}, {pipeline_mode = #tpu.pipeline_mode<synchronous>, transform_indices = @transform_2, window_bounds = array<i64: 4, 256>}, {pipeline_mode = #tpu.pipeline_mode<synchronous>, transform_indices = @transform_3, window_bounds = array<i64: 4, 256, 256>}, {pipeline_mode = #tpu.pipeline_mode<synchronous>, transform_indices = @transform_4, window_bounds = array<i64: 4, 256, 64>}, {pipeline_mode = #tpu.pipeline_mode<synchronous>, transform_indices = @transform_5, window_bounds = array<i64: 2048, 32>}, {pipeline_mode = #tpu.pipeline_mode<synchronous>, transform_indices = @transform_6, window_bounds = array<i64: 3, 32>}, {pipeline_mode = #tpu.pipeline_mode<synchronous>, transform_indices = @transform_7, window_bounds = array<i64: 32, 32>}, {pipeline_mode = #tpu.pipeline_mode<synchronous>, transform_indices = @transform_8, window_bounds = array<i64: 32, 32>}, {pipeline_mode = #tpu.pipeline_mode<synchronous>, transform_indices = @transform_9, window_bounds = array<i64: 32, 64>}, {pipeline_mode = #tpu.pipeline_mode<synchronous>, transform_indices = @transform_10, window_bounds = array<i64: 1, 64>}, {pipeline_mode = #tpu.pipeline_mode<synchronous>, transform_indices = @transform_11, window_bounds = array<i64: 1, 64>}, {transform_indices = @transform_12, window_bounds = array<i64: 2, 128>}]} {
    %cst = arith.constant 0.000000e+00 : f32
    %0 = vector.broadcast %cst : f32 to vector<2x64xf32>
    %c0 = arith.constant 0 : index
    %c0_0 = arith.constant 0 : index
    %1 = vector.load %arg1[%c0, %c0_0] : memref<2x3072xbf16, #tpu.memory_space<vmem>>, vector<2x256xbf16>
    %2 = arith.extf %1 : vector<2x256xbf16> to vector<2x256xf32>
    %c0_1 = arith.constant 0 : index
    %c0_2 = arith.constant 0 : index
    %3 = vector.load %arg2[%c0_1, %c0_2] : memref<2x3072xf32, #tpu.memory_space<vmem>>, vector<1x256xf32>
    %cst_3 = arith.constant 0.000000e+00 : f32
    %4 = vector.broadcast %cst_3 : f32 to vector<2x256xf32>
    %5 = arith.subf %4, %2 : vector<2x256xf32>
    %cst_4 = arith.constant 0.000000e+00 : f32
    %6 = vector.broadcast %cst_4 : f32 to vector<2x256xf32>
    %7 = arith.maximumf %5, %6 : vector<2x256xf32>
    %cst_5 = arith.constant 0.000000e+00 : f32
    %8 = vector.broadcast %cst_5 : f32 to vector<2x256xf32>
    %9 = arith.subf %8, %7 : vector<2x256xf32>
    %10 = vector.broadcast %3 : vector<1x256xf32> to vector<2x256xf32>
    %11 = arith.mulf %9, %10 : vector<2x256xf32>
    %12 = arith.addf %2, %11 : vector<2x256xf32>
    %c1 = arith.constant 1 : index
    %c0_6 = arith.constant 0 : index
    %13 = vector.load %arg2[%c1, %c0_6] : memref<2x3072xf32, #tpu.memory_space<vmem>>, vector<1x256xf32>
    %14 = vector.broadcast %13 : vector<1x256xf32> to vector<2x256xf32>
    %15 = arith.addf %12, %14 : vector<2x256xf32>
    %16 = arith.truncf %15 : vector<2x256xf32> to vector<2x256xbf16>
    %c0_7 = arith.constant 0 : index
    %c0_8 = arith.constant 0 : index
    %c0_9 = arith.constant 0 : index
    %17 = vector.load %arg4[%c0_7, %c0_8, %c0_9] : memref<4x256x256xbf16, #tpu.memory_space<vmem>>, vector<1x256x256xbf16>
    %18 = vector.shape_cast %17 : vector<1x256x256xbf16> to vector<256x256xbf16>
    %cst_10 = arith.constant dense<0.000000e+00> : vector<2x256xf32>
    %19 = tpu.matmul %16, %18, %cst_10 {dimension_numbers = #tpu.dot_dimension_numbers<[1], [0], [0], [1], [0, 0, 1, 1], [], []>} : vector<2x256xbf16>, vector<256x256xbf16>, vector<2x256xf32> -> vector<2x256xf32>
    %c0_11 = arith.constant 0 : index
    %c0_12 = arith.constant 0 : index
    %20 = vector.load %arg3[%c0_11, %c0_12] : memref<4x256xf32, #tpu.memory_space<vmem>>, vector<1x256xf32>
    %21 = vector.broadcast %20 : vector<1x256xf32> to vector<2x256xf32>
    %22 = arith.addf %19, %21 : vector<2x256xf32>
    %cst_13 = arith.constant 0.000000e+00 : f32
    %23 = vector.broadcast %cst_13 : f32 to vector<2x256xf32>
    %24 = arith.maximumf %22, %23 : vector<2x256xf32>
    %c0_14 = arith.constant 0 : index
    %c0_15 = arith.constant 0 : index
    %c0_16 = arith.constant 0 : index
    %25 = vector.load %arg5[%c0_14, %c0_15, %c0_16] : memref<4x256x64xf32, #tpu.memory_space<vmem>>, vector<1x256x64xf32>
    %26 = vector.shape_cast %25 : vector<1x256x64xf32> to vector<256x64xf32>
    %cst_17 = arith.constant dense<0.000000e+00> : vector<2x64xf32>
    %27 = tpu.matmul %24, %26, %cst_17 {dimension_numbers = #tpu.dot_dimension_numbers<[1], [0], [0], [1], [0, 0, 1, 1], [], []>} : vector<2x256xf32>, vector<256x64xf32>, vector<2x64xf32> -> vector<2x64xf32>
    %28 = arith.addf %0, %27 : vector<2x64xf32>
    %c0_18 = arith.constant 0 : index
    %c256 = arith.constant 256 : index
    %29 = vector.load %arg1[%c0_18, %c256] : memref<2x3072xbf16, #tpu.memory_space<vmem>>, vector<2x256xbf16>
    %30 = arith.extf %29 : vector<2x256xbf16> to vector<2x256xf32>
    %c0_19 = arith.constant 0 : index
    %c256_20 = arith.constant 256 : index
    %31 = vector.load %arg2[%c0_19, %c256_20] : memref<2x3072xf32, #tpu.memory_space<vmem>>, vector<1x256xf32>
    %cst_21 = arith.constant 0.000000e+00 : f32
    %32 = vector.broadcast %cst_21 : f32 to vector<2x256xf32>
    %33 = arith.subf %32, %30 : vector<2x256xf32>
    %cst_22 = arith.constant 0.000000e+00 : f32
    %34 = vector.broadcast %cst_22 : f32 to vector<2x256xf32>
    %35 = arith.maximumf %33, %34 : vector<2x256xf32>
    %cst_23 = arith.constant 0.000000e+00 : f32
    %36 = vector.broadcast %cst_23 : f32 to vector<2x256xf32>
    %37 = arith.subf %36, %35 : vector<2x256xf32>
    %38 = vector.broadcast %31 : vector<1x256xf32> to vector<2x256xf32>
    %39 = arith.mulf %37, %38 : vector<2x256xf32>
    %40 = arith.addf %30, %39 : vector<2x256xf32>
    %c1_24 = arith.constant 1 : index
    %c256_25 = arith.constant 256 : index
    %41 = vector.load %arg2[%c1_24, %c256_25] : memref<2x3072xf32, #tpu.memory_space<vmem>>, vector<1x256xf32>
    %42 = vector.broadcast %41 : vector<1x256xf32> to vector<2x256xf32>
    %43 = arith.addf %40, %42 : vector<2x256xf32>
    %44 = arith.truncf %43 : vector<2x256xf32> to vector<2x256xbf16>
    %c1_26 = arith.constant 1 : index
    %c0_27 = arith.constant 0 : index
    %c0_28 = arith.constant 0 : index
    %45 = vector.load %arg4[%c1_26, %c0_27, %c0_28] : memref<4x256x256xbf16, #tpu.memory_space<vmem>>, vector<1x256x256xbf16>
    %46 = vector.shape_cast %45 : vector<1x256x256xbf16> to vector<256x256xbf16>
    %cst_29 = arith.constant dense<0.000000e+00> : vector<2x256xf32>
    %47 = tpu.matmul %44, %46, %cst_29 {dimension_numbers = #tpu.dot_dimension_numbers<[1], [0], [0], [1], [0, 0, 1, 1], [], []>} : vector<2x256xbf16>, vector<256x256xbf16>, vector<2x256xf32> -> vector<2x256xf32>
    %c1_30 = arith.constant 1 : index
    %c0_31 = arith.constant 0 : index
    %48 = vector.load %arg3[%c1_30, %c0_31] : memref<4x256xf32, #tpu.memory_space<vmem>>, vector<1x256xf32>
    %49 = vector.broadcast %48 : vector<1x256xf32> to vector<2x256xf32>
    %50 = arith.addf %47, %49 : vector<2x256xf32>
    %cst_32 = arith.constant 0.000000e+00 : f32
    %51 = vector.broadcast %cst_32 : f32 to vector<2x256xf32>
    %52 = arith.maximumf %50, %51 : vector<2x256xf32>
    %c1_33 = arith.constant 1 : index
    %c0_34 = arith.constant 0 : index
    %c0_35 = arith.constant 0 : index
    %53 = vector.load %arg5[%c1_33, %c0_34, %c0_35] : memref<4x256x64xf32, #tpu.memory_space<vmem>>, vector<1x256x64xf32>
    %54 = vector.shape_cast %53 : vector<1x256x64xf32> to vector<256x64xf32>
    %cst_36 = arith.constant dense<0.000000e+00> : vector<2x64xf32>
    %55 = tpu.matmul %52, %54, %cst_36 {dimension_numbers = #tpu.dot_dimension_numbers<[1], [0], [0], [1], [0, 0, 1, 1], [], []>} : vector<2x256xf32>, vector<256x64xf32>, vector<2x64xf32> -> vector<2x64xf32>
    %56 = arith.addf %28, %55 : vector<2x64xf32>
    %c0_37 = arith.constant 0 : index
    %c512 = arith.constant 512 : index
    %57 = vector.load %arg1[%c0_37, %c512] : memref<2x3072xbf16, #tpu.memory_space<vmem>>, vector<2x256xbf16>
    %58 = arith.extf %57 : vector<2x256xbf16> to vector<2x256xf32>
    %c0_38 = arith.constant 0 : index
    %c512_39 = arith.constant 512 : index
    %59 = vector.load %arg2[%c0_38, %c512_39] : memref<2x3072xf32, #tpu.memory_space<vmem>>, vector<1x256xf32>
    %cst_40 = arith.constant 0.000000e+00 : f32
    %60 = vector.broadcast %cst_40 : f32 to vector<2x256xf32>
    %61 = arith.subf %60, %58 : vector<2x256xf32>
    %cst_41 = arith.constant 0.000000e+00 : f32
    %62 = vector.broadcast %cst_41 : f32 to vector<2x256xf32>
    %63 = arith.maximumf %61, %62 : vector<2x256xf32>
    %cst_42 = arith.constant 0.000000e+00 : f32
    %64 = vector.broadcast %cst_42 : f32 to vector<2x256xf32>
    %65 = arith.subf %64, %63 : vector<2x256xf32>
    %66 = vector.broadcast %59 : vector<1x256xf32> to vector<2x256xf32>
    %67 = arith.mulf %65, %66 : vector<2x256xf32>
    %68 = arith.addf %58, %67 : vector<2x256xf32>
    %c1_43 = arith.constant 1 : index
    %c512_44 = arith.constant 512 : index
    %69 = vector.load %arg2[%c1_43, %c512_44] : memref<2x3072xf32, #tpu.memory_space<vmem>>, vector<1x256xf32>
    %70 = vector.broadcast %69 : vector<1x256xf32> to vector<2x256xf32>
    %71 = arith.addf %68, %70 : vector<2x256xf32>
    %72 = arith.truncf %71 : vector<2x256xf32> to vector<2x256xbf16>
    %c2 = arith.constant 2 : index
    %c0_45 = arith.constant 0 : index
    %c0_46 = arith.constant 0 : index
    %73 = vector.load %arg4[%c2, %c0_45, %c0_46] : memref<4x256x256xbf16, #tpu.memory_space<vmem>>, vector<1x256x256xbf16>
    %74 = vector.shape_cast %73 : vector<1x256x256xbf16> to vector<256x256xbf16>
    %cst_47 = arith.constant dense<0.000000e+00> : vector<2x256xf32>
    %75 = tpu.matmul %72, %74, %cst_47 {dimension_numbers = #tpu.dot_dimension_numbers<[1], [0], [0], [1], [0, 0, 1, 1], [], []>} : vector<2x256xbf16>, vector<256x256xbf16>, vector<2x256xf32> -> vector<2x256xf32>
    %c2_48 = arith.constant 2 : index
    %c0_49 = arith.constant 0 : index
    %76 = vector.load %arg3[%c2_48, %c0_49] : memref<4x256xf32, #tpu.memory_space<vmem>>, vector<1x256xf32>
    %77 = vector.broadcast %76 : vector<1x256xf32> to vector<2x256xf32>
    %78 = arith.addf %75, %77 : vector<2x256xf32>
    %cst_50 = arith.constant 0.000000e+00 : f32
    %79 = vector.broadcast %cst_50 : f32 to vector<2x256xf32>
    %80 = arith.maximumf %78, %79 : vector<2x256xf32>
    %c2_51 = arith.constant 2 : index
    %c0_52 = arith.constant 0 : index
    %c0_53 = arith.constant 0 : index
    %81 = vector.load %arg5[%c2_51, %c0_52, %c0_53] : memref<4x256x64xf32, #tpu.memory_space<vmem>>, vector<1x256x64xf32>
    %82 = vector.shape_cast %81 : vector<1x256x64xf32> to vector<256x64xf32>
    %cst_54 = arith.constant dense<0.000000e+00> : vector<2x64xf32>
    %83 = tpu.matmul %80, %82, %cst_54 {dimension_numbers = #tpu.dot_dimension_numbers<[1], [0], [0], [1], [0, 0, 1, 1], [], []>} : vector<2x256xf32>, vector<256x64xf32>, vector<2x64xf32> -> vector<2x64xf32>
    %84 = arith.addf %56, %83 : vector<2x64xf32>
    %c0_55 = arith.constant 0 : index
    %c768 = arith.constant 768 : index
    %85 = vector.load %arg1[%c0_55, %c768] : memref<2x3072xbf16, #tpu.memory_space<vmem>>, vector<2x256xbf16>
    %86 = arith.extf %85 : vector<2x256xbf16> to vector<2x256xf32>
    %c0_56 = arith.constant 0 : index
    %c768_57 = arith.constant 768 : index
    %87 = vector.load %arg2[%c0_56, %c768_57] : memref<2x3072xf32, #tpu.memory_space<vmem>>, vector<1x256xf32>
    %cst_58 = arith.constant 0.000000e+00 : f32
    %88 = vector.broadcast %cst_58 : f32 to vector<2x256xf32>
    %89 = arith.subf %88, %86 : vector<2x256xf32>
    %cst_59 = arith.constant 0.000000e+00 : f32
    %90 = vector.broadcast %cst_59 : f32 to vector<2x256xf32>
    %91 = arith.maximumf %89, %90 : vector<2x256xf32>
    %cst_60 = arith.constant 0.000000e+00 : f32
    %92 = vector.broadcast %cst_60 : f32 to vector<2x256xf32>
    %93 = arith.subf %92, %91 : vector<2x256xf32>
    %94 = vector.broadcast %87 : vector<1x256xf32> to vector<2x256xf32>
    %95 = arith.mulf %93, %94 : vector<2x256xf32>
    %96 = arith.addf %86, %95 : vector<2x256xf32>
    %c1_61 = arith.constant 1 : index
    %c768_62 = arith.constant 768 : index
    %97 = vector.load %arg2[%c1_61, %c768_62] : memref<2x3072xf32, #tpu.memory_space<vmem>>, vector<1x256xf32>
    %98 = vector.broadcast %97 : vector<1x256xf32> to vector<2x256xf32>
    %99 = arith.addf %96, %98 : vector<2x256xf32>
    %100 = arith.truncf %99 : vector<2x256xf32> to vector<2x256xbf16>
    %c3 = arith.constant 3 : index
    %c0_63 = arith.constant 0 : index
    %c0_64 = arith.constant 0 : index
    %101 = vector.load %arg4[%c3, %c0_63, %c0_64] : memref<4x256x256xbf16, #tpu.memory_space<vmem>>, vector<1x256x256xbf16>
    %102 = vector.shape_cast %101 : vector<1x256x256xbf16> to vector<256x256xbf16>
    %cst_65 = arith.constant dense<0.000000e+00> : vector<2x256xf32>
    %103 = tpu.matmul %100, %102, %cst_65 {dimension_numbers = #tpu.dot_dimension_numbers<[1], [0], [0], [1], [0, 0, 1, 1], [], []>} : vector<2x256xbf16>, vector<256x256xbf16>, vector<2x256xf32> -> vector<2x256xf32>
    %c3_66 = arith.constant 3 : index
    %c0_67 = arith.constant 0 : index
    %104 = vector.load %arg3[%c3_66, %c0_67] : memref<4x256xf32, #tpu.memory_space<vmem>>, vector<1x256xf32>
    %105 = vector.broadcast %104 : vector<1x256xf32> to vector<2x256xf32>
    %106 = arith.addf %103, %105 : vector<2x256xf32>
    %cst_68 = arith.constant 0.000000e+00 : f32
    %107 = vector.broadcast %cst_68 : f32 to vector<2x256xf32>
    %108 = arith.maximumf %106, %107 : vector<2x256xf32>
    %c3_69 = arith.constant 3 : index
    %c0_70 = arith.constant 0 : index
    %c0_71 = arith.constant 0 : index
    %109 = vector.load %arg5[%c3_69, %c0_70, %c0_71] : memref<4x256x64xf32, #tpu.memory_space<vmem>>, vector<1x256x64xf32>
    %110 = vector.shape_cast %109 : vector<1x256x64xf32> to vector<256x64xf32>
    %cst_72 = arith.constant dense<0.000000e+00> : vector<2x64xf32>
    %111 = tpu.matmul %108, %110, %cst_72 {dimension_numbers = #tpu.dot_dimension_numbers<[1], [0], [0], [1], [0, 0, 1, 1], [], []>} : vector<2x256xf32>, vector<256x64xf32>, vector<2x64xf32> -> vector<2x64xf32>
    %112 = arith.addf %84, %111 : vector<2x64xf32>
    %c0_73 = arith.constant 0 : index
    %c0_74 = arith.constant 0 : index
    %113 = vector.load %arg11[%c0_73, %c0_74] : memref<1x64xf32, #tpu.memory_space<vmem>>, vector<1x64xf32>
    %cst_75 = arith.constant 0.000000e+00 : f32
    %114 = vector.broadcast %cst_75 : f32 to vector<2x64xf32>
    %115 = arith.subf %114, %112 : vector<2x64xf32>
    %cst_76 = arith.constant 0.000000e+00 : f32
    %116 = vector.broadcast %cst_76 : f32 to vector<2x64xf32>
    %117 = arith.maximumf %115, %116 : vector<2x64xf32>
    %cst_77 = arith.constant 0.000000e+00 : f32
    %118 = vector.broadcast %cst_77 : f32 to vector<2x64xf32>
    %119 = arith.subf %118, %117 : vector<2x64xf32>
    %120 = vector.broadcast %113 : vector<1x64xf32> to vector<2x64xf32>
    %121 = arith.mulf %119, %120 : vector<2x64xf32>
    %122 = arith.addf %112, %121 : vector<2x64xf32>
    %c0_78 = arith.constant 0 : index
    %c1024 = arith.constant 1024 : index
    %123 = vector.load %arg1[%c0_78, %c1024] : memref<2x3072xbf16, #tpu.memory_space<vmem>>, vector<2x2048xbf16>
    %124 = arith.extf %123 : vector<2x2048xbf16> to vector<2x2048xf32>
    %c0_79 = arith.constant 0 : index
    %c1024_80 = arith.constant 1024 : index
    %125 = vector.load %arg2[%c0_79, %c1024_80] : memref<2x3072xf32, #tpu.memory_space<vmem>>, vector<1x2048xf32>
    %cst_81 = arith.constant 0.000000e+00 : f32
    %126 = vector.broadcast %cst_81 : f32 to vector<2x2048xf32>
    %127 = arith.subf %126, %124 : vector<2x2048xf32>
    %cst_82 = arith.constant 0.000000e+00 : f32
    %128 = vector.broadcast %cst_82 : f32 to vector<2x2048xf32>
    %129 = arith.maximumf %127, %128 : vector<2x2048xf32>
    %cst_83 = arith.constant 0.000000e+00 : f32
    %130 = vector.broadcast %cst_83 : f32 to vector<2x2048xf32>
    %131 = arith.subf %130, %129 : vector<2x2048xf32>
    %132 = vector.broadcast %125 : vector<1x2048xf32> to vector<2x2048xf32>
    %133 = arith.mulf %131, %132 : vector<2x2048xf32>
    %134 = arith.addf %124, %133 : vector<2x2048xf32>
    %c1_84 = arith.constant 1 : index
    %c1024_85 = arith.constant 1024 : index
    %135 = vector.load %arg2[%c1_84, %c1024_85] : memref<2x3072xf32, #tpu.memory_space<vmem>>, vector<1x2048xf32>
    %136 = vector.broadcast %135 : vector<1x2048xf32> to vector<2x2048xf32>
    %137 = arith.addf %134, %136 : vector<2x2048xf32>
    %138 = arith.truncf %137 : vector<2x2048xf32> to vector<2x2048xbf16>
    %c0_86 = arith.constant 0 : index
    %c0_87 = arith.constant 0 : index
    %139 = vector.load %arg6[%c0_86, %c0_87] : memref<2048x32xbf16, #tpu.memory_space<vmem>>, vector<2048x32xbf16>
    %cst_88 = arith.constant dense<0.000000e+00> : vector<2x32xf32>
    %140 = tpu.matmul %138, %139, %cst_88 {dimension_numbers = #tpu.dot_dimension_numbers<[1], [0], [0], [1], [0, 0, 1, 1], [], []>} : vector<2x2048xbf16>, vector<2048x32xbf16>, vector<2x32xf32> -> vector<2x32xf32>
    %c0_89 = arith.constant 0 : index
    %c0_90 = arith.constant 0 : index
    %141 = vector.load %arg7[%c0_89, %c0_90] : memref<3x32xf32, #tpu.memory_space<vmem>>, vector<1x32xf32>
    %cst_91 = arith.constant 0.000000e+00 : f32
    %142 = vector.broadcast %cst_91 : f32 to vector<2x32xf32>
    %143 = arith.subf %142, %140 : vector<2x32xf32>
    %cst_92 = arith.constant 0.000000e+00 : f32
    %144 = vector.broadcast %cst_92 : f32 to vector<2x32xf32>
    %145 = arith.maximumf %143, %144 : vector<2x32xf32>
    %cst_93 = arith.constant 0.000000e+00 : f32
    %146 = vector.broadcast %cst_93 : f32 to vector<2x32xf32>
    %147 = arith.subf %146, %145 : vector<2x32xf32>
    %148 = vector.broadcast %141 : vector<1x32xf32> to vector<2x32xf32>
    %149 = arith.mulf %147, %148 : vector<2x32xf32>
    %150 = arith.addf %140, %149 : vector<2x32xf32>
    %c0_94 = arith.constant 0 : index
    %c0_95 = arith.constant 0 : index
    %151 = vector.load %arg8[%c0_94, %c0_95] : memref<32x32xf32, #tpu.memory_space<vmem>>, vector<32x32xf32>
    %cst_96 = arith.constant dense<0.000000e+00> : vector<2x32xf32>
    %152 = tpu.matmul %150, %151, %cst_96 {dimension_numbers = #tpu.dot_dimension_numbers<[1], [0], [0], [1], [0, 0, 1, 1], [], []>} : vector<2x32xf32>, vector<32x32xf32>, vector<2x32xf32> -> vector<2x32xf32>
    %c1_97 = arith.constant 1 : index
    %c0_98 = arith.constant 0 : index
    %153 = vector.load %arg7[%c1_97, %c0_98] : memref<3x32xf32, #tpu.memory_space<vmem>>, vector<1x32xf32>
    %154 = vector.broadcast %153 : vector<1x32xf32> to vector<2x32xf32>
    %155 = arith.addf %152, %154 : vector<2x32xf32>
    %cst_99 = arith.constant 0.000000e+00 : f32
    %156 = vector.broadcast %cst_99 : f32 to vector<2x32xf32>
    %157 = arith.maximumf %155, %156 : vector<2x32xf32>
    %c0_100 = arith.constant 0 : index
    %c0_101 = arith.constant 0 : index
    %158 = vector.load %arg9[%c0_100, %c0_101] : memref<32x32xf32, #tpu.memory_space<vmem>>, vector<32x32xf32>
    %cst_102 = arith.constant dense<0.000000e+00> : vector<2x32xf32>
    %159 = tpu.matmul %157, %158, %cst_102 {dimension_numbers = #tpu.dot_dimension_numbers<[1], [0], [0], [1], [0, 0, 1, 1], [], []>} : vector<2x32xf32>, vector<32x32xf32>, vector<2x32xf32> -> vector<2x32xf32>
    %c2_103 = arith.constant 2 : index
    %c0_104 = arith.constant 0 : index
    %160 = vector.load %arg7[%c2_103, %c0_104] : memref<3x32xf32, #tpu.memory_space<vmem>>, vector<1x32xf32>
    %161 = vector.broadcast %160 : vector<1x32xf32> to vector<2x32xf32>
    %162 = arith.addf %159, %161 : vector<2x32xf32>
    %cst_105 = arith.constant 0.000000e+00 : f32
    %163 = vector.broadcast %cst_105 : f32 to vector<2x32xf32>
    %164 = arith.maximumf %162, %163 : vector<2x32xf32>
    %c0_106 = arith.constant 0 : index
    %c0_107 = arith.constant 0 : index
    %165 = vector.load %arg10[%c0_106, %c0_107] : memref<32x64xf32, #tpu.memory_space<vmem>>, vector<32x64xf32>
    %cst_108 = arith.constant dense<0.000000e+00> : vector<2x64xf32>
    %166 = tpu.matmul %164, %165, %cst_108 {dimension_numbers = #tpu.dot_dimension_numbers<[1], [0], [0], [1], [0, 0, 1, 1], [], []>} : vector<2x32xf32>, vector<32x64xf32>, vector<2x64xf32> -> vector<2x64xf32>
    %c0_109 = arith.constant 0 : index
    %c0_110 = arith.constant 0 : index
    %167 = vector.load %arg12[%c0_109, %c0_110] : memref<1x64xf32, #tpu.memory_space<vmem>>, vector<1x64xf32>
    %168 = vector.broadcast %167 : vector<1x64xf32> to vector<2x64xf32>
    %169 = arith.addf %166, %168 : vector<2x64xf32>
    %170 = tpu.concatenate %122, %169 in 1 : vector<2x64xf32>, vector<2x64xf32> -> vector<2x128xf32>
    %c0_111 = arith.constant 0 : index
    %c0_112 = arith.constant 0 : index
    %171 = vector.load %arg13[%c0_111, %c0_112] : memref<2x128xf32, #tpu.memory_space<vmem>>, vector<2x128xf32>
    tpu.vector_store %arg13[%c0_111, %c0_112], %170 {strides = array<i32>} : memref<2x128xf32, #tpu.memory_space<vmem>>, vector<2x128xf32>,
    return
  }
  func.func @transform_0(%arg0: i32) -> (i32, i32) {
    %c0_i32 = arith.constant 0 : i32
    %c0_i32_0 = arith.constant 0 : i32
    return %arg0, %c0_i32 : i32, i32
  }
  func.func @transform_1(%arg0: i32) -> (i32, i32) {
    %c0_i32 = arith.constant 0 : i32
    %c0_i32_0 = arith.constant 0 : i32
    %c0_i32_1 = arith.constant 0 : i32
    return %c0_i32, %c0_i32_0 : i32, i32
  }
  func.func @transform_2(%arg0: i32) -> (i32, i32) {
    %c0_i32 = arith.constant 0 : i32
    %c0_i32_0 = arith.constant 0 : i32
    %c0_i32_1 = arith.constant 0 : i32
    return %c0_i32, %c0_i32_0 : i32, i32
  }
  func.func @transform_3(%arg0: i32) -> (i32, i32, i32) {
    %c0_i32 = arith.constant 0 : i32
    %c0_i32_0 = arith.constant 0 : i32
    %c0_i32_1 = arith.constant 0 : i32
    %c0_i32_2 = arith.constant 0 : i32
    return %c0_i32, %c0_i32_0, %c0_i32_1 : i32, i32, i32
  }
  func.func @transform_4(%arg0: i32) -> (i32, i32, i32) {
    %c0_i32 = arith.constant 0 : i32
    %c0_i32_0 = arith.constant 0 : i32
    %c0_i32_1 = arith.constant 0 : i32
    %c0_i32_2 = arith.constant 0 : i32
    return %c0_i32, %c0_i32_0, %c0_i32_1 : i32, i32, i32
  }
  func.func @transform_5(%arg0: i32) -> (i32, i32) {
    %c0_i32 = arith.constant 0 : i32
    %c0_i32_0 = arith.constant 0 : i32
    %c0_i32_1 = arith.constant 0 : i32
    return %c0_i32, %c0_i32_0 : i32, i32
  }
  func.func @transform_6(%arg0: i32) -> (i32, i32) {
    %c0_i32 = arith.constant 0 : i32
    %c0_i32_0 = arith.constant 0 : i32
    %c0_i32_1 = arith.constant 0 : i32
    return %c0_i32, %c0_i32_0 : i32, i32
  }
  func.func @transform_7(%arg0: i32) -> (i32, i32) {
    %c0_i32 = arith.constant 0 : i32
    %c0_i32_0 = arith.constant 0 : i32
    %c0_i32_1 = arith.constant 0 : i32
    return %c0_i32, %c0_i32_0 : i32, i32
  }
  func.func @transform_8(%arg0: i32) -> (i32, i32) {
    %c0_i32 = arith.constant 0 : i32
    %c0_i32_0 = arith.constant 0 : i32
    %c0_i32_1 = arith.constant 0 : i32
    return %c0_i32, %c0_i32_0 : i32, i32
  }
  func.func @transform_9(%arg0: i32) -> (i32, i32) {
    %c0_i32 = arith.constant 0 : i32
    %c0_i32_0 = arith.constant 0 : i32
    %c0_i32_1 = arith.constant 0 : i32
    return %c0_i32, %c0_i32_0 : i32, i32
  }
  func.func @transform_10(%arg0: i32) -> (i32, i32) {
    %c0_i32 = arith.constant 0 : i32
    %c0_i32_0 = arith.constant 0 : i32
    %c0_i32_1 = arith.constant 0 : i32
    return %c0_i32, %c0_i32_0 : i32, i32
  }
  func.func @transform_11(%arg0: i32) -> (i32, i32) {
    %c0_i32 = arith.constant 0 : i32
    %c0_i32_0 = arith.constant 0 : i32
    %c0_i32_1 = arith.constant 0 : i32
    return %c0_i32, %c0_i32_0 : i32, i32
  }
  func.func @transform_12(%arg0: i32) -> (i32, i32) {
    %c0_i32 = arith.constant 0 : i32
    %c0_i32_0 = arith.constant 0 : i32
    return %arg0, %c0_i32 : i32, i32
  }
}

</mosaic_0001>

<llo_original>
// kernel: mul.83
$region0: #{mul.83}
  #allocation0 [shape = 's32[1]{0}', space=sflag, size = 0x4, scoped, tag = 'scoped memory for mul.83']
  %s0 = inlined_call_operand.<no memory space> [shape: f32[], index: 0, kind: input, shape index: {}]
  %s1 = inlined_call_operand.vmem [shape: f32[1,64], index: 1, kind: output, shape index: {}]
  %v2 = vstv %s0
  %3 = vst [vmem:[%s1] sm:$0x1] %v2

// kernel: linennue_forward.1
$region0: #{linennue_forward.1}
  #allocation0 [shape = 'u32[]', space=smem, size = 0x4, offset = 0x4, fixed_abs, tag = 'smem constant byte address 0x4 - core index']
  #allocation1 [shape = 'u32[144,128]{1,0:T(1,128)}', space=vmem, size = 0x12000, scoped, tag = 'internal scratch']
  %s0 = inlined_call_operand.vmem [shape: bf16[2,3072], index: 0, kind: input, shape index: {}]
  %s1 = inlined_call_operand.vmem [shape: f32[2,3072], index: 1, kind: input, shape index: {}]
  %s2 = inlined_call_operand.vmem [shape: f32[4,256], index: 2, kind: input, shape index: {}]
  %s3 = inlined_call_operand.vmem [shape: bf16[4,256,256], index: 3, kind: input, shape index: {}]
  %s4 = inlined_call_operand.vmem [shape: f32[4,256,64], index: 4, kind: input, shape index: {}]
  %s5 = inlined_call_operand.vmem [shape: bf16[2048,32], index: 5, kind: input, shape index: {}]
  %s6 = inlined_call_operand.vmem [shape: f32[3,32], index: 6, kind: input, shape index: {}]
  %s7 = inlined_call_operand.vmem [shape: f32[32,32], index: 7, kind: input, shape index: {}]
  %s8 = inlined_call_operand.vmem [shape: f32[32,32], index: 8, kind: input, shape index: {}]
  %s9 = inlined_call_operand.vmem [shape: f32[32,64], index: 9, kind: input, shape index: {}]
  %s10 = inlined_call_operand.vmem [shape: f32[1,64], index: 10, kind: input, shape index: {}]
  %s11 = inlined_call_operand.vmem [shape: f32[1,64], index: 11, kind: input, shape index: {}]
  %s12 = inlined_call_operand.vmem [shape: f32[2,128], index: 12, kind: output, shape index: {}]
  %s13 = sld [smem:[#allocation0]]
  $region58: #{linennue_forward.1} parent=0
    _
  %s15 = ssub.s32 1, %s13
  %s16 = scalar_select 0, %s15, %s13
  // Predicated region
  $region2: #{linennue_forward.1} parent=0 // pred_check
    _
  $region3: #{linennue_forward.1} parent=0 // pred_check_branch
    %18 = sbr.rel (0) target = $region5
  $region4: #{linennue_forward.1} parent=0 // pred_region
    _
  $region5: #{linennue_forward.1} parent=0 // pred_fallthru
    _
  // Predicated region
  $region6: #{linennue_forward.1} parent=0 // pred_check
    _
  $region7: #{linennue_forward.1} parent=0 // pred_check_branch
    %20 = sbr.rel (0) target = $region9
  $region8: #{linennue_forward.1} parent=0 // pred_region
    _
  $region9: #{linennue_forward.1} parent=0 // pred_fallthru
    _
  // Predicated region
  $region10: #{linennue_forward.1} parent=0 // pred_check
    _
  $region11: #{linennue_forward.1} parent=0 // pred_check_branch
    %22 = sbr.rel (0) target = $region13
  $region12: #{linennue_forward.1} parent=0 // pred_region
    _
  $region13: #{linennue_forward.1} parent=0 // pred_fallthru
    _
  // Predicated region
  $region14: #{linennue_forward.1} parent=0 // pred_check
    _
  $region15: #{linennue_forward.1} parent=0 // pred_check_branch
    %24 = sbr.rel (0) target = $region17
  $region16: #{linennue_forward.1} parent=0 // pred_region
    _
  $region17: #{linennue_forward.1} parent=0 // pred_fallthru
    _
  // Predicated region
  $region18: #{linennue_forward.1} parent=0 // pred_check
    _
  $region19: #{linennue_forward.1} parent=0 // pred_check_branch
    %26 = sbr.rel (0) target = $region21
  $region20: #{linennue_forward.1} parent=0 // pred_region
    _
  $region21: #{linennue_forward.1} parent=0 // pred_fallthru
    _
  // Predicated region
  $region22: #{linennue_forward.1} parent=0 // pred_check
    _
  $region23: #{linennue_forward.1} parent=0 // pred_check_branch
    %28 = sbr.rel (0) target = $region25
  $region24: #{linennue_forward.1} parent=0 // pred_region
    _
  $region25: #{linennue_forward.1} parent=0 // pred_fallthru
    _
  // Predicated region
  $region26: #{linennue_forward.1} parent=0 // pred_check
    _
  $region27: #{linennue_forward.1} parent=0 // pred_check_branch
    %30 = sbr.rel (0) target = $region29
  $region28: #{linennue_forward.1} parent=0 // pred_region
    _
  $region29: #{linennue_forward.1} parent=0 // pred_fallthru
    _
  // Predicated region
  $region30: #{linennue_forward.1} parent=0 // pred_check
    _
  $region31: #{linennue_forward.1} parent=0 // pred_check_branch
    %32 = sbr.rel (0) target = $region33
  $region32: #{linennue_forward.1} parent=0 // pred_region
    _
  $region33: #{linennue_forward.1} parent=0 // pred_fallthru
    _
  // Predicated region
  $region34: #{linennue_forward.1} parent=0 // pred_check
    _
  $region35: #{linennue_forward.1} parent=0 // pred_check_branch
    %34 = sbr.rel (0) target = $region37
  $region36: #{linennue_forward.1} parent=0 // pred_region
    _
  $region37: #{linennue_forward.1} parent=0 // pred_fallthru
    _
  // Predicated region
  $region38: #{linennue_forward.1} parent=0 // pred_check
    _
  $region39: #{linennue_forward.1} parent=0 // pred_check_branch
    %36 = sbr.rel (0) target = $region41
  $region40: #{linennue_forward.1} parent=0 // pred_region
    _
  $region41: #{linennue_forward.1} parent=0 // pred_fallthru
    _
  // Predicated region
  $region42: #{linennue_forward.1} parent=0 // pred_check
    _
  $region43: #{linennue_forward.1} parent=0 // pred_check_branch
    %38 = sbr.rel (0) target = $region45
  $region44: #{linennue_forward.1} parent=0 // pred_region
    _
  $region45: #{linennue_forward.1} parent=0 // pred_fallthru
    _
  // Predicated region
  $region46: #{linennue_forward.1} parent=0 // pred_check
    _
  $region47: #{linennue_forward.1} parent=0 // pred_check_branch
    %40 = sbr.rel (0) target = $region49
  $region48: #{linennue_forward.1} parent=0 // pred_region
    _
  $region49: #{linennue_forward.1} parent=0 // pred_fallthru
    _
  %v42 = vld [vmem:[%s0] sm:$0x3]
  %v43 = vunpack.c.l.bf16 %v42
  %v44 = vld [vmem:[%s1] ss:$2 sm:$0x3]
  %v45 = vsub.f32 0.0, %v43
  %v46 = vmax.f32 %v45, 0.0
  %v47 = vsub.f32 0.0, %v46
  %v49 = vlaneseq
  %v50 = vshrl.u32 %v49, 7
  %v51 = vsub.s32 0, %v50
  %v52 = vrot.slane %v44, %v51
  %v53 = vlaneseq
  %v54 = vshrl.u32 %v53, 7
  %v55 = vsub.s32 1, %v54
  %v56 = vrot.slane %v44, %v55
  %v57 = vcombine.low %v52, %v56
  %v59 = vunpack.c.l.s4 1983009808
  %v60 = vunpack.c.0.s8 %v59
  %v61 = vlaneseq
  %v62 = vshrl.u32 %v61, 7
  %v63 = vsub.s32 %v60, %v62
  %v64 = vrot.slane %v57, %v63
  %v66 = vmul.f32 %v47, %v64
  %v67 = vadd.f32 %v43, %v66
  %s68 = scalar_lea.vmem %s1, 1
  %v69 = vld [vmem:[%s68] ss:$2 sm:$0x3]
  %v71 = vlaneseq
  %v72 = vshrl.u32 %v71, 7
  %v73 = vsub.s32 0, %v72
  %v74 = vrot.slane %v69, %v73
  %v75 = vlaneseq
  %v76 = vshrl.u32 %v75, 7
  %v77 = vsub.s32 1, %v76
  %v78 = vrot.slane %v69, %v77
  %v79 = vcombine.low %v74, %v78
  %v81 = vunpack.c.l.s4 1983009808
  %v82 = vunpack.c.0.s8 %v81
  %v83 = vlaneseq
  %v84 = vshrl.u32 %v83, 7
  %v85 = vsub.s32 %v82, %v84
  %v86 = vrot.slane %v79, %v85
  %v88 = vadd.f32 %v67, %v86
  %v91 = vunpack.c.l.s4 1983009808
  %v92 = vunpack.c.0.s8 %v91
  %v93 = vlaneseq
  %v94 = vshrl.u32 %v93, 7
  %v95 = vsub.s32 %v92, %v94
  %v96 = vrot.slane %v88, %v95
  %v97 = vcombine.high %v96, %v96
  %v100 = vpack.c.bf16 %v96, %v96
  %v101 = vpack.c.bf16 %v97, %v97
  %v102 = vld [vmem:[%s3] sm:$0xff]
  %v103 = vld [vmem:[%s3 + $0x8] sm:$0xff]
  %v104 = vld [vmem:[%s3 + $0x10] sm:$0xff]
  %v105 = vld [vmem:[%s3 + $0x18] sm:$0xff]
  %v106 = vld [vmem:[%s3 + $0x20] sm:$0xff]
  %v107 = vld [vmem:[%s3 + $0x28] sm:$0xff]
  %v108 = vld [vmem:[%s3 + $0x30] sm:$0xff]
  %v109 = vld [vmem:[%s3 + $0x38] sm:$0xff]
  %v110 = vld [vmem:[%s3 + $0x40] sm:$0xff]
  %v111 = vld [vmem:[%s3 + $0x48] sm:$0xff]
  %v112 = vld [vmem:[%s3 + $0x50] sm:$0xff]
  %v113 = vld [vmem:[%s3 + $0x58] sm:$0xff]
  %v114 = vld [vmem:[%s3 + $0x60] sm:$0xff]
  %v115 = vld [vmem:[%s3 + $0x68] sm:$0xff]
  %v116 = vld [vmem:[%s3 + $0x70] sm:$0xff]
  %v117 = vld [vmem:[%s3 + $0x78] sm:$0xff]
  %v118 = vld [vmem:[%s3 + $0x80] sm:$0xff]
  %v119 = vld [vmem:[%s3 + $0x88] sm:$0xff]
  %v120 = vld [vmem:[%s3 + $0x90] sm:$0xff]
  %v121 = vld [vmem:[%s3 + $0x98] sm:$0xff]
  %v122 = vld [vmem:[%s3 + $0xa0] sm:$0xff]
  %v123 = vld [vmem:[%s3 + $0xa8] sm:$0xff]
  %v124 = vld [vmem:[%s3 + $0xb0] sm:$0xff]
  %v125 = vld [vmem:[%s3 + $0xb8] sm:$0xff]
  %v126 = vld [vmem:[%s3 + $0xc0] sm:$0xff]
  %v127 = vld [vmem:[%s3 + $0xc8] sm:$0xff]
  %v128 = vld [vmem:[%s3 + $0xd0] sm:$0xff]
  %v129 = vld [vmem:[%s3 + $0xd8] sm:$0xff]
  %v130 = vld [vmem:[%s3 + $0xe0] sm:$0xff]
  %v131 = vld [vmem:[%s3 + $0xe8] sm:$0xff]
  %v132 = vld [vmem:[%s3 + $0xf0] sm:$0xff]
  %v133 = vld [vmem:[%s3 + $0xf8] sm:$0xff]
  %v134 = vld [vmem:[%s2] ss:$4 sm:$0x3]
  %v136 = vlaneseq
  %v137 = vshrl.u32 %v136, 7
  %v138 = vsub.s32 0, %v137
  %v139 = vrot.slane %v134, %v138
  %v140 = vlaneseq
  %v141 = vshrl.u32 %v140, 7
  %v142 = vsub.s32 1, %v141
  %v143 = vrot.slane %v134, %v142
  %v178 = vunpack.c.l.b16 %v102
  %v179 = vunpack.c.h.b16 %v102
  %v180 = vunpack.c.l.b16 %v103
  %v181 = vunpack.c.h.b16 %v103
  %v182 = vunpack.c.l.b16 %v104
  %v183 = vunpack.c.h.b16 %v104
  %v184 = vunpack.c.l.b16 %v105
  %v185 = vunpack.c.h.b16 %v105
  %v186 = vunpack.c.l.b16 %v106
  %v187 = vunpack.c.h.b16 %v106
  %v188 = vunpack.c.l.b16 %v107
  %v189 = vunpack.c.h.b16 %v107
  %v190 = vunpack.c.l.b16 %v108
  %v191 = vunpack.c.h.b16 %v108
  %v192 = vunpack.c.l.b16 %v109
  %v193 = vunpack.c.h.b16 %v109
  %v194 = vunpack.c.l.b16 %v110
  %v195 = vunpack.c.h.b16 %v110
  %v196 = vunpack.c.l.b16 %v111
  %v197 = vunpack.c.h.b16 %v111
  %v198 = vunpack.c.l.b16 %v112
  %v199 = vunpack.c.h.b16 %v112
  %v200 = vunpack.c.l.b16 %v113
  %v201 = vunpack.c.h.b16 %v113
  %v202 = vunpack.c.l.b16 %v114
  %v203 = vunpack.c.h.b16 %v114
  %v204 = vunpack.c.l.b16 %v115
  %v205 = vunpack.c.h.b16 %v115
  %v206 = vunpack.c.l.b16 %v116
  %v207 = vunpack.c.h.b16 %v116
  %v208 = vunpack.c.l.b16 %v117
  %v209 = vunpack.c.h.b16 %v117
  %v210 = vunpack.c.l.b16 %v118
  %v211 = vunpack.c.h.b16 %v118
  %v212 = vunpack.c.l.b16 %v119
  %v213 = vunpack.c.h.b16 %v119
  %v214 = vunpack.c.l.b16 %v120
  %v215 = vunpack.c.h.b16 %v120
  %v216 = vunpack.c.l.b16 %v121
  %v217 = vunpack.c.h.b16 %v121
  %v218 = vunpack.c.l.b16 %v122
  %v219 = vunpack.c.h.b16 %v122
  %v220 = vunpack.c.l.b16 %v123
  %v221 = vunpack.c.h.b16 %v123
  %v222 = vunpack.c.l.b16 %v124
  %v223 = vunpack.c.h.b16 %v124
  %v224 = vunpack.c.l.b16 %v125
  %v225 = vunpack.c.h.b16 %v125
  %v226 = vunpack.c.l.b16 %v126
  %v227 = vunpack.c.h.b16 %v126
  %v228 = vunpack.c.l.b16 %v127
  %v229 = vunpack.c.h.b16 %v127
  %v230 = vunpack.c.l.b16 %v128
  %v231 = vunpack.c.h.b16 %v128
  %v232 = vunpack.c.l.b16 %v129
  %v233 = vunpack.c.h.b16 %v129
  %v234 = vunpack.c.l.b16 %v130
  %v235 = vunpack.c.h.b16 %v130
  %v236 = vunpack.c.l.b16 %v131
  %v237 = vunpack.c.h.b16 %v131
  %v238 = vunpack.c.l.b16 %v132
  %v239 = vunpack.c.h.b16 %v132
  %v240 = vunpack.c.l.b16 %v133
  %v241 = vunpack.c.h.b16 %v133
  %v242 = vpack.c.b16 %v180, %v178
  %v243 = vpack.c.b16 %v181, %v179
  %v244 = vpack.c.b16 %v184, %v182
  %v245 = vpack.c.b16 %v185, %v183
  %v246 = vpack.c.b16 %v188, %v186
  %v247 = vpack.c.b16 %v189, %v187
  %v248 = vpack.c.b16 %v192, %v190
  %v249 = vpack.c.b16 %v193, %v191
  %v250 = vpack.c.b16 %v196, %v194
  %v251 = vpack.c.b16 %v197, %v195
  %v252 = vpack.c.b16 %v200, %v198
  %v253 = vpack.c.b16 %v201, %v199
  %v254 = vpack.c.b16 %v204, %v202
  %v255 = vpack.c.b16 %v205, %v203
  %v256 = vpack.c.b16 %v208, %v206
  %v257 = vpack.c.b16 %v209, %v207
  %v258 = vpack.c.b16 %v212, %v210
  %v259 = vpack.c.b16 %v213, %v211
  %v260 = vpack.c.b16 %v216, %v214
  %v261 = vpack.c.b16 %v217, %v215
  %v262 = vpack.c.b16 %v220, %v218
  %v263 = vpack.c.b16 %v221, %v219
  %v264 = vpack.c.b16 %v224, %v222
  %v265 = vpack.c.b16 %v225, %v223
  %v266 = vpack.c.b16 %v228, %v226
  %v267 = vpack.c.b16 %v229, %v227
  %v268 = vpack.c.b16 %v232, %v230
  %v269 = vpack.c.b16 %v233, %v231
  %v270 = vpack.c.b16 %v236, %v234
  %v271 = vpack.c.b16 %v237, %v235
  %v272 = vpack.c.b16 %v240, %v238
  %v273 = vpack.c.b16 %v241, %v239
  %306 = vmatprep.subr.bf16.mxu0 %v243
  %307 = vmatpush1.bf16.msra.mxu0 %v242
  %308 = vmatprep.subr.bf16.mxu0 %v245
  %309 = vmatpush1.bf16.msra.mxu0 %v244
  %310 = vmatprep.subr.bf16.mxu0 %v247
  %311 = vmatpush1.bf16.msra.mxu0 %v246
  %312 = vmatprep.subr.bf16.mxu0 %v249
  %313 = vmatpush1.bf16.msra.mxu0 %v248
  %314 = vmatprep.subr.bf16.mxu0 %v251
  %315 = vmatpush1.bf16.msra.mxu0 %v250
  %316 = vmatprep.subr.bf16.mxu0 %v253
  %317 = vmatpush1.bf16.msra.mxu0 %v252
  %318 = vmatprep.subr.bf16.mxu0 %v255
  %319 = vmatpush1.bf16.msra.mxu0 %v254
  %320 = vmatprep.subr.bf16.mxu0 %v257
  %321 = vmatpush1.bf16.msra.mxu0 %v256
  %322 = vmatprep.subr.bf16.mxu0 %v259
  %323 = vmatpush1.bf16.msra.mxu0 %v258
  %324 = vmatprep.subr.bf16.mxu0 %v261
  %325 = vmatpush1.bf16.msra.mxu0 %v260
  %326 = vmatprep.subr.bf16.mxu0 %v263
  %327 = vmatpush1.bf16.msra.mxu0 %v262
  %328 = vmatprep.subr.bf16.mxu0 %v265
  %329 = vmatpush1.bf16.msra.mxu0 %v264
  %330 = vmatprep.subr.bf16.mxu0 %v267
  %331 = vmatpush1.bf16.msra.mxu0 %v266
  %332 = vmatprep.subr.bf16.mxu0 %v269
  %333 = vmatpush1.bf16.msra.mxu0 %v268
  %334 = vmatprep.subr.bf16.mxu0 %v271
  %335 = vmatpush1.bf16.msra.mxu0 %v270
  %336 = vmatprep.subr.bf16.mxu0 %v273
  %337 = vmatpush1.bf16.msra.mxu0 %v272
  %338 = vmatprep.mubr.bf16.mxu0 %v101
  %339 = vmatmul.mubr.bf16.gmra.mrb[0].mxu0 %v100
  %v340 = vpop.f32.mrb[0].mxu0
  %v341 = vadd.f32 %v139, %v340
  %v342 = vpop.f32.mrb[0].mxu0
  %v343 = vadd.f32 %v143, %v342
  %v344 = vpop.f32.mrb[0].mxu0
  %v345 = vpop.f32.mrb[0].mxu0
  %346 = vdwg.mxu0
  %v347 = vmax.f32 %v341, 0.0
  %v348 = vmax.f32 %v343, 0.0
  %v349 = vld [vmem:[%s4] sm:$0xff]
  %v350 = vld [vmem:[%s4 + $0x8] sm:$0xff]
  %v351 = vld [vmem:[%s4 + $0x10] sm:$0xff]
  %v352 = vld [vmem:[%s4 + $0x18] sm:$0xff]
  %v353 = vld [vmem:[%s4 + $0x20] sm:$0xff]
  %v354 = vld [vmem:[%s4 + $0x28] sm:$0xff]
  %v355 = vld [vmem:[%s4 + $0x30] sm:$0xff]
  %v356 = vld [vmem:[%s4 + $0x38] sm:$0xff]
  %v357 = vld [vmem:[%s4 + $0x40] sm:$0xff]
  %v358 = vld [vmem:[%s4 + $0x48] sm:$0xff]
  %v359 = vld [vmem:[%s4 + $0x50] sm:$0xff]
  %v360 = vld [vmem:[%s4 + $0x58] sm:$0xff]
  %v361 = vld [vmem:[%s4 + $0x60] sm:$0xff]
  %v362 = vld [vmem:[%s4 + $0x68] sm:$0xff]
  %v363 = vld [vmem:[%s4 + $0x70] sm:$0xff]
  %v364 = vld [vmem:[%s4 + $0x78] sm:$0xff]
  %v365 = vld [vmem:[%s4 + $0x80] sm:$0xff]
  %v366 = vld [vmem:[%s4 + $0x88] sm:$0xff]
  %v367 = vld [vmem:[%s4 + $0x90] sm:$0xff]
  %v368 = vld [vmem:[%s4 + $0x98] sm:$0xff]
  %v369 = vld [vmem:[%s4 + $0xa0] sm:$0xff]
  %v370 = vld [vmem:[%s4 + $0xa8] sm:$0xff]
  %v371 = vld [vmem:[%s4 + $0xb0] sm:$0xff]
  %v372 = vld [vmem:[%s4 + $0xb8] sm:$0xff]
  %v373 = vld [vmem:[%s4 + $0xc0] sm:$0xff]
  %v374 = vld [vmem:[%s4 + $0xc8] sm:$0xff]
  %v375 = vld [vmem:[%s4 + $0xd0] sm:$0xff]
  %v376 = vld [vmem:[%s4 + $0xd8] sm:$0xff]
  %v377 = vld [vmem:[%s4 + $0xe0] sm:$0xff]
  %v378 = vld [vmem:[%s4 + $0xe8] sm:$0xff]
  %v379 = vld [vmem:[%s4 + $0xf0] sm:$0xff]
  %v380 = vld [vmem:[%s4 + $0xf8] sm:$0xff]
  %v381 = vld [vmem:[%s0 + $0x2] sm:$0x3]
  %v382 = vunpack.c.l.bf16 %v381
  %s383 = scalar_lea.vmem %s1, 4
  %v384 = vld [vmem:[%s383] ss:$2 sm:$0x3]
  %v385 = vsub.f32 0.0, %v382
  %v386 = vmax.f32 %v385, 0.0
  %v387 = vsub.f32 0.0, %v386
  %v389 = vlaneseq
  %v390 = vshrl.u32 %v389, 7
  %v391 = vsub.s32 0, %v390
  %v392 = vrot.slane %v384, %v391
  %v393 = vlaneseq
  %v394 = vshrl.u32 %v393, 7
  %v395 = vsub.s32 1, %v394
  %v396 = vrot.slane %v384, %v395
  %v397 = vcombine.low %v392, %v396
  %v399 = vunpack.c.l.s4 1983009808
  %v400 = vunpack.c.0.s8 %v399
  %v401 = vlaneseq
  %v402 = vshrl.u32 %v401, 7
  %v403 = vsub.s32 %v400, %v402
  %v404 = vrot.slane %v397, %v403
  %v406 = vmul.f32 %v387, %v404
  %v407 = vadd.f32 %v382, %v406
  %s408 = scalar_lea.vmem %s1, 5
  %v409 = vld [vmem:[%s408] ss:$2 sm:$0x3]
  %v411 = vlaneseq
  %v412 = vshrl.u32 %v411, 7
  %v413 = vsub.s32 0, %v412
  %v414 = vrot.slane %v409, %v413
  %v415 = vlaneseq
  %v416 = vshrl.u32 %v415, 7
  %v417 = vsub.s32 1, %v416
  %v418 = vrot.slane %v409, %v417
  %v419 = vcombine.low %v414, %v418
  %v421 = vunpack.c.l.s4 1983009808
  %v422 = vunpack.c.0.s8 %v421
  %v423 = vlaneseq
  %v424 = vshrl.u32 %v423, 7
  %v425 = vsub.s32 %v422, %v424
  %v426 = vrot.slane %v419, %v425
  %v428 = vadd.f32 %v407, %v426
  %v431 = vunpack.c.l.s4 1983009808
  %v432 = vunpack.c.0.s8 %v431
  %v433 = vlaneseq
  %v434 = vshrl.u32 %v433, 7
  %v435 = vsub.s32 %v432, %v434
  %v436 = vrot.slane %v428, %v435
  %v437 = vcombine.high %v436, %v436
  %v440 = vpack.c.bf16 %v436, %v436
  %v441 = vpack.c.bf16 %v437, %v437
  %s442 = scalar_lea.vmem %s3, 256
  %v443 = vld [vmem:[%s442] sm:$0xff]
  %v444 = vld [vmem:[%s442 + $0x8] sm:$0xff]
  %v445 = vld [vmem:[%s442 + $0x10] sm:$0xff]
  %v446 = vld [vmem:[%s442 + $0x18] sm:$0xff]
  %v447 = vld [vmem:[%s442 + $0x20] sm:$0xff]
  %v448 = vld [vmem:[%s442 + $0x28] sm:$0xff]
  %v449 = vld [vmem:[%s442 + $0x30] sm:$0xff]
  %v450 = vld [vmem:[%s442 + $0x38] sm:$0xff]
  %v451 = vld [vmem:[%s442 + $0x40] sm:$0xff]
  %v452 = vld [vmem:[%s442 + $0x48] sm:$0xff]
  %v453 = vld [vmem:[%s442 + $0x50] sm:$0xff]
  %v454 = vld [vmem:[%s442 + $0x58] sm:$0xff]
  %v455 = vld [vmem:[%s442 + $0x60] sm:$0xff]
  %v456 = vld [vmem:[%s442 + $0x68] sm:$0xff]
  %v457 = vld [vmem:[%s442 + $0x70] sm:$0xff]
  %v458 = vld [vmem:[%s442 + $0x78] sm:$0xff]
  %v459 = vld [vmem:[%s442 + $0x80] sm:$0xff]
  %v460 = vld [vmem:[%s442 + $0x88] sm:$0xff]
  %v461 = vld [vmem:[%s442 + $0x90] sm:$0xff]
  %v462 = vld [vmem:[%s442 + $0x98] sm:$0xff]
  %v463 = vld [vmem:[%s442 + $0xa0] sm:$0xff]
  %v464 = vld [vmem:[%s442 + $0xa8] sm:$0xff]
  %v465 = vld [vmem:[%s442 + $0xb0] sm:$0xff]
  %v466 = vld [vmem:[%s442 + $0xb8] sm:$0xff]
  %v467 = vld [vmem:[%s442 + $0xc0] sm:$0xff]
  %v468 = vld [vmem:[%s442 + $0xc8] sm:$0xff]
  %v469 = vld [vmem:[%s442 + $0xd0] sm:$0xff]
  %v470 = vld [vmem:[%s442 + $0xd8] sm:$0xff]
  %v471 = vld [vmem:[%s442 + $0xe0] sm:$0xff]
  %v472 = vld [vmem:[%s442 + $0xe8] sm:$0xff]
  %v473 = vld [vmem:[%s442 + $0xf0] sm:$0xff]
  %v474 = vld [vmem:[%s442 + $0xf8] sm:$0xff]
  %s475 = scalar_lea.vmem %s2, 1
  %v476 = vld [vmem:[%s475] ss:$4 sm:$0x3]
  %v478 = vlaneseq
  %v479 = vshrl.u32 %v478, 7
  %v480 = vsub.s32 0, %v479
  %v481 = vrot.slane %v476, %v480
  %v482 = vlaneseq
  %v483 = vshrl.u32 %v482, 7
  %v484 = vsub.s32 1, %v483
  %v485 = vrot.slane %v476, %v484
  %v520 = vunpack.c.l.b16 %v443
  %v521 = vunpack.c.h.b16 %v443
  %v522 = vunpack.c.l.b16 %v444
  %v523 = vunpack.c.h.b16 %v444
  %v524 = vunpack.c.l.b16 %v445
  %v525 = vunpack.c.h.b16 %v445
  %v526 = vunpack.c.l.b16 %v446
  %v527 = vunpack.c.h.b16 %v446
  %v528 = vunpack.c.l.b16 %v447
  %v529 = vunpack.c.h.b16 %v447
  %v530 = vunpack.c.l.b16 %v448
  %v531 = vunpack.c.h.b16 %v448
  %v532 = vunpack.c.l.b16 %v449
  %v533 = vunpack.c.h.b16 %v449
  %v534 = vunpack.c.l.b16 %v450
  %v535 = vunpack.c.h.b16 %v450
  %v536 = vunpack.c.l.b16 %v451
  %v537 = vunpack.c.h.b16 %v451
  %v538 = vunpack.c.l.b16 %v452
  %v539 = vunpack.c.h.b16 %v452
  %v540 = vunpack.c.l.b16 %v453
  %v541 = vunpack.c.h.b16 %v453
  %v542 = vunpack.c.l.b16 %v454
  %v543 = vunpack.c.h.b16 %v454
  %v544 = vunpack.c.l.b16 %v455
  %v545 = vunpack.c.h.b16 %v455
  %v546 = vunpack.c.l.b16 %v456
  %v547 = vunpack.c.h.b16 %v456
  %v548 = vunpack.c.l.b16 %v457
  %v549 = vunpack.c.h.b16 %v457
  %v550 = vunpack.c.l.b16 %v458
  %v551 = vunpack.c.h.b16 %v458
  %v552 = vunpack.c.l.b16 %v459
  %v553 = vunpack.c.h.b16 %v459
  %v554 = vunpack.c.l.b16 %v460
  %v555 = vunpack.c.h.b16 %v460
  %v556 = vunpack.c.l.b16 %v461
  %v557 = vunpack.c.h.b16 %v461
  %v558 = vunpack.c.l.b16 %v462
  %v559 = vunpack.c.h.b16 %v462
  %v560 = vunpack.c.l.b16 %v463
  %v561 = vunpack.c.h.b16 %v463
  %v562 = vunpack.c.l.b16 %v464
  %v563 = vunpack.c.h.b16 %v464
  %v564 = vunpack.c.l.b16 %v465
  %v565 = vunpack.c.h.b16 %v465
  %v566 = vunpack.c.l.b16 %v466
  %v567 = vunpack.c.h.b16 %v466
  %v568 = vunpack.c.l.b16 %v467
  %v569 = vunpack.c.h.b16 %v467
  %v570 = vunpack.c.l.b16 %v468
  %v571 = vunpack.c.h.b16 %v468
  %v572 = vunpack.c.l.b16 %v469
  %v573 = vunpack.c.h.b16 %v469
  %v574 = vunpack.c.l.b16 %v470
  %v575 = vunpack.c.h.b16 %v470
  %v576 = vunpack.c.l.b16 %v471
  %v577 = vunpack.c.h.b16 %v471
  %v578 = vunpack.c.l.b16 %v472
  %v579 = vunpack.c.h.b16 %v472
  %v580 = vunpack.c.l.b16 %v473
  %v581 = vunpack.c.h.b16 %v473
  %v582 = vunpack.c.l.b16 %v474
  %v583 = vunpack.c.h.b16 %v474
  %v584 = vpack.c.b16 %v522, %v520
  %v585 = vpack.c.b16 %v523, %v521
  %v586 = vpack.c.b16 %v526, %v524
  %v587 = vpack.c.b16 %v527, %v525
  %v588 = vpack.c.b16 %v530, %v528
  %v589 = vpack.c.b16 %v531, %v529
  %v590 = vpack.c.b16 %v534, %v532
  %v591 = vpack.c.b16 %v535, %v533
  %v592 = vpack.c.b16 %v538, %v536
  %v593 = vpack.c.b16 %v539, %v537
  %v594 = vpack.c.b16 %v542, %v540
  %v595 = vpack.c.b16 %v543, %v541
  %v596 = vpack.c.b16 %v546, %v544
  %v597 = vpack.c.b16 %v547, %v545
  %v598 = vpack.c.b16 %v550, %v548
  %v599 = vpack.c.b16 %v551, %v549
  %v600 = vpack.c.b16 %v554, %v552
  %v601 = vpack.c.b16 %v555, %v553
  %v602 = vpack.c.b16 %v558, %v556
  %v603 = vpack.c.b16 %v559, %v557
  %v604 = vpack.c.b16 %v562, %v560
  %v605 = vpack.c.b16 %v563, %v561
  %v606 = vpack.c.b16 %v566, %v564
  %v607 = vpack.c.b16 %v567, %v565
  %v608 = vpack.c.b16 %v570, %v568
  %v609 = vpack.c.b16 %v571, %v569
  %v610 = vpack.c.b16 %v574, %v572
  %v611 = vpack.c.b16 %v575, %v573
  %v612 = vpack.c.b16 %v578, %v576
  %v613 = vpack.c.b16 %v579, %v577
  %v614 = vpack.c.b16 %v582, %v580
  %v615 = vpack.c.b16 %v583, %v581
  %648 = vmatprep.subr.bf16.mxu0 %v585
  %649 = vmatpush1.bf16.msra.mxu0 %v584
  %650 = vmatprep.subr.bf16.mxu0 %v587
  %651 = vmatpush1.bf16.msra.mxu0 %v586
  %652 = vmatprep.subr.bf16.mxu0 %v589
  %653 = vmatpush1.bf16.msra.mxu0 %v588
  %654 = vmatprep.subr.bf16.mxu0 %v591
  %655 = vmatpush1.bf16.msra.mxu0 %v590
  %656 = vmatprep.subr.bf16.mxu0 %v593
  %657 = vmatpush1.bf16.msra.mxu0 %v592
  %658 = vmatprep.subr.bf16.mxu0 %v595
  %659 = vmatpush1.bf16.msra.mxu0 %v594
  %660 = vmatprep.subr.bf16.mxu0 %v597
  %661 = vmatpush1.bf16.msra.mxu0 %v596
  %662 = vmatprep.subr.bf16.mxu0 %v599
  %663 = vmatpush1.bf16.msra.mxu0 %v598
  %664 = vmatprep.subr.bf16.mxu0 %v601
  %665 = vmatpush1.bf16.msra.mxu0 %v600
  %666 = vmatprep.subr.bf16.mxu0 %v603
  %667 = vmatpush1.bf16.msra.mxu0 %v602
  %668 = vmatprep.subr.bf16.mxu0 %v605
  %669 = vmatpush1.bf16.msra.mxu0 %v604
  %670 = vmatprep.subr.bf16.mxu0 %v607
  %671 = vmatpush1.bf16.msra.mxu0 %v606
  %672 = vmatprep.subr.bf16.mxu0 %v609
  %673 = vmatpush1.bf16.msra.mxu0 %v608
  %674 = vmatprep.subr.bf16.mxu0 %v611
  %675 = vmatpush1.bf16.msra.mxu0 %v610
  %676 = vmatprep.subr.bf16.mxu0 %v613
  %677 = vmatpush1.bf16.msra.mxu0 %v612
  %678 = vmatprep.subr.bf16.mxu0 %v615
  %679 = vmatpush1.bf16.msra.mxu0 %v614
  %680 = vmatprep.mubr.bf16.mxu0 %v441
  %681 = vmatmul.mubr.bf16.gmra.mrb[0].mxu0 %v440
  %v682 = vpop.f32.mrb[0].mxu0
  %v683 = vadd.f32 %v481, %v682
  %v684 = vpop.f32.mrb[0].mxu0
  %v685 = vadd.f32 %v485, %v684
  %v686 = vpop.f32.mrb[0].mxu0
  %v687 = vpop.f32.mrb[0].mxu0
  %688 = vdwg.mxu0
  %v689 = vmax.f32 %v683, 0.0
  %v690 = vmax.f32 %v685, 0.0
  %s691 = scalar_lea.vmem %s4, 256
  %v692 = vld [vmem:[%s691] sm:$0xff]
  %v693 = vld [vmem:[%s691 + $0x8] sm:$0xff]
  %v694 = vld [vmem:[%s691 + $0x10] sm:$0xff]
  %v695 = vld [vmem:[%s691 + $0x18] sm:$0xff]
  %v696 = vld [vmem:[%s691 + $0x20] sm:$0xff]
  %v697 = vld [vmem:[%s691 + $0x28] sm:$0xff]
  %v698 = vld [vmem:[%s691 + $0x30] sm:$0xff]
  %v699 = vld [vmem:[%s691 + $0x38] sm:$0xff]
  %v700 = vld [vmem:[%s691 + $0x40] sm:$0xff]
  %v701 = vld [vmem:[%s691 + $0x48] sm:$0xff]
  %v702 = vld [vmem:[%s691 + $0x50] sm:$0xff]
  %v703 = vld [vmem:[%s691 + $0x58] sm:$0xff]
  %v704 = vld [vmem:[%s691 + $0x60] sm:$0xff]
  %v705 = vld [vmem:[%s691 + $0x68] sm:$0xff]
  %v706 = vld [vmem:[%s691 + $0x70] sm:$0xff]
  %v707 = vld [vmem:[%s691 + $0x78] sm:$0xff]
  %v708 = vld [vmem:[%s691 + $0x80] sm:$0xff]
  %v709 = vld [vmem:[%s691 + $0x88] sm:$0xff]
  %v710 = vld [vmem:[%s691 + $0x90] sm:$0xff]
  %v711 = vld [vmem:[%s691 + $0x98] sm:$0xff]
  %v712 = vld [vmem:[%s691 + $0xa0] sm:$0xff]
  %v713 = vld [vmem:[%s691 + $0xa8] sm:$0xff]
  %v714 = vld [vmem:[%s691 + $0xb0] sm:$0xff]
  %v715 = vld [vmem:[%s691 + $0xb8] sm:$0xff]
  %v716 = vld [vmem:[%s691 + $0xc0] sm:$0xff]
  %v717 = vld [vmem:[%s691 + $0xc8] sm:$0xff]
  %v718 = vld [vmem:[%s691 + $0xd0] sm:$0xff]
  %v719 = vld [vmem:[%s691 + $0xd8] sm:$0xff]
  %v720 = vld [vmem:[%s691 + $0xe0] sm:$0xff]
  %v721 = vld [vmem:[%s691 + $0xe8] sm:$0xff]
  %v722 = vld [vmem:[%s691 + $0xf0] sm:$0xff]
  %v723 = vld [vmem:[%s691 + $0xf8] sm:$0xff]
  %724 = vmatprep.subr.mxu0 0.0
  %725 = vmatpush1.msra.mxu0 %v692
  %726 = vmatprep.subr.mxu0 0.0
  %727 = vmatpush1.msra.mxu0 %v693
  %728 = vmatprep.subr.mxu0 0.0
  %729 = vmatpush1.msra.mxu0 %v694
  %730 = vmatprep.subr.mxu0 0.0
  %731 = vmatpush1.msra.mxu0 %v695
  %732 = vmatprep.subr.mxu0 0.0
  %733 = vmatpush1.msra.mxu0 %v696
  %734 = vmatprep.subr.mxu0 0.0
  %735 = vmatpush1.msra.mxu0 %v697
  %736 = vmatprep.subr.mxu0 0.0
  %737 = vmatpush1.msra.mxu0 %v698
  %738 = vmatprep.subr.mxu0 0.0
  %739 = vmatpush1.msra.mxu0 %v699
  %740 = vmatprep.subr.mxu0 0.0
  %741 = vmatpush1.msra.mxu0 %v700
  %742 = vmatprep.subr.mxu0 0.0
  %743 = vmatpush1.msra.mxu0 %v701
  %744 = vmatprep.subr.mxu0 0.0
  %745 = vmatpush1.msra.mxu0 %v702
  %746 = vmatprep.subr.mxu0 0.0
  %747 = vmatpush1.msra.mxu0 %v703
  %748 = vmatprep.subr.mxu0 0.0
  %749 = vmatpush1.msra.mxu0 %v704
  %750 = vmatprep.subr.mxu0 0.0
  %751 = vmatpush1.msra.mxu0 %v705
  %752 = vmatprep.subr.mxu0 0.0
  %753 = vmatpush1.msra.mxu0 %v706
  %754 = vmatprep.subr.mxu0 0.0
  %755 = vmatpush1.msra.mxu0 %v707
  %756 = vmatprep.subr.mxu0 0.0
  %757 = vmatpush1.msra.mxu0 %v708
  %758 = vmatprep.subr.mxu0 0.0
  %759 = vmatpush1.msra.mxu0 %v709
  %760 = vmatprep.subr.mxu0 0.0
  %761 = vmatpush1.msra.mxu0 %v710
  %762 = vmatprep.subr.mxu0 0.0
  %763 = vmatpush1.msra.mxu0 %v711
  %764 = vmatprep.subr.mxu0 0.0
  %765 = vmatpush1.msra.mxu0 %v712
  %766 = vmatprep.subr.mxu0 0.0
  %767 = vmatpush1.msra.mxu0 %v713
  %768 = vmatprep.subr.mxu0 0.0
  %769 = vmatpush1.msra.mxu0 %v714
  %770 = vmatprep.subr.mxu0 0.0
  %771 = vmatpush1.msra.mxu0 %v715
  %772 = vmatprep.subr.mxu0 0.0
  %773 = vmatpush1.msra.mxu0 %v716
  %774 = vmatprep.subr.mxu0 0.0
  %775 = vmatpush1.msra.mxu0 %v717
  %776 = vmatprep.subr.mxu0 0.0
  %777 = vmatpush1.msra.mxu0 %v718
  %778 = vmatprep.subr.mxu0 0.0
  %779 = vmatpush1.msra.mxu0 %v719
  %780 = vmatprep.subr.mxu0 0.0
  %781 = vmatpush1.msra.mxu0 %v720
  %782 = vmatprep.subr.mxu0 0.0
  %783 = vmatpush1.msra.mxu0 %v721
  %784 = vmatprep.subr.mxu0 0.0
  %785 = vmatpush1.msra.mxu0 %v722
  %786 = vmatprep.subr.mxu0 0.0
  %787 = vmatpush1.msra.mxu0 %v723
  %788 = vmatprep.mubr.f32.mxu0 %v690
  %789 = vmatmul.mubr.f32.gmra.mrb[0].mxu0 %v689
  %v790 = vpop.f32.mrb[0].mxu0
  %v791 = vadd.f32 0.0, %v790
  %v792 = vpop.f32.mrb[0].mxu0
  %793 = vdwg.mxu0
  %794 = vmatprep.subr.mxu0 0.0
  %795 = vmatpush1.msra.mxu0 %v349
  %796 = vmatprep.subr.mxu0 0.0
  %797 = vmatpush1.msra.mxu0 %v350
  %798 = vmatprep.subr.mxu0 0.0
  %799 = vmatpush1.msra.mxu0 %v351
  %800 = vmatprep.subr.mxu0 0.0
  %801 = vmatpush1.msra.mxu0 %v352
  %802 = vmatprep.subr.mxu0 0.0
  %803 = vmatpush1.msra.mxu0 %v353
  %804 = vmatprep.subr.mxu0 0.0
  %805 = vmatpush1.msra.mxu0 %v354
  %806 = vmatprep.subr.mxu0 0.0
  %807 = vmatpush1.msra.mxu0 %v355
  %808 = vmatprep.subr.mxu0 0.0
  %809 = vmatpush1.msra.mxu0 %v356
  %810 = vmatprep.subr.mxu0 0.0
  %811 = vmatpush1.msra.mxu0 %v357
  %812 = vmatprep.subr.mxu0 0.0
  %813 = vmatpush1.msra.mxu0 %v358
  %814 = vmatprep.subr.mxu0 0.0
  %815 = vmatpush1.msra.mxu0 %v359
  %816 = vmatprep.subr.mxu0 0.0
  %817 = vmatpush1.msra.mxu0 %v360
  %818 = vmatprep.subr.mxu0 0.0
  %819 = vmatpush1.msra.mxu0 %v361
  %820 = vmatprep.subr.mxu0 0.0
  %821 = vmatpush1.msra.mxu0 %v362
  %822 = vmatprep.subr.mxu0 0.0
  %823 = vmatpush1.msra.mxu0 %v363
  %824 = vmatprep.subr.mxu0 0.0
  %825 = vmatpush1.msra.mxu0 %v364
  %826 = vmatprep.subr.mxu0 0.0
  %827 = vmatpush1.msra.mxu0 %v365
  %828 = vmatprep.subr.mxu0 0.0
  %829 = vmatpush1.msra.mxu0 %v366
  %830 = vmatprep.subr.mxu0 0.0
  %831 = vmatpush1.msra.mxu0 %v367
  %832 = vmatprep.subr.mxu0 0.0
  %833 = vmatpush1.msra.mxu0 %v368
  %834 = vmatprep.subr.mxu0 0.0
  %835 = vmatpush1.msra.mxu0 %v369
  %836 = vmatprep.subr.mxu0 0.0
  %837 = vmatpush1.msra.mxu0 %v370
  %838 = vmatprep.subr.mxu0 0.0
  %839 = vmatpush1.msra.mxu0 %v371
  %840 = vmatprep.subr.mxu0 0.0
  %841 = vmatpush1.msra.mxu0 %v372
  %842 = vmatprep.subr.mxu0 0.0
  %843 = vmatpush1.msra.mxu0 %v373
  %844 = vmatprep.subr.mxu0 0.0
  %845 = vmatpush1.msra.mxu0 %v374
  %846 = vmatprep.subr.mxu0 0.0
  %847 = vmatpush1.msra.mxu0 %v375
  %848 = vmatprep.subr.mxu0 0.0
  %849 = vmatpush1.msra.mxu0 %v376
  %850 = vmatprep.subr.mxu0 0.0
  %851 = vmatpush1.msra.mxu0 %v377
  %852 = vmatprep.subr.mxu0 0.0
  %853 = vmatpush1.msra.mxu0 %v378
  %854 = vmatprep.subr.mxu0 0.0
  %855 = vmatpush1.msra.mxu0 %v379
  %856 = vmatprep.subr.mxu0 0.0
  %857 = vmatpush1.msra.mxu0 %v380
  %858 = vmatprep.mubr.f32.mxu0 %v348
  %859 = vmatmul.mubr.f32.gmra.mrb[0].mxu0 %v347
  %v860 = vpop.f32.mrb[0].mxu0
  %v861 = vadd.f32 %v791, %v860
  %v862 = vpop.f32.mrb[0].mxu0
  %863 = vdwg.mxu0
  %v864 = vld [vmem:[%s0 + $0x4] sm:$0x3]
  %v865 = vunpack.c.l.bf16 %v864
  %s866 = scalar_lea.vmem %s1, 8
  %v867 = vld [vmem:[%s866] ss:$2 sm:$0x3]
  %v868 = vsub.f32 0.0, %v865
  %v869 = vmax.f32 %v868, 0.0
  %v870 = vsub.f32 0.0, %v869
  %v872 = vlaneseq
  %v873 = vshrl.u32 %v872, 7
  %v874 = vsub.s32 0, %v873
  %v875 = vrot.slane %v867, %v874
  %v876 = vlaneseq
  %v877 = vshrl.u32 %v876, 7
  %v878 = vsub.s32 1, %v877
  %v879 = vrot.slane %v867, %v878
  %v880 = vcombine.low %v875, %v879
  %v882 = vunpack.c.l.s4 1983009808
  %v883 = vunpack.c.0.s8 %v882
  %v884 = vlaneseq
  %v885 = vshrl.u32 %v884, 7
  %v886 = vsub.s32 %v883, %v885
  %v887 = vrot.slane %v880, %v886
  %v889 = vmul.f32 %v870, %v887
  %v890 = vadd.f32 %v865, %v889
  %s891 = scalar_lea.vmem %s1, 9
  %v892 = vld [vmem:[%s891] ss:$2 sm:$0x3]
  %v894 = vlaneseq
  %v895 = vshrl.u32 %v894, 7
  %v896 = vsub.s32 0, %v895
  %v897 = vrot.slane %v892, %v896
  %v898 = vlaneseq
  %v899 = vshrl.u32 %v898, 7
  %v900 = vsub.s32 1, %v899
  %v901 = vrot.slane %v892, %v900
  %v902 = vcombine.low %v897, %v901
  %v904 = vunpack.c.l.s4 1983009808
  %v905 = vunpack.c.0.s8 %v904
  %v906 = vlaneseq
  %v907 = vshrl.u32 %v906, 7
  %v908 = vsub.s32 %v905, %v907
  %v909 = vrot.slane %v902, %v908
  %v911 = vadd.f32 %v890, %v909
  %v914 = vunpack.c.l.s4 1983009808
  %v915 = vunpack.c.0.s8 %v914
  %v916 = vlaneseq
  %v917 = vshrl.u32 %v916, 7
  %v918 = vsub.s32 %v915, %v917
  %v919 = vrot.slane %v911, %v918
  %v920 = vcombine.high %v919, %v919
  %v923 = vpack.c.bf16 %v919, %v919
  %v924 = vpack.c.bf16 %v920, %v920
  %s925 = scalar_lea.vmem %s3, 512
  %v926 = vld [vmem:[%s925] sm:$0xff]
  %v927 = vld [vmem:[%s925 + $0x8] sm:$0xff]
  %v928 = vld [vmem:[%s925 + $0x10] sm:$0xff]
  %v929 = vld [vmem:[%s925 + $0x18] sm:$0xff]
  %v930 = vld [vmem:[%s925 + $0x20] sm:$0xff]
  %v931 = vld [vmem:[%s925 + $0x28] sm:$0xff]
  %v932 = vld [vmem:[%s925 + $0x30] sm:$0xff]
  %v933 = vld [vmem:[%s925 + $0x38] sm:$0xff]
  %v934 = vld [vmem:[%s925 + $0x40] sm:$0xff]
  %v935 = vld [vmem:[%s925 + $0x48] sm:$0xff]
  %v936 = vld [vmem:[%s925 + $0x50] sm:$0xff]
  %v937 = vld [vmem:[%s925 + $0x58] sm:$0xff]
  %v938 = vld [vmem:[%s925 + $0x60] sm:$0xff]
  %v939 = vld [vmem:[%s925 + $0x68] sm:$0xff]
  %v940 = vld [vmem:[%s925 + $0x70] sm:$0xff]
  %v941 = vld [vmem:[%s925 + $0x78] sm:$0xff]
  %v942 = vld [vmem:[%s925 + $0x80] sm:$0xff]
  %v943 = vld [vmem:[%s925 + $0x88] sm:$0xff]
  %v944 = vld [vmem:[%s925 + $0x90] sm:$0xff]
  %v945 = vld [vmem:[%s925 + $0x98] sm:$0xff]
  %v946 = vld [vmem:[%s925 + $0xa0] sm:$0xff]
  %v947 = vld [vmem:[%s925 + $0xa8] sm:$0xff]
  %v948 = vld [vmem:[%s925 + $0xb0] sm:$0xff]
  %v949 = vld [vmem:[%s925 + $0xb8] sm:$0xff]
  %v950 = vld [vmem:[%s925 + $0xc0] sm:$0xff]
  %v951 = vld [vmem:[%s925 + $0xc8] sm:$0xff]
  %v952 = vld [vmem:[%s925 + $0xd0] sm:$0xff]
  %v953 = vld [vmem:[%s925 + $0xd8] sm:$0xff]
  %v954 = vld [vmem:[%s925 + $0xe0] sm:$0xff]
  %v955 = vld [vmem:[%s925 + $0xe8] sm:$0xff]
  %v956 = vld [vmem:[%s925 + $0xf0] sm:$0xff]
  %v957 = vld [vmem:[%s925 + $0xf8] sm:$0xff]
  %s958 = scalar_lea.vmem %s2, 2
  %v959 = vld [vmem:[%s958] ss:$4 sm:$0x3]
  %v961 = vlaneseq
  %v962 = vshrl.u32 %v961, 7
  %v963 = vsub.s32 0, %v962
  %v964 = vrot.slane %v959, %v963
  %v965 = vlaneseq
  %v966 = vshrl.u32 %v965, 7
  %v967 = vsub.s32 1, %v966
  %v968 = vrot.slane %v959, %v967
  %v1003 = vunpack.c.l.b16 %v926
  %v1004 = vunpack.c.h.b16 %v926
  %v1005 = vunpack.c.l.b16 %v927
  %v1006 = vunpack.c.h.b16 %v927
  %v1007 = vunpack.c.l.b16 %v928
  %v1008 = vunpack.c.h.b16 %v928
  %v1009 = vunpack.c.l.b16 %v929
  %v1010 = vunpack.c.h.b16 %v929
  %v1011 = vunpack.c.l.b16 %v930
  %v1012 = vunpack.c.h.b16 %v930
  %v1013 = vunpack.c.l.b16 %v931
  %v1014 = vunpack.c.h.b16 %v931
  %v1015 = vunpack.c.l.b16 %v932
  %v1016 = vunpack.c.h.b16 %v932
  %v1017 = vunpack.c.l.b16 %v933
  %v1018 = vunpack.c.h.b16 %v933
  %v1019 = vunpack.c.l.b16 %v934
  %v1020 = vunpack.c.h.b16 %v934
  %v1021 = vunpack.c.l.b16 %v935
  %v1022 = vunpack.c.h.b16 %v935
  %v1023 = vunpack.c.l.b16 %v936
  %v1024 = vunpack.c.h.b16 %v936
  %v1025 = vunpack.c.l.b16 %v937
  %v1026 = vunpack.c.h.b16 %v937
  %v1027 = vunpack.c.l.b16 %v938
  %v1028 = vunpack.c.h.b16 %v938
  %v1029 = vunpack.c.l.b16 %v939
  %v1030 = vunpack.c.h.b16 %v939
  %v1031 = vunpack.c.l.b16 %v940
  %v1032 = vunpack.c.h.b16 %v940
  %v1033 = vunpack.c.l.b16 %v941
  %v1034 = vunpack.c.h.b16 %v941
  %v1035 = vunpack.c.l.b16 %v942
  %v1036 = vunpack.c.h.b16 %v942
  %v1037 = vunpack.c.l.b16 %v943
  %v1038 = vunpack.c.h.b16 %v943
  %v1039 = vunpack.c.l.b16 %v944
  %v1040 = vunpack.c.h.b16 %v944
  %v1041 = vunpack.c.l.b16 %v945
  %v1042 = vunpack.c.h.b16 %v945
  %v1043 = vunpack.c.l.b16 %v946
  %v1044 = vunpack.c.h.b16 %v946
  %v1045 = vunpack.c.l.b16 %v947
  %v1046 = vunpack.c.h.b16 %v947
  %v1047 = vunpack.c.l.b16 %v948
  %v1048 = vunpack.c.h.b16 %v948
  %v1049 = vunpack.c.l.b16 %v949
  %v1050 = vunpack.c.h.b16 %v949
  %v1051 = vunpack.c.l.b16 %v950
  %v1052 = vunpack.c.h.b16 %v950
  %v1053 = vunpack.c.l.b16 %v951
  %v1054 = vunpack.c.h.b16 %v951
  %v1055 = vunpack.c.l.b16 %v952
  %v1056 = vunpack.c.h.b16 %v952
  %v1057 = vunpack.c.l.b16 %v953
  %v1058 = vunpack.c.h.b16 %v953
  %v1059 = vunpack.c.l.b16 %v954
  %v1060 = vunpack.c.h.b16 %v954
  %v1061 = vunpack.c.l.b16 %v955
  %v1062 = vunpack.c.h.b16 %v955
  %v1063 = vunpack.c.l.b16 %v956
  %v1064 = vunpack.c.h.b16 %v956
  %v1065 = vunpack.c.l.b16 %v957
  %v1066 = vunpack.c.h.b16 %v957
  %v1067 = vpack.c.b16 %v1005, %v1003
  %v1068 = vpack.c.b16 %v1006, %v1004
  %v1069 = vpack.c.b16 %v1009, %v1007
  %v1070 = vpack.c.b16 %v1010, %v1008
  %v1071 = vpack.c.b16 %v1013, %v1011
  %v1072 = vpack.c.b16 %v1014, %v1012
  %v1073 = vpack.c.b16 %v1017, %v1015
  %v1074 = vpack.c.b16 %v1018, %v1016
  %v1075 = vpack.c.b16 %v1021, %v1019
  %v1076 = vpack.c.b16 %v1022, %v1020
  %v1077 = vpack.c.b16 %v1025, %v1023
  %v1078 = vpack.c.b16 %v1026, %v1024
  %v1079 = vpack.c.b16 %v1029, %v1027
  %v1080 = vpack.c.b16 %v1030, %v1028
  %v1081 = vpack.c.b16 %v1033, %v1031
  %v1082 = vpack.c.b16 %v1034, %v1032
  %v1083 = vpack.c.b16 %v1037, %v1035
  %v1084 = vpack.c.b16 %v1038, %v1036
  %v1085 = vpack.c.b16 %v1041, %v1039
  %v1086 = vpack.c.b16 %v1042, %v1040
  %v1087 = vpack.c.b16 %v1045, %v1043
  %v1088 = vpack.c.b16 %v1046, %v1044
  %v1089 = vpack.c.b16 %v1049, %v1047
  %v1090 = vpack.c.b16 %v1050, %v1048
  %v1091 = vpack.c.b16 %v1053, %v1051
  %v1092 = vpack.c.b16 %v1054, %v1052
  %v1093 = vpack.c.b16 %v1057, %v1055
  %v1094 = vpack.c.b16 %v1058, %v1056
  %v1095 = vpack.c.b16 %v1061, %v1059
  %v1096 = vpack.c.b16 %v1062, %v1060
  %v1097 = vpack.c.b16 %v1065, %v1063
  %v1098 = vpack.c.b16 %v1066, %v1064
  %1131 = vmatprep.subr.bf16.mxu0 %v1068
  %1132 = vmatpush1.bf16.msra.mxu0 %v1067
  %1133 = vmatprep.subr.bf16.mxu0 %v1070
  %1134 = vmatpush1.bf16.msra.mxu0 %v1069
  %1135 = vmatprep.subr.bf16.mxu0 %v1072
  %1136 = vmatpush1.bf16.msra.mxu0 %v1071
  %1137 = vmatprep.subr.bf16.mxu0 %v1074
  %1138 = vmatpush1.bf16.msra.mxu0 %v1073
  %1139 = vmatprep.subr.bf16.mxu0 %v1076
  %1140 = vmatpush1.bf16.msra.mxu0 %v1075
  %1141 = vmatprep.subr.bf16.mxu0 %v1078
  %1142 = vmatpush1.bf16.msra.mxu0 %v1077
  %1143 = vmatprep.subr.bf16.mxu0 %v1080
  %1144 = vmatpush1.bf16.msra.mxu0 %v1079
  %1145 = vmatprep.subr.bf16.mxu0 %v1082
  %1146 = vmatpush1.bf16.msra.mxu0 %v1081
  %1147 = vmatprep.subr.bf16.mxu0 %v1084
  %1148 = vmatpush1.bf16.msra.mxu0 %v1083
  %1149 = vmatprep.subr.bf16.mxu0 %v1086
  %1150 = vmatpush1.bf16.msra.mxu0 %v1085
  %1151 = vmatprep.subr.bf16.mxu0 %v1088
  %1152 = vmatpush1.bf16.msra.mxu0 %v1087
  %1153 = vmatprep.subr.bf16.mxu0 %v1090
  %1154 = vmatpush1.bf16.msra.mxu0 %v1089
  %1155 = vmatprep.subr.bf16.mxu0 %v1092
  %1156 = vmatpush1.bf16.msra.mxu0 %v1091
  %1157 = vmatprep.subr.bf16.mxu0 %v1094
  %1158 = vmatpush1.bf16.msra.mxu0 %v1093
  %1159 = vmatprep.subr.bf16.mxu0 %v1096
  %1160 = vmatpush1.bf16.msra.mxu0 %v1095
  %1161 = vmatprep.subr.bf16.mxu0 %v1098
  %1162 = vmatpush1.bf16.msra.mxu0 %v1097
  %1163 = vmatprep.mubr.bf16.mxu0 %v924
  %1164 = vmatmul.mubr.bf16.gmra.mrb[0].mxu0 %v923
  %v1165 = vpop.f32.mrb[0].mxu0
  %v1166 = vadd.f32 %v964, %v1165
  %v1167 = vpop.f32.mrb[0].mxu0
  %v1168 = vadd.f32 %v968, %v1167
  %v1169 = vpop.f32.mrb[0].mxu0
  %v1170 = vpop.f32.mrb[0].mxu0
  %1171 = vdwg.mxu0
  %v1172 = vmax.f32 %v1166, 0.0
  %v1173 = vmax.f32 %v1168, 0.0
  %s1174 = scalar_lea.vmem %s4, 512
  %v1175 = vld [vmem:[%s1174] sm:$0xff]
  %v1176 = vld [vmem:[%s1174 + $0x8] sm:$0xff]
  %v1177 = vld [vmem:[%s1174 + $0x10] sm:$0xff]
  %v1178 = vld [vmem:[%s1174 + $0x18] sm:$0xff]
  %v1179 = vld [vmem:[%s1174 + $0x20] sm:$0xff]
  %v1180 = vld [vmem:[%s1174 + $0x28] sm:$0xff]
  %v1181 = vld [vmem:[%s1174 + $0x30] sm:$0xff]
  %v1182 = vld [vmem:[%s1174 + $0x38] sm:$0xff]
  %v1183 = vld [vmem:[%s1174 + $0x40] sm:$0xff]
  %v1184 = vld [vmem:[%s1174 + $0x48] sm:$0xff]
  %v1185 = vld [vmem:[%s1174 + $0x50] sm:$0xff]
  %v1186 = vld [vmem:[%s1174 + $0x58] sm:$0xff]
  %v1187 = vld [vmem:[%s1174 + $0x60] sm:$0xff]
  %v1188 = vld [vmem:[%s1174 + $0x68] sm:$0xff]
  %v1189 = vld [vmem:[%s1174 + $0x70] sm:$0xff]
  %v1190 = vld [vmem:[%s1174 + $0x78] sm:$0xff]
  %v1191 = vld [vmem:[%s1174 + $0x80] sm:$0xff]
  %v1192 = vld [vmem:[%s1174 + $0x88] sm:$0xff]
  %v1193 = vld [vmem:[%s1174 + $0x90] sm:$0xff]
  %v1194 = vld [vmem:[%s1174 + $0x98] sm:$0xff]
  %v1195 = vld [vmem:[%s1174 + $0xa0] sm:$0xff]
  %v1196 = vld [vmem:[%s1174 + $0xa8] sm:$0xff]
  %v1197 = vld [vmem:[%s1174 + $0xb0] sm:$0xff]
  %v1198 = vld [vmem:[%s1174 + $0xb8] sm:$0xff]
  %v1199 = vld [vmem:[%s1174 + $0xc0] sm:$0xff]
  %v1200 = vld [vmem:[%s1174 + $0xc8] sm:$0xff]
  %v1201 = vld [vmem:[%s1174 + $0xd0] sm:$0xff]
  %v1202 = vld [vmem:[%s1174 + $0xd8] sm:$0xff]
  %v1203 = vld [vmem:[%s1174 + $0xe0] sm:$0xff]
  %v1204 = vld [vmem:[%s1174 + $0xe8] sm:$0xff]
  %v1205 = vld [vmem:[%s1174 + $0xf0] sm:$0xff]
  %v1206 = vld [vmem:[%s1174 + $0xf8] sm:$0xff]
  %1207 = vmatprep.subr.mxu0 0.0
  %1208 = vmatpush1.msra.mxu0 %v1175
  %1209 = vmatprep.subr.mxu0 0.0
  %1210 = vmatpush1.msra.mxu0 %v1176
  %1211 = vmatprep.subr.mxu0 0.0
  %1212 = vmatpush1.msra.mxu0 %v1177
  %1213 = vmatprep.subr.mxu0 0.0
  %1214 = vmatpush1.msra.mxu0 %v1178
  %1215 = vmatprep.subr.mxu0 0.0
  %1216 = vmatpush1.msra.mxu0 %v1179
  %1217 = vmatprep.subr.mxu0 0.0
  %1218 = vmatpush1.msra.mxu0 %v1180
  %1219 = vmatprep.subr.mxu0 0.0
  %1220 = vmatpush1.msra.mxu0 %v1181
  %1221 = vmatprep.subr.mxu0 0.0
  %1222 = vmatpush1.msra.mxu0 %v1182
  %1223 = vmatprep.subr.mxu0 0.0
  %1224 = vmatpush1.msra.mxu0 %v1183
  %1225 = vmatprep.subr.mxu0 0.0
  %1226 = vmatpush1.msra.mxu0 %v1184
  %1227 = vmatprep.subr.mxu0 0.0
  %1228 = vmatpush1.msra.mxu0 %v1185
  %1229 = vmatprep.subr.mxu0 0.0
  %1230 = vmatpush1.msra.mxu0 %v1186
  %1231 = vmatprep.subr.mxu0 0.0
  %1232 = vmatpush1.msra.mxu0 %v1187
  %1233 = vmatprep.subr.mxu0 0.0
  %1234 = vmatpush1.msra.mxu0 %v1188
  %1235 = vmatprep.subr.mxu0 0.0
  %1236 = vmatpush1.msra.mxu0 %v1189
  %1237 = vmatprep.subr.mxu0 0.0
  %1238 = vmatpush1.msra.mxu0 %v1190
  %1239 = vmatprep.subr.mxu0 0.0
  %1240 = vmatpush1.msra.mxu0 %v1191
  %1241 = vmatprep.subr.mxu0 0.0
  %1242 = vmatpush1.msra.mxu0 %v1192
  %1243 = vmatprep.subr.mxu0 0.0
  %1244 = vmatpush1.msra.mxu0 %v1193
  %1245 = vmatprep.subr.mxu0 0.0
  %1246 = vmatpush1.msra.mxu0 %v1194
  %1247 = vmatprep.subr.mxu0 0.0
  %1248 = vmatpush1.msra.mxu0 %v1195
  %1249 = vmatprep.subr.mxu0 0.0
  %1250 = vmatpush1.msra.mxu0 %v1196
  %1251 = vmatprep.subr.mxu0 0.0
  %1252 = vmatpush1.msra.mxu0 %v1197
  %1253 = vmatprep.subr.mxu0 0.0
  %1254 = vmatpush1.msra.mxu0 %v1198
  %1255 = vmatprep.subr.mxu0 0.0
  %1256 = vmatpush1.msra.mxu0 %v1199
  %1257 = vmatprep.subr.mxu0 0.0
  %1258 = vmatpush1.msra.mxu0 %v1200
  %1259 = vmatprep.subr.mxu0 0.0
  %1260 = vmatpush1.msra.mxu0 %v1201
  %1261 = vmatprep.subr.mxu0 0.0
  %1262 = vmatpush1.msra.mxu0 %v1202
  %1263 = vmatprep.subr.mxu0 0.0
  %1264 = vmatpush1.msra.mxu0 %v1203
  %1265 = vmatprep.subr.mxu0 0.0
  %1266 = vmatpush1.msra.mxu0 %v1204
  %1267 = vmatprep.subr.mxu0 0.0
  %1268 = vmatpush1.msra.mxu0 %v1205
  %1269 = vmatprep.subr.mxu0 0.0
  %1270 = vmatpush1.msra.mxu0 %v1206
  %1271 = vmatprep.mubr.f32.mxu0 %v1173
  %1272 = vmatmul.mubr.f32.gmra.mrb[0].mxu0 %v1172
  %v1273 = vpop.f32.mrb[0].mxu0
  %v1274 = vadd.f32 0.0, %v1273
  %v1275 = vpop.f32.mrb[0].mxu0
  %1276 = vdwg.mxu0
  %v1277 = vadd.f32 %v861, %v1274
  %v1278 = vld [vmem:[%s0 + $0x6] sm:$0x3]
  %v1279 = vunpack.c.l.bf16 %v1278
  %s1280 = scalar_lea.vmem %s1, 12
  %v1281 = vld [vmem:[%s1280] ss:$2 sm:$0x3]
  %v1282 = vsub.f32 0.0, %v1279
  %v1283 = vmax.f32 %v1282, 0.0
  %v1284 = vsub.f32 0.0, %v1283
  %v1286 = vlaneseq
  %v1287 = vshrl.u32 %v1286, 7
  %v1288 = vsub.s32 0, %v1287
  %v1289 = vrot.slane %v1281, %v1288
  %v1290 = vlaneseq
  %v1291 = vshrl.u32 %v1290, 7
  %v1292 = vsub.s32 1, %v1291
  %v1293 = vrot.slane %v1281, %v1292
  %v1294 = vcombine.low %v1289, %v1293
  %v1296 = vunpack.c.l.s4 1983009808
  %v1297 = vunpack.c.0.s8 %v1296
  %v1298 = vlaneseq
  %v1299 = vshrl.u32 %v1298, 7
  %v1300 = vsub.s32 %v1297, %v1299
  %v1301 = vrot.slane %v1294, %v1300
  %v1303 = vmul.f32 %v1284, %v1301
  %v1304 = vadd.f32 %v1279, %v1303
  %s1305 = scalar_lea.vmem %s1, 13
  %v1306 = vld [vmem:[%s1305] ss:$2 sm:$0x3]
  %v1308 = vlaneseq
  %v1309 = vshrl.u32 %v1308, 7
  %v1310 = vsub.s32 0, %v1309
  %v1311 = vrot.slane %v1306, %v1310
  %v1312 = vlaneseq
  %v1313 = vshrl.u32 %v1312, 7
  %v1314 = vsub.s32 1, %v1313
  %v1315 = vrot.slane %v1306, %v1314
  %v1316 = vcombine.low %v1311, %v1315
  %v1318 = vunpack.c.l.s4 1983009808
  %v1319 = vunpack.c.0.s8 %v1318
  %v1320 = vlaneseq
  %v1321 = vshrl.u32 %v1320, 7
  %v1322 = vsub.s32 %v1319, %v1321
  %v1323 = vrot.slane %v1316, %v1322
  %v1325 = vadd.f32 %v1304, %v1323
  %v1328 = vunpack.c.l.s4 1983009808
  %v1329 = vunpack.c.0.s8 %v1328
  %v1330 = vlaneseq
  %v1331 = vshrl.u32 %v1330, 7
  %v1332 = vsub.s32 %v1329, %v1331
  %v1333 = vrot.slane %v1325, %v1332
  %v1334 = vcombine.high %v1333, %v1333
  %v1337 = vpack.c.bf16 %v1333, %v1333
  %v1338 = vpack.c.bf16 %v1334, %v1334
  %s1339 = scalar_lea.vmem %s3, 768
  %v1340 = vld [vmem:[%s1339] sm:$0xff]
  %v1341 = vld [vmem:[%s1339 + $0x8] sm:$0xff]
  %v1342 = vld [vmem:[%s1339 + $0x10] sm:$0xff]
  %v1343 = vld [vmem:[%s1339 + $0x18] sm:$0xff]
  %v1344 = vld [vmem:[%s1339 + $0x20] sm:$0xff]
  %v1345 = vld [vmem:[%s1339 + $0x28] sm:$0xff]
  %v1346 = vld [vmem:[%s1339 + $0x30] sm:$0xff]
  %v1347 = vld [vmem:[%s1339 + $0x38] sm:$0xff]
  %v1348 = vld [vmem:[%s1339 + $0x40] sm:$0xff]
  %v1349 = vld [vmem:[%s1339 + $0x48] sm:$0xff]
  %v1350 = vld [vmem:[%s1339 + $0x50] sm:$0xff]
  %v1351 = vld [vmem:[%s1339 + $0x58] sm:$0xff]
  %v1352 = vld [vmem:[%s1339 + $0x60] sm:$0xff]
  %v1353 = vld [vmem:[%s1339 + $0x68] sm:$0xff]
  %v1354 = vld [vmem:[%s1339 + $0x70] sm:$0xff]
  %v1355 = vld [vmem:[%s1339 + $0x78] sm:$0xff]
  %v1356 = vld [vmem:[%s1339 + $0x80] sm:$0xff]
  %v1357 = vld [vmem:[%s1339 + $0x88] sm:$0xff]
  %v1358 = vld [vmem:[%s1339 + $0x90] sm:$0xff]
  %v1359 = vld [vmem:[%s1339 + $0x98] sm:$0xff]
  %v1360 = vld [vmem:[%s1339 + $0xa0] sm:$0xff]
  %v1361 = vld [vmem:[%s1339 + $0xa8] sm:$0xff]
  %v1362 = vld [vmem:[%s1339 + $0xb0] sm:$0xff]
  %v1363 = vld [vmem:[%s1339 + $0xb8] sm:$0xff]
  %v1364 = vld [vmem:[%s1339 + $0xc0] sm:$0xff]
  %v1365 = vld [vmem:[%s1339 + $0xc8] sm:$0xff]
  %v1366 = vld [vmem:[%s1339 + $0xd0] sm:$0xff]
  %v1367 = vld [vmem:[%s1339 + $0xd8] sm:$0xff]
  %v1368 = vld [vmem:[%s1339 + $0xe0] sm:$0xff]
  %v1369 = vld [vmem:[%s1339 + $0xe8] sm:$0xff]
  %v1370 = vld [vmem:[%s1339 + $0xf0] sm:$0xff]
  %v1371 = vld [vmem:[%s1339 + $0xf8] sm:$0xff]
  %s1372 = scalar_lea.vmem %s2, 3
  %v1373 = vld [vmem:[%s1372] ss:$4 sm:$0x3]
  %v1375 = vlaneseq
  %v1376 = vshrl.u32 %v1375, 7
  %v1377 = vsub.s32 0, %v1376
  %v1378 = vrot.slane %v1373, %v1377
  %v1379 = vlaneseq
  %v1380 = vshrl.u32 %v1379, 7
  %v1381 = vsub.s32 1, %v1380
  %v1382 = vrot.slane %v1373, %v1381
  %v1417 = vunpack.c.l.b16 %v1340
  %v1418 = vunpack.c.h.b16 %v1340
  %v1419 = vunpack.c.l.b16 %v1341
  %v1420 = vunpack.c.h.b16 %v1341
  %v1421 = vunpack.c.l.b16 %v1342
  %v1422 = vunpack.c.h.b16 %v1342
  %v1423 = vunpack.c.l.b16 %v1343
  %v1424 = vunpack.c.h.b16 %v1343
  %v1425 = vunpack.c.l.b16 %v1344
  %v1426 = vunpack.c.h.b16 %v1344
  %v1427 = vunpack.c.l.b16 %v1345
  %v1428 = vunpack.c.h.b16 %v1345
  %v1429 = vunpack.c.l.b16 %v1346
  %v1430 = vunpack.c.h.b16 %v1346
  %v1431 = vunpack.c.l.b16 %v1347
  %v1432 = vunpack.c.h.b16 %v1347
  %v1433 = vunpack.c.l.b16 %v1348
  %v1434 = vunpack.c.h.b16 %v1348
  %v1435 = vunpack.c.l.b16 %v1349
  %v1436 = vunpack.c.h.b16 %v1349
  %v1437 = vunpack.c.l.b16 %v1350
  %v1438 = vunpack.c.h.b16 %v1350
  %v1439 = vunpack.c.l.b16 %v1351
  %v1440 = vunpack.c.h.b16 %v1351
  %v1441 = vunpack.c.l.b16 %v1352
  %v1442 = vunpack.c.h.b16 %v1352
  %v1443 = vunpack.c.l.b16 %v1353
  %v1444 = vunpack.c.h.b16 %v1353
  %v1445 = vunpack.c.l.b16 %v1354
  %v1446 = vunpack.c.h.b16 %v1354
  %v1447 = vunpack.c.l.b16 %v1355
  %v1448 = vunpack.c.h.b16 %v1355
  %v1449 = vunpack.c.l.b16 %v1356
  %v1450 = vunpack.c.h.b16 %v1356
  %v1451 = vunpack.c.l.b16 %v1357
  %v1452 = vunpack.c.h.b16 %v1357
  %v1453 = vunpack.c.l.b16 %v1358
  %v1454 = vunpack.c.h.b16 %v1358
  %v1455 = vunpack.c.l.b16 %v1359
  %v1456 = vunpack.c.h.b16 %v1359
  %v1457 = vunpack.c.l.b16 %v1360
  %v1458 = vunpack.c.h.b16 %v1360
  %v1459 = vunpack.c.l.b16 %v1361
  %v1460 = vunpack.c.h.b16 %v1361
  %v1461 = vunpack.c.l.b16 %v1362
  %v1462 = vunpack.c.h.b16 %v1362
  %v1463 = vunpack.c.l.b16 %v1363
  %v1464 = vunpack.c.h.b16 %v1363
  %v1465 = vunpack.c.l.b16 %v1364
  %v1466 = vunpack.c.h.b16 %v1364
  %v1467 = vunpack.c.l.b16 %v1365
  %v1468 = vunpack.c.h.b16 %v1365
  %v1469 = vunpack.c.l.b16 %v1366
  %v1470 = vunpack.c.h.b16 %v1366
  %v1471 = vunpack.c.l.b16 %v1367
  %v1472 = vunpack.c.h.b16 %v1367
  %v1473 = vunpack.c.l.b16 %v1368
  %v1474 = vunpack.c.h.b16 %v1368
  %v1475 = vunpack.c.l.b16 %v1369
  %v1476 = vunpack.c.h.b16 %v1369
  %v1477 = vunpack.c.l.b16 %v1370
  %v1478 = vunpack.c.h.b16 %v1370
  %v1479 = vunpack.c.l.b16 %v1371
  %v1480 = vunpack.c.h.b16 %v1371
  %v1481 = vpack.c.b16 %v1419, %v1417
  %v1482 = vpack.c.b16 %v1420, %v1418
  %v1483 = vpack.c.b16 %v1423, %v1421
  %v1484 = vpack.c.b16 %v1424, %v1422
  %v1485 = vpack.c.b16 %v1427, %v1425
  %v1486 = vpack.c.b16 %v1428, %v1426
  %v1487 = vpack.c.b16 %v1431, %v1429
  %v1488 = vpack.c.b16 %v1432, %v1430
  %v1489 = vpack.c.b16 %v1435, %v1433
  %v1490 = vpack.c.b16 %v1436, %v1434
  %v1491 = vpack.c.b16 %v1439, %v1437
  %v1492 = vpack.c.b16 %v1440, %v1438
  %v1493 = vpack.c.b16 %v1443, %v1441
  %v1494 = vpack.c.b16 %v1444, %v1442
  %v1495 = vpack.c.b16 %v1447, %v1445
  %v1496 = vpack.c.b16 %v1448, %v1446
  %v1497 = vpack.c.b16 %v1451, %v1449
  %v1498 = vpack.c.b16 %v1452, %v1450
  %v1499 = vpack.c.b16 %v1455, %v1453
  %v1500 = vpack.c.b16 %v1456, %v1454
  %v1501 = vpack.c.b16 %v1459, %v1457
  %v1502 = vpack.c.b16 %v1460, %v1458
  %v1503 = vpack.c.b16 %v1463, %v1461
  %v1504 = vpack.c.b16 %v1464, %v1462
  %v1505 = vpack.c.b16 %v1467, %v1465
  %v1506 = vpack.c.b16 %v1468, %v1466
  %v1507 = vpack.c.b16 %v1471, %v1469
  %v1508 = vpack.c.b16 %v1472, %v1470
  %v1509 = vpack.c.b16 %v1475, %v1473
  %v1510 = vpack.c.b16 %v1476, %v1474
  %v1511 = vpack.c.b16 %v1479, %v1477
  %v1512 = vpack.c.b16 %v1480, %v1478
  %1545 = vmatprep.subr.bf16.mxu0 %v1482
  %1546 = vmatpush1.bf16.msra.mxu0 %v1481
  %1547 = vmatprep.subr.bf16.mxu0 %v1484
  %1548 = vmatpush1.bf16.msra.mxu0 %v1483
  %1549 = vmatprep.subr.bf16.mxu0 %v1486
  %1550 = vmatpush1.bf16.msra.mxu0 %v1485
  %1551 = vmatprep.subr.bf16.mxu0 %v1488
  %1552 = vmatpush1.bf16.msra.mxu0 %v1487
  %1553 = vmatprep.subr.bf16.mxu0 %v1490
  %1554 = vmatpush1.bf16.msra.mxu0 %v1489
  %1555 = vmatprep.subr.bf16.mxu0 %v1492
  %1556 = vmatpush1.bf16.msra.mxu0 %v1491
  %1557 = vmatprep.subr.bf16.mxu0 %v1494
  %1558 = vmatpush1.bf16.msra.mxu0 %v1493
  %1559 = vmatprep.subr.bf16.mxu0 %v1496
  %1560 = vmatpush1.bf16.msra.mxu0 %v1495
  %1561 = vmatprep.subr.bf16.mxu0 %v1498
  %1562 = vmatpush1.bf16.msra.mxu0 %v1497
  %1563 = vmatprep.subr.bf16.mxu0 %v1500
  %1564 = vmatpush1.bf16.msra.mxu0 %v1499
  %1565 = vmatprep.subr.bf16.mxu0 %v1502
  %1566 = vmatpush1.bf16.msra.mxu0 %v1501
  %1567 = vmatprep.subr.bf16.mxu0 %v1504
  %1568 = vmatpush1.bf16.msra.mxu0 %v1503
  %1569 = vmatprep.subr.bf16.mxu0 %v1506
  %1570 = vmatpush1.bf16.msra.mxu0 %v1505
  %1571 = vmatprep.subr.bf16.mxu0 %v1508
  %1572 = vmatpush1.bf16.msra.mxu0 %v1507
  %1573 = vmatprep.subr.bf16.mxu0 %v1510
  %1574 = vmatpush1.bf16.msra.mxu0 %v1509
  %1575 = vmatprep.subr.bf16.mxu0 %v1512
  %1576 = vmatpush1.bf16.msra.mxu0 %v1511
  %1577 = vmatprep.mubr.bf16.mxu0 %v1338
  %1578 = vmatmul.mubr.bf16.gmra.mrb[0].mxu0 %v1337
  %v1579 = vpop.f32.mrb[0].mxu0
  %v1580 = vadd.f32 %v1378, %v1579
  %v1581 = vpop.f32.mrb[0].mxu0
  %v1582 = vadd.f32 %v1382, %v1581
  %v1583 = vpop.f32.mrb[0].mxu0
  %v1584 = vpop.f32.mrb[0].mxu0
  %1585 = vdwg.mxu0
  %v1586 = vmax.f32 %v1580, 0.0
  %v1587 = vmax.f32 %v1582, 0.0
  %s1588 = scalar_lea.vmem %s4, 768
  %v1589 = vld [vmem:[%s1588] sm:$0xff]
  %v1590 = vld [vmem:[%s1588 + $0x8] sm:$0xff]
  %v1591 = vld [vmem:[%s1588 + $0x10] sm:$0xff]
  %v1592 = vld [vmem:[%s1588 + $0x18] sm:$0xff]
  %v1593 = vld [vmem:[%s1588 + $0x20] sm:$0xff]
  %v1594 = vld [vmem:[%s1588 + $0x28] sm:$0xff]
  %v1595 = vld [vmem:[%s1588 + $0x30] sm:$0xff]
  %v1596 = vld [vmem:[%s1588 + $0x38] sm:$0xff]
  %v1597 = vld [vmem:[%s1588 + $0x40] sm:$0xff]
  %v1598 = vld [vmem:[%s1588 + $0x48] sm:$0xff]
  %v1599 = vld [vmem:[%s1588 + $0x50] sm:$0xff]
  %v1600 = vld [vmem:[%s1588 + $0x58] sm:$0xff]
  %v1601 = vld [vmem:[%s1588 + $0x60] sm:$0xff]
  %v1602 = vld [vmem:[%s1588 + $0x68] sm:$0xff]
  %v1603 = vld [vmem:[%s1588 + $0x70] sm:$0xff]
  %v1604 = vld [vmem:[%s1588 + $0x78] sm:$0xff]
  %v1605 = vld [vmem:[%s1588 + $0x80] sm:$0xff]
  %v1606 = vld [vmem:[%s1588 + $0x88] sm:$0xff]
  %v1607 = vld [vmem:[%s1588 + $0x90] sm:$0xff]
  %v1608 = vld [vmem:[%s1588 + $0x98] sm:$0xff]
  %v1609 = vld [vmem:[%s1588 + $0xa0] sm:$0xff]
  %v1610 = vld [vmem:[%s1588 + $0xa8] sm:$0xff]
  %v1611 = vld [vmem:[%s1588 + $0xb0] sm:$0xff]
  %v1612 = vld [vmem:[%s1588 + $0xb8] sm:$0xff]
  %v1613 = vld [vmem:[%s1588 + $0xc0] sm:$0xff]
  %v1614 = vld [vmem:[%s1588 + $0xc8] sm:$0xff]
  %v1615 = vld [vmem:[%s1588 + $0xd0] sm:$0xff]
  %v1616 = vld [vmem:[%s1588 + $0xd8] sm:$0xff]
  %v1617 = vld [vmem:[%s1588 + $0xe0] sm:$0xff]
  %v1618 = vld [vmem:[%s1588 + $0xe8] sm:$0xff]
  %v1619 = vld [vmem:[%s1588 + $0xf0] sm:$0xff]
  %v1620 = vld [vmem:[%s1588 + $0xf8] sm:$0xff]
  %1621 = vmatprep.subr.mxu0 0.0
  %1622 = vmatpush1.msra.mxu0 %v1589
  %1623 = vmatprep.subr.mxu0 0.0
  %1624 = vmatpush1.msra.mxu0 %v1590
  %1625 = vmatprep.subr.mxu0 0.0
  %1626 = vmatpush1.msra.mxu0 %v1591
  %1627 = vmatprep.subr.mxu0 0.0
  %1628 = vmatpush1.msra.mxu0 %v1592
  %1629 = vmatprep.subr.mxu0 0.0
  %1630 = vmatpush1.msra.mxu0 %v1593
  %1631 = vmatprep.subr.mxu0 0.0
  %1632 = vmatpush1.msra.mxu0 %v1594
  %1633 = vmatprep.subr.mxu0 0.0
  %1634 = vmatpush1.msra.mxu0 %v1595
  %1635 = vmatprep.subr.mxu0 0.0
  %1636 = vmatpush1.msra.mxu0 %v1596
  %1637 = vmatprep.subr.mxu0 0.0
  %1638 = vmatpush1.msra.mxu0 %v1597
  %1639 = vmatprep.subr.mxu0 0.0
  %1640 = vmatpush1.msra.mxu0 %v1598
  %1641 = vmatprep.subr.mxu0 0.0
  %1642 = vmatpush1.msra.mxu0 %v1599
  %1643 = vmatprep.subr.mxu0 0.0
  %1644 = vmatpush1.msra.mxu0 %v1600
  %1645 = vmatprep.subr.mxu0 0.0
  %1646 = vmatpush1.msra.mxu0 %v1601
  %1647 = vmatprep.subr.mxu0 0.0
  %1648 = vmatpush1.msra.mxu0 %v1602
  %1649 = vmatprep.subr.mxu0 0.0
  %1650 = vmatpush1.msra.mxu0 %v1603
  %1651 = vmatprep.subr.mxu0 0.0
  %1652 = vmatpush1.msra.mxu0 %v1604
  %1653 = vmatprep.subr.mxu0 0.0
  %1654 = vmatpush1.msra.mxu0 %v1605
  %1655 = vmatprep.subr.mxu0 0.0
  %1656 = vmatpush1.msra.mxu0 %v1606
  %1657 = vmatprep.subr.mxu0 0.0
  %1658 = vmatpush1.msra.mxu0 %v1607
  %1659 = vmatprep.subr.mxu0 0.0
  %1660 = vmatpush1.msra.mxu0 %v1608
  %1661 = vmatprep.subr.mxu0 0.0
  %1662 = vmatpush1.msra.mxu0 %v1609
  %1663 = vmatprep.subr.mxu0 0.0
  %1664 = vmatpush1.msra.mxu0 %v1610
  %1665 = vmatprep.subr.mxu0 0.0
  %1666 = vmatpush1.msra.mxu0 %v1611
  %1667 = vmatprep.subr.mxu0 0.0
  %1668 = vmatpush1.msra.mxu0 %v1612
  %1669 = vmatprep.subr.mxu0 0.0
  %1670 = vmatpush1.msra.mxu0 %v1613
  %1671 = vmatprep.subr.mxu0 0.0
  %1672 = vmatpush1.msra.mxu0 %v1614
  %1673 = vmatprep.subr.mxu0 0.0
  %1674 = vmatpush1.msra.mxu0 %v1615
  %1675 = vmatprep.subr.mxu0 0.0
  %1676 = vmatpush1.msra.mxu0 %v1616
  %1677 = vmatprep.subr.mxu0 0.0
  %1678 = vmatpush1.msra.mxu0 %v1617
  %1679 = vmatprep.subr.mxu0 0.0
  %1680 = vmatpush1.msra.mxu0 %v1618
  %1681 = vmatprep.subr.mxu0 0.0
  %1682 = vmatpush1.msra.mxu0 %v1619
  %1683 = vmatprep.subr.mxu0 0.0
  %1684 = vmatpush1.msra.mxu0 %v1620
  %1685 = vmatprep.mubr.f32.mxu0 %v1587
  %1686 = vmatmul.mubr.f32.gmra.mrb[0].mxu0 %v1586
  %v1687 = vpop.f32.mrb[0].mxu0
  %v1688 = vadd.f32 0.0, %v1687
  %v1689 = vpop.f32.mrb[0].mxu0
  %1690 = vdwg.mxu0
  %v1691 = vadd.f32 %v1277, %v1688
  %v1692 = vld [vmem:[%s10] sm:$0x1]
  %v1693 = vsub.f32 0.0, %v1691
  %v1694 = vmax.f32 %v1693, 0.0
  %v1695 = vsub.f32 0.0, %v1694
  %v1697 = vlaneseq
  %v1698 = vshrl.u32 %v1697, 7
  %v1699 = vsub.s32 0, %v1698
  %v1700 = vrot.slane %v1692, %v1699
  %v1702 = vmul.f32 %v1695, %v1700
  %v1703 = vadd.f32 %v1691, %v1702
  %v1704 = vld [vmem:[%s0 + $0x8] sm:$0xff]
  %v1705 = vld [vmem:[%s0 + $0x10] sm:$0xff]
  %v1706 = vunpack.c.l.bf16 %v1704
  %v1707 = vunpack.c.h.bf16 %v1704
  %v1708 = vunpack.c.l.bf16 %v1705
  %v1709 = vunpack.c.h.bf16 %v1705
  %s1710 = scalar_lea.vmem %s1, 16
  %v1711 = vld [vmem:[%s1710] ss:$2 sm:$0xff]
  %s1712 = scalar_lea.vmem %s1, 32
  %v1713 = vld [vmem:[%s1712] ss:$2 sm:$0xff]
  %v1714 = vsub.f32 0.0, %v1706
  %v1715 = vsub.f32 0.0, %v1707
  %v1716 = vsub.f32 0.0, %v1708
  %v1717 = vsub.f32 0.0, %v1709
  %v1718 = vmax.f32 %v1714, 0.0
  %v1719 = vmax.f32 %v1715, 0.0
  %v1720 = vmax.f32 %v1716, 0.0
  %v1721 = vmax.f32 %v1717, 0.0
  %v1722 = vsub.f32 0.0, %v1718
  %v1723 = vsub.f32 0.0, %v1719
  %v1724 = vsub.f32 0.0, %v1720
  %v1725 = vsub.f32 0.0, %v1721
  %v1728 = vlaneseq
  %v1729 = vshrl.u32 %v1728, 7
  %v1730 = vsub.s32 0, %v1729
  %v1731 = vrot.slane %v1711, %v1730
  %v1732 = vlaneseq
  %v1733 = vshrl.u32 %v1732, 7
  %v1734 = vsub.s32 1, %v1733
  %v1735 = vrot.slane %v1711, %v1734
  %v1736 = vlaneseq
  %v1737 = vshrl.u32 %v1736, 7
  %v1738 = vsub.s32 2, %v1737
  %v1739 = vrot.slane %v1711, %v1738
  %v1740 = vlaneseq
  %v1741 = vshrl.u32 %v1740, 7
  %v1742 = vsub.s32 3, %v1741
  %v1743 = vrot.slane %v1711, %v1742
  %v1744 = vlaneseq
  %v1745 = vshrl.u32 %v1744, 7
  %v1746 = vsub.s32 4, %v1745
  %v1747 = vrot.slane %v1711, %v1746
  %v1748 = vlaneseq
  %v1749 = vshrl.u32 %v1748, 7
  %v1750 = vsub.s32 5, %v1749
  %v1751 = vrot.slane %v1711, %v1750
  %v1752 = vlaneseq
  %v1753 = vshrl.u32 %v1752, 7
  %v1754 = vsub.s32 6, %v1753
  %v1755 = vrot.slane %v1711, %v1754
  %v1756 = vlaneseq
  %v1757 = vshrl.u32 %v1756, 7
  %v1758 = vsub.s32 7, %v1757
  %v1759 = vrot.slane %v1711, %v1758
  %v1760 = vlaneseq
  %v1761 = vshrl.u32 %v1760, 7
  %v1762 = vsub.s32 0, %v1761
  %v1763 = vrot.slane %v1713, %v1762
  %v1764 = vlaneseq
  %v1765 = vshrl.u32 %v1764, 7
  %v1766 = vsub.s32 1, %v1765
  %v1767 = vrot.slane %v1713, %v1766
  %v1768 = vlaneseq
  %v1769 = vshrl.u32 %v1768, 7
  %v1770 = vsub.s32 2, %v1769
  %v1771 = vrot.slane %v1713, %v1770
  %v1772 = vlaneseq
  %v1773 = vshrl.u32 %v1772, 7
  %v1774 = vsub.s32 3, %v1773
  %v1775 = vrot.slane %v1713, %v1774
  %v1776 = vlaneseq
  %v1777 = vshrl.u32 %v1776, 7
  %v1778 = vsub.s32 4, %v1777
  %v1779 = vrot.slane %v1713, %v1778
  %v1780 = vlaneseq
  %v1781 = vshrl.u32 %v1780, 7
  %v1782 = vsub.s32 5, %v1781
  %v1783 = vrot.slane %v1713, %v1782
  %v1784 = vlaneseq
  %v1785 = vshrl.u32 %v1784, 7
  %v1786 = vsub.s32 6, %v1785
  %v1787 = vrot.slane %v1713, %v1786
  %v1788 = vlaneseq
  %v1789 = vshrl.u32 %v1788, 7
  %v1790 = vsub.s32 7, %v1789
  %v1791 = vrot.slane %v1713, %v1790
  %v1792 = vcombine.low %v1731, %v1735
  %v1793 = vcombine.low %v1739, %v1743
  %v1795 = vunpack.c.l.s4 1983009808
  %v1796 = vunpack.c.0.s8 %v1795
  %v1797 = vlaneseq
  %v1798 = vshrl.u32 %v1797, 7
  %v1799 = vsub.s32 %v1796, %v1798
  %v1800 = vrot.slane %v1792, %v1799
  %v1802 = vunpack.c.l.s4 1983009808
  %v1803 = vunpack.c.0.s8 %v1802
  %v1804 = vlaneseq
  %v1805 = vshrl.u32 %v1804, 7
  %v1806 = vsub.s32 %v1803, %v1805
  %v1807 = vrot.slane %v1793, %v1806
  %v1808 = vcombine.low %v1800, %v1807
  %v1809 = vcombine.low %v1747, %v1751
  %v1810 = vcombine.low %v1755, %v1759
  %v1812 = vunpack.c.l.s4 1983009808
  %v1813 = vunpack.c.0.s8 %v1812
  %v1814 = vlaneseq
  %v1815 = vshrl.u32 %v1814, 7
  %v1816 = vsub.s32 %v1813, %v1815
  %v1817 = vrot.slane %v1809, %v1816
  %v1819 = vunpack.c.l.s4 1983009808
  %v1820 = vunpack.c.0.s8 %v1819
  %v1821 = vlaneseq
  %v1822 = vshrl.u32 %v1821, 7
  %v1823 = vsub.s32 %v1820, %v1822
  %v1824 = vrot.slane %v1810, %v1823
  %v1825 = vcombine.low %v1817, %v1824
  %v1826 = vcombine.low %v1763, %v1767
  %v1827 = vcombine.low %v1771, %v1775
  %v1829 = vunpack.c.l.s4 1983009808
  %v1830 = vunpack.c.0.s8 %v1829
  %v1831 = vlaneseq
  %v1832 = vshrl.u32 %v1831, 7
  %v1833 = vsub.s32 %v1830, %v1832
  %v1834 = vrot.slane %v1826, %v1833
  %v1836 = vunpack.c.l.s4 1983009808
  %v1837 = vunpack.c.0.s8 %v1836
  %v1838 = vlaneseq
  %v1839 = vshrl.u32 %v1838, 7
  %v1840 = vsub.s32 %v1837, %v1839
  %v1841 = vrot.slane %v1827, %v1840
  %v1842 = vcombine.low %v1834, %v1841
  %v1843 = vcombine.low %v1779, %v1783
  %v1844 = vcombine.low %v1787, %v1791
  %v1846 = vunpack.c.l.s4 1983009808
  %v1847 = vunpack.c.0.s8 %v1846
  %v1848 = vlaneseq
  %v1849 = vshrl.u32 %v1848, 7
  %v1850 = vsub.s32 %v1847, %v1849
  %v1851 = vrot.slane %v1843, %v1850
  %v1853 = vunpack.c.l.s4 1983009808
  %v1854 = vunpack.c.0.s8 %v1853
  %v1855 = vlaneseq
  %v1856 = vshrl.u32 %v1855, 7
  %v1857 = vsub.s32 %v1854, %v1856
  %v1858 = vrot.slane %v1844, %v1857
  %v1859 = vcombine.low %v1851, %v1858
  %v1864 = vmul.f32 %v1722, %v1808
  %v1865 = vmul.f32 %v1723, %v1825
  %v1866 = vmul.f32 %v1724, %v1842
  %v1867 = vmul.f32 %v1725, %v1859
  %v1868 = vadd.f32 %v1706, %v1864
  %v1869 = vadd.f32 %v1707, %v1865
  %v1870 = vadd.f32 %v1708, %v1866
  %v1871 = vadd.f32 %v1709, %v1867
  %s1872 = scalar_lea.vmem %s1, 17
  %v1873 = vld [vmem:[%s1872] ss:$2 sm:$0xff]
  %s1874 = scalar_lea.vmem %s1, 33
  %v1875 = vld [vmem:[%s1874] ss:$2 sm:$0xff]
  %v1878 = vlaneseq
  %v1879 = vshrl.u32 %v1878, 7
  %v1880 = vsub.s32 0, %v1879
  %v1881 = vrot.slane %v1873, %v1880
  %v1882 = vlaneseq
  %v1883 = vshrl.u32 %v1882, 7
  %v1884 = vsub.s32 1, %v1883
  %v1885 = vrot.slane %v1873, %v1884
  %v1886 = vlaneseq
  %v1887 = vshrl.u32 %v1886, 7
  %v1888 = vsub.s32 2, %v1887
  %v1889 = vrot.slane %v1873, %v1888
  %v1890 = vlaneseq
  %v1891 = vshrl.u32 %v1890, 7
  %v1892 = vsub.s32 3, %v1891
  %v1893 = vrot.slane %v1873, %v1892
  %v1894 = vlaneseq
  %v1895 = vshrl.u32 %v1894, 7
  %v1896 = vsub.s32 4, %v1895
  %v1897 = vrot.slane %v1873, %v1896
  %v1898 = vlaneseq
  %v1899 = vshrl.u32 %v1898, 7
  %v1900 = vsub.s32 5, %v1899
  %v1901 = vrot.slane %v1873, %v1900
  %v1902 = vlaneseq
  %v1903 = vshrl.u32 %v1902, 7
  %v1904 = vsub.s32 6, %v1903
  %v1905 = vrot.slane %v1873, %v1904
  %v1906 = vlaneseq
  %v1907 = vshrl.u32 %v1906, 7
  %v1908 = vsub.s32 7, %v1907
  %v1909 = vrot.slane %v1873, %v1908
  %v1910 = vlaneseq
  %v1911 = vshrl.u32 %v1910, 7
  %v1912 = vsub.s32 0, %v1911
  %v1913 = vrot.slane %v1875, %v1912
  %v1914 = vlaneseq
  %v1915 = vshrl.u32 %v1914, 7
  %v1916 = vsub.s32 1, %v1915
  %v1917 = vrot.slane %v1875, %v1916
  %v1918 = vlaneseq
  %v1919 = vshrl.u32 %v1918, 7
  %v1920 = vsub.s32 2, %v1919
  %v1921 = vrot.slane %v1875, %v1920
  %v1922 = vlaneseq
  %v1923 = vshrl.u32 %v1922, 7
  %v1924 = vsub.s32 3, %v1923
  %v1925 = vrot.slane %v1875, %v1924
  %v1926 = vlaneseq
  %v1927 = vshrl.u32 %v1926, 7
  %v1928 = vsub.s32 4, %v1927
  %v1929 = vrot.slane %v1875, %v1928
  %v1930 = vlaneseq
  %v1931 = vshrl.u32 %v1930, 7
  %v1932 = vsub.s32 5, %v1931
  %v1933 = vrot.slane %v1875, %v1932
  %v1934 = vlaneseq
  %v1935 = vshrl.u32 %v1934, 7
  %v1936 = vsub.s32 6, %v1935
  %v1937 = vrot.slane %v1875, %v1936
  %v1938 = vlaneseq
  %v1939 = vshrl.u32 %v1938, 7
  %v1940 = vsub.s32 7, %v1939
  %v1941 = vrot.slane %v1875, %v1940
  %v1942 = vcombine.low %v1881, %v1885
  %v1943 = vcombine.low %v1889, %v1893
  %v1945 = vunpack.c.l.s4 1983009808
  %v1946 = vunpack.c.0.s8 %v1945
  %v1947 = vlaneseq
  %v1948 = vshrl.u32 %v1947, 7
  %v1949 = vsub.s32 %v1946, %v1948
  %v1950 = vrot.slane %v1942, %v1949
  %v1952 = vunpack.c.l.s4 1983009808
  %v1953 = vunpack.c.0.s8 %v1952
  %v1954 = vlaneseq
  %v1955 = vshrl.u32 %v1954, 7
  %v1956 = vsub.s32 %v1953, %v1955
  %v1957 = vrot.slane %v1943, %v1956
  %v1958 = vcombine.low %v1950, %v1957
  %v1959 = vcombine.low %v1897, %v1901
  %v1960 = vcombine.low %v1905, %v1909
  %v1962 = vunpack.c.l.s4 1983009808
  %v1963 = vunpack.c.0.s8 %v1962
  %v1964 = vlaneseq
  %v1965 = vshrl.u32 %v1964, 7
  %v1966 = vsub.s32 %v1963, %v1965
  %v1967 = vrot.slane %v1959, %v1966
  %v1969 = vunpack.c.l.s4 1983009808
  %v1970 = vunpack.c.0.s8 %v1969
  %v1971 = vlaneseq
  %v1972 = vshrl.u32 %v1971, 7
  %v1973 = vsub.s32 %v1970, %v1972
  %v1974 = vrot.slane %v1960, %v1973
  %v1975 = vcombine.low %v1967, %v1974
  %v1976 = vcombine.low %v1913, %v1917
  %v1977 = vcombine.low %v1921, %v1925
  %v1979 = vunpack.c.l.s4 1983009808
  %v1980 = vunpack.c.0.s8 %v1979
  %v1981 = vlaneseq
  %v1982 = vshrl.u32 %v1981, 7
  %v1983 = vsub.s32 %v1980, %v1982
  %v1984 = vrot.slane %v1976, %v1983
  %v1986 = vunpack.c.l.s4 1983009808
  %v1987 = vunpack.c.0.s8 %v1986
  %v1988 = vlaneseq
  %v1989 = vshrl.u32 %v1988, 7
  %v1990 = vsub.s32 %v1987, %v1989
  %v1991 = vrot.slane %v1977, %v1990
  %v1992 = vcombine.low %v1984, %v1991
  %v1993 = vcombine.low %v1929, %v1933
  %v1994 = vcombine.low %v1937, %v1941
  %v1996 = vunpack.c.l.s4 1983009808
  %v1997 = vunpack.c.0.s8 %v1996
  %v1998 = vlaneseq
  %v1999 = vshrl.u32 %v1998, 7
  %v2000 = vsub.s32 %v1997, %v1999
  %v2001 = vrot.slane %v1993, %v2000
  %v2003 = vunpack.c.l.s4 1983009808
  %v2004 = vunpack.c.0.s8 %v2003
  %v2005 = vlaneseq
  %v2006 = vshrl.u32 %v2005, 7
  %v2007 = vsub.s32 %v2004, %v2006
  %v2008 = vrot.slane %v1994, %v2007
  %v2009 = vcombine.low %v2001, %v2008
  %v2014 = vadd.f32 %v1868, %v1958
  %v2015 = vadd.f32 %v1869, %v1975
  %v2016 = vadd.f32 %v1870, %v1992
  %v2017 = vadd.f32 %v1871, %v2009
  %v2022 = vcombine.high %v2014, %v2014
  %v2024 = vunpack.c.l.s4 1983009808
  %v2025 = vunpack.c.0.s8 %v2024
  %v2026 = vlaneseq
  %v2027 = vshrl.u32 %v2026, 7
  %v2028 = vsub.s32 %v2025, %v2027
  %v2029 = vrot.slane %v2014, %v2028
  %v2031 = vunpack.c.l.s4 1983009808
  %v2032 = vunpack.c.0.s8 %v2031
  %v2033 = vlaneseq
  %v2034 = vshrl.u32 %v2033, 7
  %v2035 = vsub.s32 %v2032, %v2034
  %v2036 = vrot.slane %v2022, %v2035
  %v2037 = vcombine.high %v2029, %v2029
  %v2038 = vcombine.high %v2036, %v2036
  %v2039 = vcombine.high %v2015, %v2015
  %v2041 = vunpack.c.l.s4 1983009808
  %v2042 = vunpack.c.0.s8 %v2041
  %v2043 = vlaneseq
  %v2044 = vshrl.u32 %v2043, 7
  %v2045 = vsub.s32 %v2042, %v2044
  %v2046 = vrot.slane %v2015, %v2045
  %v2048 = vunpack.c.l.s4 1983009808
  %v2049 = vunpack.c.0.s8 %v2048
  %v2050 = vlaneseq
  %v2051 = vshrl.u32 %v2050, 7
  %v2052 = vsub.s32 %v2049, %v2051
  %v2053 = vrot.slane %v2039, %v2052
  %v2054 = vcombine.high %v2046, %v2046
  %v2055 = vcombine.high %v2053, %v2053
  %v2056 = vcombine.high %v2016, %v2016
  %v2058 = vunpack.c.l.s4 1983009808
  %v2059 = vunpack.c.0.s8 %v2058
  %v2060 = vlaneseq
  %v2061 = vshrl.u32 %v2060, 7
  %v2062 = vsub.s32 %v2059, %v2061
  %v2063 = vrot.slane %v2016, %v2062
  %v2065 = vunpack.c.l.s4 1983009808
  %v2066 = vunpack.c.0.s8 %v2065
  %v2067 = vlaneseq
  %v2068 = vshrl.u32 %v2067, 7
  %v2069 = vsub.s32 %v2066, %v2068
  %v2070 = vrot.slane %v2056, %v2069
  %v2071 = vcombine.high %v2063, %v2063
  %v2072 = vcombine.high %v2070, %v2070
  %v2073 = vcombine.high %v2017, %v2017
  %v2075 = vunpack.c.l.s4 1983009808
  %v2076 = vunpack.c.0.s8 %v2075
  %v2077 = vlaneseq
  %v2078 = vshrl.u32 %v2077, 7
  %v2079 = vsub.s32 %v2076, %v2078
  %v2080 = vrot.slane %v2017, %v2079
  %v2082 = vunpack.c.l.s4 1983009808
  %v2083 = vunpack.c.0.s8 %v2082
  %v2084 = vlaneseq
  %v2085 = vshrl.u32 %v2084, 7
  %v2086 = vsub.s32 %v2083, %v2085
  %v2087 = vrot.slane %v2073, %v2086
  %v2088 = vcombine.high %v2080, %v2080
  %v2089 = vcombine.high %v2087, %v2087
  %v2106 = vpack.c.bf16 %v2029, %v2029
  %v2107 = vpack.c.bf16 %v2037, %v2037
  %v2108 = vpack.c.bf16 %v2036, %v2036
  %v2109 = vpack.c.bf16 %v2038, %v2038
  %v2110 = vpack.c.bf16 %v2046, %v2046
  %v2111 = vpack.c.bf16 %v2054, %v2054
  %v2112 = vpack.c.bf16 %v2053, %v2053
  %v2113 = vpack.c.bf16 %v2055, %v2055
  %v2114 = vpack.c.bf16 %v2063, %v2063
  %v2115 = vpack.c.bf16 %v2071, %v2071
  %v2116 = vpack.c.bf16 %v2070, %v2070
  %v2117 = vpack.c.bf16 %v2072, %v2072
  %v2118 = vpack.c.bf16 %v2080, %v2080
  %v2119 = vpack.c.bf16 %v2088, %v2088
  %v2120 = vpack.c.bf16 %v2087, %v2087
  %v2121 = vpack.c.bf16 %v2089, %v2089
  %v2122 = vld [vmem:[%s5] sm:$0xf]
  %v2123 = vld [vmem:[%s5 + $0x4] sm:$0xf]
  %v2124 = vld [vmem:[%s5 + $0x8] sm:$0xf]
  %v2125 = vld [vmem:[%s5 + $0xc] sm:$0xf]
  %v2126 = vld [vmem:[%s5 + $0x10] sm:$0xf]
  %v2127 = vld [vmem:[%s5 + $0x14] sm:$0xf]
  %v2128 = vld [vmem:[%s5 + $0x18] sm:$0xf]
  %v2129 = vld [vmem:[%s5 + $0x1c] sm:$0xf]
  %v2130 = vld [vmem:[%s5 + $0x20] sm:$0xf]
  %v2131 = vld [vmem:[%s5 + $0x24] sm:$0xf]
  %v2132 = vld [vmem:[%s5 + $0x28] sm:$0xf]
  %v2133 = vld [vmem:[%s5 + $0x2c] sm:$0xf]
  %v2134 = vld [vmem:[%s5 + $0x30] sm:$0xf]
  %v2135 = vld [vmem:[%s5 + $0x34] sm:$0xf]
  %v2136 = vld [vmem:[%s5 + $0x38] sm:$0xf]
  %v2137 = vld [vmem:[%s5 + $0x3c] sm:$0xf]
  %v2138 = vld [vmem:[%s5 + $0x40] sm:$0xf]
  %v2139 = vld [vmem:[%s5 + $0x44] sm:$0xf]
  %v2140 = vld [vmem:[%s5 + $0x48] sm:$0xf]
  %v2141 = vld [vmem:[%s5 + $0x4c] sm:$0xf]
  %v2142 = vld [vmem:[%s5 + $0x50] sm:$0xf]
  %v2143 = vld [vmem:[%s5 + $0x54] sm:$0xf]
  %v2144 = vld [vmem:[%s5 + $0x58] sm:$0xf]
  %v2145 = vld [vmem:[%s5 + $0x5c] sm:$0xf]
  %v2146 = vld [vmem:[%s5 + $0x60] sm:$0xf]
  %v2147 = vld [vmem:[%s5 + $0x64] sm:$0xf]
  %v2148 = vld [vmem:[%s5 + $0x68] sm:$0xf]
  %v2149 = vld [vmem:[%s5 + $0x6c] sm:$0xf]
  %v2150 = vld [vmem:[%s5 + $0x70] sm:$0xf]
  %v2151 = vld [vmem:[%s5 + $0x74] sm:$0xf]
  %v2152 = vld [vmem:[%s5 + $0x78] sm:$0xf]
  %v2153 = vld [vmem:[%s5 + $0x7c] sm:$0xf]
  %v2154 = vld [vmem:[%s5 + $0x80] sm:$0xf]
  %v2155 = vld [vmem:[%s5 + $0x84] sm:$0xf]
  %v2156 = vld [vmem:[%s5 + $0x88] sm:$0xf]
  %v2157 = vld [vmem:[%s5 + $0x8c] sm:$0xf]
  %v2158 = vld [vmem:[%s5 + $0x90] sm:$0xf]
  %v2159 = vld [vmem:[%s5 + $0x94] sm:$0xf]
  %v2160 = vld [vmem:[%s5 + $0x98] sm:$0xf]
  %v2161 = vld [vmem:[%s5 + $0x9c] sm:$0xf]
  %v2162 = vld [vmem:[%s5 + $0xa0] sm:$0xf]
  %v2163 = vld [vmem:[%s5 + $0xa4] sm:$0xf]
  %v2164 = vld [vmem:[%s5 + $0xa8] sm:$0xf]
  %v2165 = vld [vmem:[%s5 + $0xac] sm:$0xf]
  %v2166 = vld [vmem:[%s5 + $0xb0] sm:$0xf]
  %v2167 = vld [vmem:[%s5 + $0xb4] sm:$0xf]
  %v2168 = vld [vmem:[%s5 + $0xb8] sm:$0xf]
  %v2169 = vld [vmem:[%s5 + $0xbc] sm:$0xf]
  %v2170 = vld [vmem:[%s5 + $0xc0] sm:$0xf]
  %v2171 = vld [vmem:[%s5 + $0xc4] sm:$0xf]
  %v2172 = vld [vmem:[%s5 + $0xc8] sm:$0xf]
  %v2173 = vld [vmem:[%s5 + $0xcc] sm:$0xf]
  %v2174 = vld [vmem:[%s5 + $0xd0] sm:$0xf]
  %v2175 = vld [vmem:[%s5 + $0xd4] sm:$0xf]
  %v2176 = vld [vmem:[%s5 + $0xd8] sm:$0xf]
  %v2177 = vld [vmem:[%s5 + $0xdc] sm:$0xf]
  %v2178 = vld [vmem:[%s5 + $0xe0] sm:$0xf]
  %v2179 = vld [vmem:[%s5 + $0xe4] sm:$0xf]
  %v2180 = vld [vmem:[%s5 + $0xe8] sm:$0xf]
  %v2181 = vld [vmem:[%s5 + $0xec] sm:$0xf]
  %v2182 = vld [vmem:[%s5 + $0xf0] sm:$0xf]
  %v2183 = vld [vmem:[%s5 + $0xf4] sm:$0xf]
  %v2184 = vld [vmem:[%s5 + $0xf8] sm:$0xf]
  %v2185 = vld [vmem:[%s5 + $0xfc] sm:$0xf]
  %v2186 = vld [vmem:[%s5 + $0x100] sm:$0xf]
  %v2187 = vld [vmem:[%s5 + $0x104] sm:$0xf]
  %v2188 = vld [vmem:[%s5 + $0x108] sm:$0xf]
  %v2189 = vld [vmem:[%s5 + $0x10c] sm:$0xf]
  %v2190 = vld [vmem:[%s5 + $0x110] sm:$0xf]
  %v2191 = vld [vmem:[%s5 + $0x114] sm:$0xf]
  %v2192 = vld [vmem:[%s5 + $0x118] sm:$0xf]
  %v2193 = vld [vmem:[%s5 + $0x11c] sm:$0xf]
  %v2194 = vld [vmem:[%s5 + $0x120] sm:$0xf]
  %v2195 = vld [vmem:[%s5 + $0x124] sm:$0xf]
  %v2196 = vld [vmem:[%s5 + $0x128] sm:$0xf]
  %v2197 = vld [vmem:[%s5 + $0x12c] sm:$0xf]
  %v2198 = vld [vmem:[%s5 + $0x130] sm:$0xf]
  %v2199 = vld [vmem:[%s5 + $0x134] sm:$0xf]
  %v2200 = vld [vmem:[%s5 + $0x138] sm:$0xf]
  %v2201 = vld [vmem:[%s5 + $0x13c] sm:$0xf]
  %v2202 = vld [vmem:[%s5 + $0x140] sm:$0xf]
  %v2203 = vld [vmem:[%s5 + $0x144] sm:$0xf]
  %v2204 = vld [vmem:[%s5 + $0x148] sm:$0xf]
  %v2205 = vld [vmem:[%s5 + $0x14c] sm:$0xf]
  %v2206 = vld [vmem:[%s5 + $0x150] sm:$0xf]
  %v2207 = vld [vmem:[%s5 + $0x154] sm:$0xf]
  %v2208 = vld [vmem:[%s5 + $0x158] sm:$0xf]
  %v2209 = vld [vmem:[%s5 + $0x15c] sm:$0xf]
  %v2210 = vld [vmem:[%s5 + $0x160] sm:$0xf]
  %v2211 = vld [vmem:[%s5 + $0x164] sm:$0xf]
  %v2212 = vld [vmem:[%s5 + $0x168] sm:$0xf]
  %v2213 = vld [vmem:[%s5 + $0x16c] sm:$0xf]
  %v2214 = vld [vmem:[%s5 + $0x170] sm:$0xf]
  %v2215 = vld [vmem:[%s5 + $0x174] sm:$0xf]
  %v2216 = vld [vmem:[%s5 + $0x178] sm:$0xf]
  %v2217 = vld [vmem:[%s5 + $0x17c] sm:$0xf]
  %v2218 = vld [vmem:[%s5 + $0x180] sm:$0xf]
  %v2219 = vld [vmem:[%s5 + $0x184] sm:$0xf]
  %v2220 = vld [vmem:[%s5 + $0x188] sm:$0xf]
  %v2221 = vld [vmem:[%s5 + $0x18c] sm:$0xf]
  %v2222 = vld [vmem:[%s5 + $0x190] sm:$0xf]
  %v2223 = vld [vmem:[%s5 + $0x194] sm:$0xf]
  %v2224 = vld [vmem:[%s5 + $0x198] sm:$0xf]
  %v2225 = vld [vmem:[%s5 + $0x19c] sm:$0xf]
  %v2226 = vld [vmem:[%s5 + $0x1a0] sm:$0xf]
  %v2227 = vld [vmem:[%s5 + $0x1a4] sm:$0xf]
  %v2228 = vld [vmem:[%s5 + $0x1a8] sm:$0xf]
  %v2229 = vld [vmem:[%s5 + $0x1ac] sm:$0xf]
  %v2230 = vld [vmem:[%s5 + $0x1b0] sm:$0xf]
  %v2231 = vld [vmem:[%s5 + $0x1b4] sm:$0xf]
  %v2232 = vld [vmem:[%s5 + $0x1b8] sm:$0xf]
  %v2233 = vld [vmem:[%s5 + $0x1bc] sm:$0xf]
  %v2234 = vld [vmem:[%s5 + $0x1c0] sm:$0xf]
  %v2235 = vld [vmem:[%s5 + $0x1c4] sm:$0xf]
  %v2236 = vld [vmem:[%s5 + $0x1c8] sm:$0xf]
  %v2237 = vld [vmem:[%s5 + $0x1cc] sm:$0xf]
  %v2238 = vld [vmem:[%s5 + $0x1d0] sm:$0xf]
  %v2239 = vld [vmem:[%s5 + $0x1d4] sm:$0xf]
  %v2240 = vld [vmem:[%s5 + $0x1d8] sm:$0xf]
  %v2241 = vld [vmem:[%s5 + $0x1dc] sm:$0xf]
  %v2242 = vld [vmem:[%s5 + $0x1e0] sm:$0xf]
  %v2243 = vld [vmem:[%s5 + $0x1e4] sm:$0xf]
  %v2244 = vld [vmem:[%s5 + $0x1e8] sm:$0xf]
  %v2245 = vld [vmem:[%s5 + $0x1ec] sm:$0xf]
  %v2246 = vld [vmem:[%s5 + $0x1f0] sm:$0xf]
  %v2247 = vld [vmem:[%s5 + $0x1f4] sm:$0xf]
  %v2248 = vld [vmem:[%s5 + $0x1f8] sm:$0xf]
  %v2249 = vld [vmem:[%s5 + $0x1fc] sm:$0xf]
  %v2250 = vld [vmem:[%s5 + $0x200] sm:$0xf]
  %v2251 = vld [vmem:[%s5 + $0x204] sm:$0xf]
  %v2252 = vld [vmem:[%s5 + $0x208] sm:$0xf]
  %v2253 = vld [vmem:[%s5 + $0x20c] sm:$0xf]
  %v2254 = vld [vmem:[%s5 + $0x210] sm:$0xf]
  %v2255 = vld [vmem:[%s5 + $0x214] sm:$0xf]
  %v2256 = vld [vmem:[%s5 + $0x218] sm:$0xf]
  %v2257 = vld [vmem:[%s5 + $0x21c] sm:$0xf]
  %v2258 = vld [vmem:[%s5 + $0x220] sm:$0xf]
  %v2259 = vld [vmem:[%s5 + $0x224] sm:$0xf]
  %v2260 = vld [vmem:[%s5 + $0x228] sm:$0xf]
  %v2261 = vld [vmem:[%s5 + $0x22c] sm:$0xf]
  %v2262 = vld [vmem:[%s5 + $0x230] sm:$0xf]
  %v2263 = vld [vmem:[%s5 + $0x234] sm:$0xf]
  %v2264 = vld [vmem:[%s5 + $0x238] sm:$0xf]
  %v2265 = vld [vmem:[%s5 + $0x23c] sm:$0xf]
  %v2266 = vld [vmem:[%s5 + $0x240] sm:$0xf]
  %v2267 = vld [vmem:[%s5 + $0x244] sm:$0xf]
  %v2268 = vld [vmem:[%s5 + $0x248] sm:$0xf]
  %v2269 = vld [vmem:[%s5 + $0x24c] sm:$0xf]
  %v2270 = vld [vmem:[%s5 + $0x250] sm:$0xf]
  %v2271 = vld [vmem:[%s5 + $0x254] sm:$0xf]
  %v2272 = vld [vmem:[%s5 + $0x258] sm:$0xf]
  %v2273 = vld [vmem:[%s5 + $0x25c] sm:$0xf]
  %v2274 = vld [vmem:[%s5 + $0x260] sm:$0xf]
  %v2275 = vld [vmem:[%s5 + $0x264] sm:$0xf]
  %v2276 = vld [vmem:[%s5 + $0x268] sm:$0xf]
  %v2277 = vld [vmem:[%s5 + $0x26c] sm:$0xf]
  %v2278 = vld [vmem:[%s5 + $0x270] sm:$0xf]
  %v2279 = vld [vmem:[%s5 + $0x274] sm:$0xf]
  %v2280 = vld [vmem:[%s5 + $0x278] sm:$0xf]
  %v2281 = vld [vmem:[%s5 + $0x27c] sm:$0xf]
  %v2282 = vld [vmem:[%s5 + $0x280] sm:$0xf]
  %v2283 = vld [vmem:[%s5 + $0x284] sm:$0xf]
  %v2284 = vld [vmem:[%s5 + $0x288] sm:$0xf]
  %v2285 = vld [vmem:[%s5 + $0x28c] sm:$0xf]
  %v2286 = vld [vmem:[%s5 + $0x290] sm:$0xf]
  %v2287 = vld [vmem:[%s5 + $0x294] sm:$0xf]
  %v2288 = vld [vmem:[%s5 + $0x298] sm:$0xf]
  %v2289 = vld [vmem:[%s5 + $0x29c] sm:$0xf]
  %v2290 = vld [vmem:[%s5 + $0x2a0] sm:$0xf]
  %v2291 = vld [vmem:[%s5 + $0x2a4] sm:$0xf]
  %v2292 = vld [vmem:[%s5 + $0x2a8] sm:$0xf]
  %v2293 = vld [vmem:[%s5 + $0x2ac] sm:$0xf]
  %v2294 = vld [vmem:[%s5 + $0x2b0] sm:$0xf]
  %v2295 = vld [vmem:[%s5 + $0x2b4] sm:$0xf]
  %v2296 = vld [vmem:[%s5 + $0x2b8] sm:$0xf]
  %v2297 = vld [vmem:[%s5 + $0x2bc] sm:$0xf]
  %v2298 = vld [vmem:[%s5 + $0x2c0] sm:$0xf]
  %v2299 = vld [vmem:[%s5 + $0x2c4] sm:$0xf]
  %v2300 = vld [vmem:[%s5 + $0x2c8] sm:$0xf]
  %v2301 = vld [vmem:[%s5 + $0x2cc] sm:$0xf]
  %v2302 = vld [vmem:[%s5 + $0x2d0] sm:$0xf]
  %v2303 = vld [vmem:[%s5 + $0x2d4] sm:$0xf]
  %v2304 = vld [vmem:[%s5 + $0x2d8] sm:$0xf]
  %v2305 = vld [vmem:[%s5 + $0x2dc] sm:$0xf]
  %v2306 = vld [vmem:[%s5 + $0x2e0] sm:$0xf]
  %v2307 = vld [vmem:[%s5 + $0x2e4] sm:$0xf]
  %v2308 = vld [vmem:[%s5 + $0x2e8] sm:$0xf]
  %v2309 = vld [vmem:[%s5 + $0x2ec] sm:$0xf]
  %v2310 = vld [vmem:[%s5 + $0x2f0] sm:$0xf]
  %v2311 = vld [vmem:[%s5 + $0x2f4] sm:$0xf]
  %v2312 = vld [vmem:[%s5 + $0x2f8] sm:$0xf]
  %v2313 = vld [vmem:[%s5 + $0x2fc] sm:$0xf]
  %v2314 = vld [vmem:[%s5 + $0x300] sm:$0xf]
  %v2315 = vld [vmem:[%s5 + $0x304] sm:$0xf]
  %v2316 = vld [vmem:[%s5 + $0x308] sm:$0xf]
  %v2317 = vld [vmem:[%s5 + $0x30c] sm:$0xf]
  %v2318 = vld [vmem:[%s5 + $0x310] sm:$0xf]
  %v2319 = vld [vmem:[%s5 + $0x314] sm:$0xf]
  %v2320 = vld [vmem:[%s5 + $0x318] sm:$0xf]
  %v2321 = vld [vmem:[%s5 + $0x31c] sm:$0xf]
  %v2322 = vld [vmem:[%s5 + $0x320] sm:$0xf]
  %v2323 = vld [vmem:[%s5 + $0x324] sm:$0xf]
  %v2324 = vld [vmem:[%s5 + $0x328] sm:$0xf]
  %v2325 = vld [vmem:[%s5 + $0x32c] sm:$0xf]
  %v2326 = vld [vmem:[%s5 + $0x330] sm:$0xf]
  %v2327 = vld [vmem:[%s5 + $0x334] sm:$0xf]
  %v2328 = vld [vmem:[%s5 + $0x338] sm:$0xf]
  %v2329 = vld [vmem:[%s5 + $0x33c] sm:$0xf]
  %v2330 = vld [vmem:[%s5 + $0x340] sm:$0xf]
  %v2331 = vld [vmem:[%s5 + $0x344] sm:$0xf]
  %v2332 = vld [vmem:[%s5 + $0x348] sm:$0xf]
  %v2333 = vld [vmem:[%s5 + $0x34c] sm:$0xf]
  %v2334 = vld [vmem:[%s5 + $0x350] sm:$0xf]
  %v2335 = vld [vmem:[%s5 + $0x354] sm:$0xf]
  %v2336 = vld [vmem:[%s5 + $0x358] sm:$0xf]
  %v2337 = vld [vmem:[%s5 + $0x35c] sm:$0xf]
  %v2338 = vld [vmem:[%s5 + $0x360] sm:$0xf]
  %v2339 = vld [vmem:[%s5 + $0x364] sm:$0xf]
  %v2340 = vld [vmem:[%s5 + $0x368] sm:$0xf]
  %v2341 = vld [vmem:[%s5 + $0x36c] sm:$0xf]
  %v2342 = vld [vmem:[%s5 + $0x370] sm:$0xf]
  %v2343 = vld [vmem:[%s5 + $0x374] sm:$0xf]
  %v2344 = vld [vmem:[%s5 + $0x378] sm:$0xf]
  %v2345 = vld [vmem:[%s5 + $0x37c] sm:$0xf]
  %v2346 = vld [vmem:[%s5 + $0x380] sm:$0xf]
  %v2347 = vld [vmem:[%s5 + $0x384] sm:$0xf]
  %v2348 = vld [vmem:[%s5 + $0x388] sm:$0xf]
  %v2349 = vld [vmem:[%s5 + $0x38c] sm:$0xf]
  %v2350 = vld [vmem:[%s5 + $0x390] sm:$0xf]
  %v2351 = vld [vmem:[%s5 + $0x394] sm:$0xf]
  %v2352 = vld [vmem:[%s5 + $0x398] sm:$0xf]
  %v2353 = vld [vmem:[%s5 + $0x39c] sm:$0xf]
  %v2354 = vld [vmem:[%s5 + $0x3a0] sm:$0xf]
  %v2355 = vld [vmem:[%s5 + $0x3a4] sm:$0xf]
  %v2356 = vld [vmem:[%s5 + $0x3a8] sm:$0xf]
  %v2357 = vld [vmem:[%s5 + $0x3ac] sm:$0xf]
  %v2358 = vld [vmem:[%s5 + $0x3b0] sm:$0xf]
  %v2359 = vld [vmem:[%s5 + $0x3b4] sm:$0xf]
  %v2360 = vld [vmem:[%s5 + $0x3b8] sm:$0xf]
  %v2361 = vld [vmem:[%s5 + $0x3bc] sm:$0xf]
  %v2362 = vld [vmem:[%s5 + $0x3c0] sm:$0xf]
  %v2363 = vld [vmem:[%s5 + $0x3c4] sm:$0xf]
  %v2364 = vld [vmem:[%s5 + $0x3c8] sm:$0xf]
  %v2365 = vld [vmem:[%s5 + $0x3cc] sm:$0xf]
  %v2366 = vld [vmem:[%s5 + $0x3d0] sm:$0xf]
  %v2367 = vld [vmem:[%s5 + $0x3d4] sm:$0xf]
  %v2368 = vld [vmem:[%s5 + $0x3d8] sm:$0xf]
  %v2369 = vld [vmem:[%s5 + $0x3dc] sm:$0xf]
  %v2370 = vld [vmem:[%s5 + $0x3e0] sm:$0xf]
  %v2371 = vld [vmem:[%s5 + $0x3e4] sm:$0xf]
  %v2372 = vld [vmem:[%s5 + $0x3e8] sm:$0xf]
  %v2373 = vld [vmem:[%s5 + $0x3ec] sm:$0xf]
  %v2374 = vld [vmem:[%s5 + $0x3f0] sm:$0xf]
  %v2375 = vld [vmem:[%s5 + $0x3f4] sm:$0xf]
  %v2376 = vld [vmem:[%s5 + $0x3f8] sm:$0xf]
  %v2377 = vld [vmem:[%s5 + $0x3fc] sm:$0xf]
  %v2634 = vunpack.c.l.b16 %v2122
  %v2635 = vunpack.c.l.b16 %v2123
  %v2636 = vunpack.c.l.b16 %v2124
  %v2637 = vunpack.c.l.b16 %v2125
  %v2638 = vunpack.c.l.b16 %v2126
  %v2639 = vunpack.c.l.b16 %v2127
  %v2640 = vunpack.c.l.b16 %v2128
  %v2641 = vunpack.c.l.b16 %v2129
  %v2642 = vunpack.c.l.b16 %v2130
  %v2643 = vunpack.c.l.b16 %v2131
  %v2644 = vunpack.c.l.b16 %v2132
  %v2645 = vunpack.c.l.b16 %v2133
  %v2646 = vunpack.c.l.b16 %v2134
  %v2647 = vunpack.c.l.b16 %v2135
  %v2648 = vunpack.c.l.b16 %v2136
  %v2649 = vunpack.c.l.b16 %v2137
  %v2650 = vunpack.c.l.b16 %v2138
  %v2651 = vunpack.c.l.b16 %v2139
  %v2652 = vunpack.c.l.b16 %v2140
  %v2653 = vunpack.c.l.b16 %v2141
  %v2654 = vunpack.c.l.b16 %v2142
  %v2655 = vunpack.c.l.b16 %v2143
  %v2656 = vunpack.c.l.b16 %v2144
  %v2657 = vunpack.c.l.b16 %v2145
  %v2658 = vunpack.c.l.b16 %v2146
  %v2659 = vunpack.c.l.b16 %v2147
  %v2660 = vunpack.c.l.b16 %v2148
  %v2661 = vunpack.c.l.b16 %v2149
  %v2662 = vunpack.c.l.b16 %v2150
  %v2663 = vunpack.c.l.b16 %v2151
  %v2664 = vunpack.c.l.b16 %v2152
  %v2665 = vunpack.c.l.b16 %v2153
  %v2666 = vunpack.c.l.b16 %v2154
  %v2667 = vunpack.c.l.b16 %v2155
  %v2668 = vunpack.c.l.b16 %v2156
  %v2669 = vunpack.c.l.b16 %v2157
  %v2670 = vunpack.c.l.b16 %v2158
  %v2671 = vunpack.c.l.b16 %v2159
  %v2672 = vunpack.c.l.b16 %v2160
  %v2673 = vunpack.c.l.b16 %v2161
  %v2674 = vunpack.c.l.b16 %v2162
  %v2675 = vunpack.c.l.b16 %v2163
  %v2676 = vunpack.c.l.b16 %v2164
  %v2677 = vunpack.c.l.b16 %v2165
  %v2678 = vunpack.c.l.b16 %v2166
  %v2679 = vunpack.c.l.b16 %v2167
  %v2680 = vunpack.c.l.b16 %v2168
  %v2681 = vunpack.c.l.b16 %v2169
  %v2682 = vunpack.c.l.b16 %v2170
  %v2683 = vunpack.c.l.b16 %v2171
  %v2684 = vunpack.c.l.b16 %v2172
  %v2685 = vunpack.c.l.b16 %v2173
  %v2686 = vunpack.c.l.b16 %v2174
  %v2687 = vunpack.c.l.b16 %v2175
  %v2688 = vunpack.c.l.b16 %v2176
  %v2689 = vunpack.c.l.b16 %v2177
  %v2690 = vunpack.c.l.b16 %v2178
  %v2691 = vunpack.c.l.b16 %v2179
  %v2692 = vunpack.c.l.b16 %v2180
  %v2693 = vunpack.c.l.b16 %v2181
  %v2694 = vunpack.c.l.b16 %v2182
  %v2695 = vunpack.c.l.b16 %v2183
  %v2696 = vunpack.c.l.b16 %v2184
  %v2697 = vunpack.c.l.b16 %v2185
  %v2698 = vunpack.c.l.b16 %v2186
  %v2699 = vunpack.c.l.b16 %v2187
  %v2700 = vunpack.c.l.b16 %v2188
  %v2701 = vunpack.c.l.b16 %v2189
  %v2702 = vunpack.c.l.b16 %v2190
  %v2703 = vunpack.c.l.b16 %v2191
  %v2704 = vunpack.c.l.b16 %v2192
  %v2705 = vunpack.c.l.b16 %v2193
  %v2706 = vunpack.c.l.b16 %v2194
  %v2707 = vunpack.c.l.b16 %v2195
  %v2708 = vunpack.c.l.b16 %v2196
  %v2709 = vunpack.c.l.b16 %v2197
  %v2710 = vunpack.c.l.b16 %v2198
  %v2711 = vunpack.c.l.b16 %v2199
  %v2712 = vunpack.c.l.b16 %v2200
  %v2713 = vunpack.c.l.b16 %v2201
  %v2714 = vunpack.c.l.b16 %v2202
  %v2715 = vunpack.c.l.b16 %v2203
  %v2716 = vunpack.c.l.b16 %v2204
  %v2717 = vunpack.c.l.b16 %v2205
  %v2718 = vunpack.c.l.b16 %v2206
  %v2719 = vunpack.c.l.b16 %v2207
  %v2720 = vunpack.c.l.b16 %v2208
  %v2721 = vunpack.c.l.b16 %v2209
  %v2722 = vunpack.c.l.b16 %v2210
  %v2723 = vunpack.c.l.b16 %v2211
  %v2724 = vunpack.c.l.b16 %v2212
  %v2725 = vunpack.c.l.b16 %v2213
  %v2726 = vunpack.c.l.b16 %v2214
  %v2727 = vunpack.c.l.b16 %v2215
  %v2728 = vunpack.c.l.b16 %v2216
  %v2729 = vunpack.c.l.b16 %v2217
  %v2730 = vunpack.c.l.b16 %v2218
  %v2731 = vunpack.c.l.b16 %v2219
  %v2732 = vunpack.c.l.b16 %v2220
  %v2733 = vunpack.c.l.b16 %v2221
  %v2734 = vunpack.c.l.b16 %v2222
  %v2735 = vunpack.c.l.b16 %v2223
  %v2736 = vunpack.c.l.b16 %v2224
  %v2737 = vunpack.c.l.b16 %v2225
  %v2738 = vunpack.c.l.b16 %v2226
  %v2739 = vunpack.c.l.b16 %v2227
  %v2740 = vunpack.c.l.b16 %v2228
  %v2741 = vunpack.c.l.b16 %v2229
  %v2742 = vunpack.c.l.b16 %v2230
  %v2743 = vunpack.c.l.b16 %v2231
  %v2744 = vunpack.c.l.b16 %v2232
  %v2745 = vunpack.c.l.b16 %v2233
  %v2746 = vunpack.c.l.b16 %v2234
  %v2747 = vunpack.c.l.b16 %v2235
  %v2748 = vunpack.c.l.b16 %v2236
  %v2749 = vunpack.c.l.b16 %v2237
  %v2750 = vunpack.c.l.b16 %v2238
  %v2751 = vunpack.c.l.b16 %v2239
  %v2752 = vunpack.c.l.b16 %v2240
  %v2753 = vunpack.c.l.b16 %v2241
  %v2754 = vunpack.c.l.b16 %v2242
  %v2755 = vunpack.c.l.b16 %v2243
  %v2756 = vunpack.c.l.b16 %v2244
  %v2757 = vunpack.c.l.b16 %v2245
  %v2758 = vunpack.c.l.b16 %v2246
  %v2759 = vunpack.c.l.b16 %v2247
  %v2760 = vunpack.c.l.b16 %v2248
  %v2761 = vunpack.c.l.b16 %v2249
  %v2762 = vunpack.c.l.b16 %v2250
  %v2763 = vunpack.c.l.b16 %v2251
  %v2764 = vunpack.c.l.b16 %v2252
  %v2765 = vunpack.c.l.b16 %v2253
  %v2766 = vunpack.c.l.b16 %v2254
  %v2767 = vunpack.c.l.b16 %v2255
  %v2768 = vunpack.c.l.b16 %v2256
  %v2769 = vunpack.c.l.b16 %v2257
  %v2770 = vunpack.c.l.b16 %v2258
  %v2771 = vunpack.c.l.b16 %v2259
  %v2772 = vunpack.c.l.b16 %v2260
  %v2773 = vunpack.c.l.b16 %v2261
  %v2774 = vunpack.c.l.b16 %v2262
  %v2775 = vunpack.c.l.b16 %v2263
  %v2776 = vunpack.c.l.b16 %v2264
  %v2777 = vunpack.c.l.b16 %v2265
  %v2778 = vunpack.c.l.b16 %v2266
  %v2779 = vunpack.c.l.b16 %v2267
  %v2780 = vunpack.c.l.b16 %v2268
  %v2781 = vunpack.c.l.b16 %v2269
  %v2782 = vunpack.c.l.b16 %v2270
  %v2783 = vunpack.c.l.b16 %v2271
  %v2784 = vunpack.c.l.b16 %v2272
  %v2785 = vunpack.c.l.b16 %v2273
  %v2786 = vunpack.c.l.b16 %v2274
  %v2787 = vunpack.c.l.b16 %v2275
  %v2788 = vunpack.c.l.b16 %v2276
  %v2789 = vunpack.c.l.b16 %v2277
  %v2790 = vunpack.c.l.b16 %v2278
  %v2791 = vunpack.c.l.b16 %v2279
  %v2792 = vunpack.c.l.b16 %v2280
  %v2793 = vunpack.c.l.b16 %v2281
  %v2794 = vunpack.c.l.b16 %v2282
  %v2795 = vunpack.c.l.b16 %v2283
  %v2796 = vunpack.c.l.b16 %v2284
  %v2797 = vunpack.c.l.b16 %v2285
  %v2798 = vunpack.c.l.b16 %v2286
  %v2799 = vunpack.c.l.b16 %v2287
  %v2800 = vunpack.c.l.b16 %v2288
  %v2801 = vunpack.c.l.b16 %v2289
  %v2802 = vunpack.c.l.b16 %v2290
  %v2803 = vunpack.c.l.b16 %v2291
  %v2804 = vunpack.c.l.b16 %v2292
  %v2805 = vunpack.c.l.b16 %v2293
  %v2806 = vunpack.c.l.b16 %v2294
  %v2807 = vunpack.c.l.b16 %v2295
  %v2808 = vunpack.c.l.b16 %v2296
  %v2809 = vunpack.c.l.b16 %v2297
  %v2810 = vunpack.c.l.b16 %v2298
  %v2811 = vunpack.c.l.b16 %v2299
  %v2812 = vunpack.c.l.b16 %v2300
  %v2813 = vunpack.c.l.b16 %v2301
  %v2814 = vunpack.c.l.b16 %v2302
  %v2815 = vunpack.c.l.b16 %v2303
  %v2816 = vunpack.c.l.b16 %v2304
  %v2817 = vunpack.c.l.b16 %v2305
  %v2818 = vunpack.c.l.b16 %v2306
  %v2819 = vunpack.c.l.b16 %v2307
  %v2820 = vunpack.c.l.b16 %v2308
  %v2821 = vunpack.c.l.b16 %v2309
  %v2822 = vunpack.c.l.b16 %v2310
  %v2823 = vunpack.c.l.b16 %v2311
  %v2824 = vunpack.c.l.b16 %v2312
  %v2825 = vunpack.c.l.b16 %v2313
  %v2826 = vunpack.c.l.b16 %v2314
  %v2827 = vunpack.c.l.b16 %v2315
  %v2828 = vunpack.c.l.b16 %v2316
  %v2829 = vunpack.c.l.b16 %v2317
  %v2830 = vunpack.c.l.b16 %v2318
  %v2831 = vunpack.c.l.b16 %v2319
  %v2832 = vunpack.c.l.b16 %v2320
  %v2833 = vunpack.c.l.b16 %v2321
  %v2834 = vunpack.c.l.b16 %v2322
  %v2835 = vunpack.c.l.b16 %v2323
  %v2836 = vunpack.c.l.b16 %v2324
  %v2837 = vunpack.c.l.b16 %v2325
  %v2838 = vunpack.c.l.b16 %v2326
  %v2839 = vunpack.c.l.b16 %v2327
  %v2840 = vunpack.c.l.b16 %v2328
  %v2841 = vunpack.c.l.b16 %v2329
  %v2842 = vunpack.c.l.b16 %v2330
  %v2843 = vunpack.c.l.b16 %v2331
  %v2844 = vunpack.c.l.b16 %v2332
  %v2845 = vunpack.c.l.b16 %v2333
  %v2846 = vunpack.c.l.b16 %v2334
  %v2847 = vunpack.c.l.b16 %v2335
  %v2848 = vunpack.c.l.b16 %v2336
  %v2849 = vunpack.c.l.b16 %v2337
  %v2850 = vunpack.c.l.b16 %v2338
  %v2851 = vunpack.c.l.b16 %v2339
  %v2852 = vunpack.c.l.b16 %v2340
  %v2853 = vunpack.c.l.b16 %v2341
  %v2854 = vunpack.c.l.b16 %v2342
  %v2855 = vunpack.c.l.b16 %v2343
  %v2856 = vunpack.c.l.b16 %v2344
  %v2857 = vunpack.c.l.b16 %v2345
  %v2858 = vunpack.c.l.b16 %v2346
  %v2859 = vunpack.c.l.b16 %v2347
  %v2860 = vunpack.c.l.b16 %v2348
  %v2861 = vunpack.c.l.b16 %v2349
  %v2862 = vunpack.c.l.b16 %v2350
  %v2863 = vunpack.c.l.b16 %v2351
  %v2864 = vunpack.c.l.b16 %v2352
  %v2865 = vunpack.c.l.b16 %v2353
  %v2866 = vunpack.c.l.b16 %v2354
  %v2867 = vunpack.c.l.b16 %v2355
  %v2868 = vunpack.c.l.b16 %v2356
  %v2869 = vunpack.c.l.b16 %v2357
  %v2870 = vunpack.c.l.b16 %v2358
  %v2871 = vunpack.c.l.b16 %v2359
  %v2872 = vunpack.c.l.b16 %v2360
  %v2873 = vunpack.c.l.b16 %v2361
  %v2874 = vunpack.c.l.b16 %v2362
  %v2875 = vunpack.c.l.b16 %v2363
  %v2876 = vunpack.c.l.b16 %v2364
  %v2877 = vunpack.c.l.b16 %v2365
  %v2878 = vunpack.c.l.b16 %v2366
  %v2879 = vunpack.c.l.b16 %v2367
  %v2880 = vunpack.c.l.b16 %v2368
  %v2881 = vunpack.c.l.b16 %v2369
  %v2882 = vunpack.c.l.b16 %v2370
  %v2883 = vunpack.c.l.b16 %v2371
  %v2884 = vunpack.c.l.b16 %v2372
  %v2885 = vunpack.c.l.b16 %v2373
  %v2886 = vunpack.c.l.b16 %v2374
  %v2887 = vunpack.c.l.b16 %v2375
  %v2888 = vunpack.c.l.b16 %v2376
  %v2889 = vunpack.c.l.b16 %v2377
  %v2890 = vpack.c.b16 %v2635, %v2634
  %v2891 = vpack.c.b16 %v2637, %v2636
  %v2892 = vpack.c.b16 %v2639, %v2638
  %v2893 = vpack.c.b16 %v2641, %v2640
  %v2894 = vpack.c.b16 %v2643, %v2642
  %v2895 = vpack.c.b16 %v2645, %v2644
  %v2896 = vpack.c.b16 %v2647, %v2646
  %v2897 = vpack.c.b16 %v2649, %v2648
  %v2898 = vpack.c.b16 %v2651, %v2650
  %v2899 = vpack.c.b16 %v2653, %v2652
  %v2900 = vpack.c.b16 %v2655, %v2654
  %v2901 = vpack.c.b16 %v2657, %v2656
  %v2902 = vpack.c.b16 %v2659, %v2658
  %v2903 = vpack.c.b16 %v2661, %v2660
  %v2904 = vpack.c.b16 %v2663, %v2662
  %v2905 = vpack.c.b16 %v2665, %v2664
  %v2906 = vpack.c.b16 %v2667, %v2666
  %v2907 = vpack.c.b16 %v2669, %v2668
  %v2908 = vpack.c.b16 %v2671, %v2670
  %v2909 = vpack.c.b16 %v2673, %v2672
  %v2910 = vpack.c.b16 %v2675, %v2674
  %v2911 = vpack.c.b16 %v2677, %v2676
  %v2912 = vpack.c.b16 %v2679, %v2678
  %v2913 = vpack.c.b16 %v2681, %v2680
  %v2914 = vpack.c.b16 %v2683, %v2682
  %v2915 = vpack.c.b16 %v2685, %v2684
  %v2916 = vpack.c.b16 %v2687, %v2686
  %v2917 = vpack.c.b16 %v2689, %v2688
  %v2918 = vpack.c.b16 %v2691, %v2690
  %v2919 = vpack.c.b16 %v2693, %v2692
  %v2920 = vpack.c.b16 %v2695, %v2694
  %v2921 = vpack.c.b16 %v2697, %v2696
  %v2922 = vpack.c.b16 %v2699, %v2698
  %v2923 = vpack.c.b16 %v2701, %v2700
  %v2924 = vpack.c.b16 %v2703, %v2702
  %v2925 = vpack.c.b16 %v2705, %v2704
  %v2926 = vpack.c.b16 %v2707, %v2706
  %v2927 = vpack.c.b16 %v2709, %v2708
  %v2928 = vpack.c.b16 %v2711, %v2710
  %v2929 = vpack.c.b16 %v2713, %v2712
  %v2930 = vpack.c.b16 %v2715, %v2714
  %v2931 = vpack.c.b16 %v2717, %v2716
  %v2932 = vpack.c.b16 %v2719, %v2718
  %v2933 = vpack.c.b16 %v2721, %v2720
  %v2934 = vpack.c.b16 %v2723, %v2722
  %v2935 = vpack.c.b16 %v2725, %v2724
  %v2936 = vpack.c.b16 %v2727, %v2726
  %v2937 = vpack.c.b16 %v2729, %v2728
  %v2938 = vpack.c.b16 %v2731, %v2730
  %v2939 = vpack.c.b16 %v2733, %v2732
  %v2940 = vpack.c.b16 %v2735, %v2734
  %v2941 = vpack.c.b16 %v2737, %v2736
  %v2942 = vpack.c.b16 %v2739, %v2738
  %v2943 = vpack.c.b16 %v2741, %v2740
  %v2944 = vpack.c.b16 %v2743, %v2742
  %v2945 = vpack.c.b16 %v2745, %v2744
  %v2946 = vpack.c.b16 %v2747, %v2746
  %v2947 = vpack.c.b16 %v2749, %v2748
  %v2948 = vpack.c.b16 %v2751, %v2750
  %v2949 = vpack.c.b16 %v2753, %v2752
  %v2950 = vpack.c.b16 %v2755, %v2754
  %v2951 = vpack.c.b16 %v2757, %v2756
  %v2952 = vpack.c.b16 %v2759, %v2758
  %v2953 = vpack.c.b16 %v2761, %v2760
  %v2954 = vpack.c.b16 %v2763, %v2762
  %v2955 = vpack.c.b16 %v2765, %v2764
  %v2956 = vpack.c.b16 %v2767, %v2766
  %v2957 = vpack.c.b16 %v2769, %v2768
  %v2958 = vpack.c.b16 %v2771, %v2770
  %v2959 = vpack.c.b16 %v2773, %v2772
  %v2960 = vpack.c.b16 %v2775, %v2774
  %v2961 = vpack.c.b16 %v2777, %v2776
  %v2962 = vpack.c.b16 %v2779, %v2778
  %v2963 = vpack.c.b16 %v2781, %v2780
  %v2964 = vpack.c.b16 %v2783, %v2782
  %v2965 = vpack.c.b16 %v2785, %v2784
  %v2966 = vpack.c.b16 %v2787, %v2786
  %v2967 = vpack.c.b16 %v2789, %v2788
  %v2968 = vpack.c.b16 %v2791, %v2790
  %v2969 = vpack.c.b16 %v2793, %v2792
  %v2970 = vpack.c.b16 %v2795, %v2794
  %v2971 = vpack.c.b16 %v2797, %v2796
  %v2972 = vpack.c.b16 %v2799, %v2798
  %v2973 = vpack.c.b16 %v2801, %v2800
  %v2974 = vpack.c.b16 %v2803, %v2802
  %v2975 = vpack.c.b16 %v2805, %v2804
  %v2976 = vpack.c.b16 %v2807, %v2806
  %v2977 = vpack.c.b16 %v2809, %v2808
  %v2978 = vpack.c.b16 %v2811, %v2810
  %v2979 = vpack.c.b16 %v2813, %v2812
  %v2980 = vpack.c.b16 %v2815, %v2814
  %v2981 = vpack.c.b16 %v2817, %v2816
  %v2982 = vpack.c.b16 %v2819, %v2818
  %v2983 = vpack.c.b16 %v2821, %v2820
  %v2984 = vpack.c.b16 %v2823, %v2822
  %v2985 = vpack.c.b16 %v2825, %v2824
  %v2986 = vpack.c.b16 %v2827, %v2826
  %v2987 = vpack.c.b16 %v2829, %v2828
  %v2988 = vpack.c.b16 %v2831, %v2830
  %v2989 = vpack.c.b16 %v2833, %v2832
  %v2990 = vpack.c.b16 %v2835, %v2834
  %v2991 = vpack.c.b16 %v2837, %v2836
  %v2992 = vpack.c.b16 %v2839, %v2838
  %v2993 = vpack.c.b16 %v2841, %v2840
  %v2994 = vpack.c.b16 %v2843, %v2842
  %v2995 = vpack.c.b16 %v2845, %v2844
  %v2996 = vpack.c.b16 %v2847, %v2846
  %v2997 = vpack.c.b16 %v2849, %v2848
  %v2998 = vpack.c.b16 %v2851, %v2850
  %v2999 = vpack.c.b16 %v2853, %v2852
  %v3000 = vpack.c.b16 %v2855, %v2854
  %v3001 = vpack.c.b16 %v2857, %v2856
  %v3002 = vpack.c.b16 %v2859, %v2858
  %v3003 = vpack.c.b16 %v2861, %v2860
  %v3004 = vpack.c.b16 %v2863, %v2862
  %v3005 = vpack.c.b16 %v2865, %v2864
  %v3006 = vpack.c.b16 %v2867, %v2866
  %v3007 = vpack.c.b16 %v2869, %v2868
  %v3008 = vpack.c.b16 %v2871, %v2870
  %v3009 = vpack.c.b16 %v2873, %v2872
  %v3010 = vpack.c.b16 %v2875, %v2874
  %v3011 = vpack.c.b16 %v2877, %v2876
  %v3012 = vpack.c.b16 %v2879, %v2878
  %v3013 = vpack.c.b16 %v2881, %v2880
  %v3014 = vpack.c.b16 %v2883, %v2882
  %v3015 = vpack.c.b16 %v2885, %v2884
  %v3016 = vpack.c.b16 %v2887, %v2886
  %v3017 = vpack.c.b16 %v2889, %v2888
  %3146 = vmatprep.subr.bf16.mxu0 0
  %3147 = vmatpush1.bf16.msra.mxu0 %v2890
  %3148 = vmatprep.subr.bf16.mxu0 0
  %3149 = vmatpush1.bf16.msra.mxu0 %v2891
  %3150 = vmatprep.subr.bf16.mxu0 0
  %3151 = vmatpush1.bf16.msra.mxu0 %v2892
  %3152 = vmatprep.subr.bf16.mxu0 0
  %3153 = vmatpush1.bf16.msra.mxu0 %v2893
  %3154 = vmatprep.subr.bf16.mxu0 0
  %3155 = vmatpush1.bf16.msra.mxu0 %v2894
  %3156 = vmatprep.subr.bf16.mxu0 0
  %3157 = vmatpush1.bf16.msra.mxu0 %v2895
  %3158 = vmatprep.subr.bf16.mxu0 0
  %3159 = vmatpush1.bf16.msra.mxu0 %v2896
  %3160 = vmatprep.subr.bf16.mxu0 0
  %3161 = vmatpush1.bf16.msra.mxu0 %v2897
  %3162 = vmatprep.subr.bf16.mxu0 0
  %3163 = vmatpush1.bf16.msra.mxu0 %v2898
  %3164 = vmatprep.subr.bf16.mxu0 0
  %3165 = vmatpush1.bf16.msra.mxu0 %v2899
  %3166 = vmatprep.subr.bf16.mxu0 0
  %3167 = vmatpush1.bf16.msra.mxu0 %v2900
  %3168 = vmatprep.subr.bf16.mxu0 0
  %3169 = vmatpush1.bf16.msra.mxu0 %v2901
  %3170 = vmatprep.subr.bf16.mxu0 0
  %3171 = vmatpush1.bf16.msra.mxu0 %v2902
  %3172 = vmatprep.subr.bf16.mxu0 0
  %3173 = vmatpush1.bf16.msra.mxu0 %v2903
  %3174 = vmatprep.subr.bf16.mxu0 0
  %3175 = vmatpush1.bf16.msra.mxu0 %v2904
  %3176 = vmatprep.subr.bf16.mxu0 0
  %3177 = vmatpush1.bf16.msra.mxu0 %v2905
  %3178 = vmatprep.mubr.bf16.mxu0 %v2107
  %3179 = vmatmul.mubr.bf16.gmra.mrb[0].mxu0 %v2106
  %v3180 = vpop.f32.mrb[0].mxu0
  %v3181 = vadd.f32 0.0, %v3180
  %v3182 = vpop.f32.mrb[0].mxu0
  %v3183 = vpop.f32.mrb[0].mxu0
  %v3184 = vpop.f32.mrb[0].mxu0
  %3185 = vdwg.mxu0
  %3186 = vmatprep.subr.bf16.mxu0 0
  %3187 = vmatpush1.bf16.msra.mxu0 %v2906
  %3188 = vmatprep.subr.bf16.mxu0 0
  %3189 = vmatpush1.bf16.msra.mxu0 %v2907
  %3190 = vmatprep.subr.bf16.mxu0 0
  %3191 = vmatpush1.bf16.msra.mxu0 %v2908
  %3192 = vmatprep.subr.bf16.mxu0 0
  %3193 = vmatpush1.bf16.msra.mxu0 %v2909
  %3194 = vmatprep.subr.bf16.mxu0 0
  %3195 = vmatpush1.bf16.msra.mxu0 %v2910
  %3196 = vmatprep.subr.bf16.mxu0 0
  %3197 = vmatpush1.bf16.msra.mxu0 %v2911
  %3198 = vmatprep.subr.bf16.mxu0 0
  %3199 = vmatpush1.bf16.msra.mxu0 %v2912
  %3200 = vmatprep.subr.bf16.mxu0 0
  %3201 = vmatpush1.bf16.msra.mxu0 %v2913
  %3202 = vmatprep.subr.bf16.mxu0 0
  %3203 = vmatpush1.bf16.msra.mxu0 %v2914
  %3204 = vmatprep.subr.bf16.mxu0 0
  %3205 = vmatpush1.bf16.msra.mxu0 %v2915
  %3206 = vmatprep.subr.bf16.mxu0 0
  %3207 = vmatpush1.bf16.msra.mxu0 %v2916
  %3208 = vmatprep.subr.bf16.mxu0 0
  %3209 = vmatpush1.bf16.msra.mxu0 %v2917
  %3210 = vmatprep.subr.bf16.mxu0 0
  %3211 = vmatpush1.bf16.msra.mxu0 %v2918
  %3212 = vmatprep.subr.bf16.mxu0 0
  %3213 = vmatpush1.bf16.msra.mxu0 %v2919
  %3214 = vmatprep.subr.bf16.mxu0 0
  %3215 = vmatpush1.bf16.msra.mxu0 %v2920
  %3216 = vmatprep.subr.bf16.mxu0 0
  %3217 = vmatpush1.bf16.msra.mxu0 %v2921
  %3218 = vmatprep.mubr.bf16.mxu0 %v2109
  %3219 = vmatmul.mubr.bf16.gmra.mrb[0].mxu0 %v2108
  %v3220 = vpop.f32.mrb[0].mxu0
  %v3221 = vadd.f32 %v3181, %v3220
  %v3222 = vpop.f32.mrb[0].mxu0
  %v3223 = vpop.f32.mrb[0].mxu0
  %v3224 = vpop.f32.mrb[0].mxu0
  %3225 = vdwg.mxu0
  %3226 = vmatprep.subr.bf16.mxu0 0
  %3227 = vmatpush1.bf16.msra.mxu0 %v2922
  %3228 = vmatprep.subr.bf16.mxu0 0
  %3229 = vmatpush1.bf16.msra.mxu0 %v2923
  %3230 = vmatprep.subr.bf16.mxu0 0
  %3231 = vmatpush1.bf16.msra.mxu0 %v2924
  %3232 = vmatprep.subr.bf16.mxu0 0
  %3233 = vmatpush1.bf16.msra.mxu0 %v2925
  %3234 = vmatprep.subr.bf16.mxu0 0
  %3235 = vmatpush1.bf16.msra.mxu0 %v2926
  %3236 = vmatprep.subr.bf16.mxu0 0
  %3237 = vmatpush1.bf16.msra.mxu0 %v2927
  %3238 = vmatprep.subr.bf16.mxu0 0
  %3239 = vmatpush1.bf16.msra.mxu0 %v2928
  %3240 = vmatprep.subr.bf16.mxu0 0
  %3241 = vmatpush1.bf16.msra.mxu0 %v2929
  %3242 = vmatprep.subr.bf16.mxu0 0
  %3243 = vmatpush1.bf16.msra.mxu0 %v2930
  %3244 = vmatprep.subr.bf16.mxu0 0
  %3245 = vmatpush1.bf16.msra.mxu0 %v2931
  %3246 = vmatprep.subr.bf16.mxu0 0
  %3247 = vmatpush1.bf16.msra.mxu0 %v2932
  %3248 = vmatprep.subr.bf16.mxu0 0
  %3249 = vmatpush1.bf16.msra.mxu0 %v2933
  %3250 = vmatprep.subr.bf16.mxu0 0
  %3251 = vmatpush1.bf16.msra.mxu0 %v2934
  %3252 = vmatprep.subr.bf16.mxu0 0
  %3253 = vmatpush1.bf16.msra.mxu0 %v2935
  %3254 = vmatprep.subr.bf16.mxu0 0
  %3255 = vmatpush1.bf16.msra.mxu0 %v2936
  %3256 = vmatprep.subr.bf16.mxu0 0
  %3257 = vmatpush1.bf16.msra.mxu0 %v2937
  %3258 = vmatprep.mubr.bf16.mxu0 %v2111
  %3259 = vmatmul.mubr.bf16.gmra.mrb[0].mxu0 %v2110
  %v3260 = vpop.f32.mrb[0].mxu0
  %v3261 = vadd.f32 %v3221, %v3260
  %v3262 = vpop.f32.mrb[0].mxu0
  %v3263 = vpop.f32.mrb[0].mxu0
  %v3264 = vpop.f32.mrb[0].mxu0
  %3265 = vdwg.mxu0
  %3266 = vmatprep.subr.bf16.mxu0 0
  %3267 = vmatpush1.bf16.msra.mxu0 %v2938
  %3268 = vmatprep.subr.bf16.mxu0 0
  %3269 = vmatpush1.bf16.msra.mxu0 %v2939
  %3270 = vmatprep.subr.bf16.mxu0 0
  %3271 = vmatpush1.bf16.msra.mxu0 %v2940
  %3272 = vmatprep.subr.bf16.mxu0 0
  %3273 = vmatpush1.bf16.msra.mxu0 %v2941
  %3274 = vmatprep.subr.bf16.mxu0 0
  %3275 = vmatpush1.bf16.msra.mxu0 %v2942
  %3276 = vmatprep.subr.bf16.mxu0 0
  %3277 = vmatpush1.bf16.msra.mxu0 %v2943
  %3278 = vmatprep.subr.bf16.mxu0 0
  %3279 = vmatpush1.bf16.msra.mxu0 %v2944
  %3280 = vmatprep.subr.bf16.mxu0 0
  %3281 = vmatpush1.bf16.msra.mxu0 %v2945
  %3282 = vmatprep.subr.bf16.mxu0 0
  %3283 = vmatpush1.bf16.msra.mxu0 %v2946
  %3284 = vmatprep.subr.bf16.mxu0 0
  %3285 = vmatpush1.bf16.msra.mxu0 %v2947
  %3286 = vmatprep.subr.bf16.mxu0 0
  %3287 = vmatpush1.bf16.msra.mxu0 %v2948
  %3288 = vmatprep.subr.bf16.mxu0 0
  %3289 = vmatpush1.bf16.msra.mxu0 %v2949
  %3290 = vmatprep.subr.bf16.mxu0 0
  %3291 = vmatpush1.bf16.msra.mxu0 %v2950
  %3292 = vmatprep.subr.bf16.mxu0 0
  %3293 = vmatpush1.bf16.msra.mxu0 %v2951
  %3294 = vmatprep.subr.bf16.mxu0 0
  %3295 = vmatpush1.bf16.msra.mxu0 %v2952
  %3296 = vmatprep.subr.bf16.mxu0 0
  %3297 = vmatpush1.bf16.msra.mxu0 %v2953
  %3298 = vmatprep.mubr.bf16.mxu0 %v2113
  %3299 = vmatmul.mubr.bf16.gmra.mrb[0].mxu0 %v2112
  %v3300 = vpop.f32.mrb[0].mxu0
  %v3301 = vadd.f32 %v3261, %v3300
  %v3302 = vpop.f32.mrb[0].mxu0
  %v3303 = vpop.f32.mrb[0].mxu0
  %v3304 = vpop.f32.mrb[0].mxu0
  %3305 = vdwg.mxu0
  %3306 = vmatprep.subr.bf16.mxu0 0
  %3307 = vmatpush1.bf16.msra.mxu0 %v2954
  %3308 = vmatprep.subr.bf16.mxu0 0
  %3309 = vmatpush1.bf16.msra.mxu0 %v2955
  %3310 = vmatprep.subr.bf16.mxu0 0
  %3311 = vmatpush1.bf16.msra.mxu0 %v2956
  %3312 = vmatprep.subr.bf16.mxu0 0
  %3313 = vmatpush1.bf16.msra.mxu0 %v2957
  %3314 = vmatprep.subr.bf16.mxu0 0
  %3315 = vmatpush1.bf16.msra.mxu0 %v2958
  %3316 = vmatprep.subr.bf16.mxu0 0
  %3317 = vmatpush1.bf16.msra.mxu0 %v2959
  %3318 = vmatprep.subr.bf16.mxu0 0
  %3319 = vmatpush1.bf16.msra.mxu0 %v2960
  %3320 = vmatprep.subr.bf16.mxu0 0
  %3321 = vmatpush1.bf16.msra.mxu0 %v2961
  %3322 = vmatprep.subr.bf16.mxu0 0
  %3323 = vmatpush1.bf16.msra.mxu0 %v2962
  %3324 = vmatprep.subr.bf16.mxu0 0
  %3325 = vmatpush1.bf16.msra.mxu0 %v2963
  %3326 = vmatprep.subr.bf16.mxu0 0
  %3327 = vmatpush1.bf16.msra.mxu0 %v2964
  %3328 = vmatprep.subr.bf16.mxu0 0
  %3329 = vmatpush1.bf16.msra.mxu0 %v2965
  %3330 = vmatprep.subr.bf16.mxu0 0
  %3331 = vmatpush1.bf16.msra.mxu0 %v2966
  %3332 = vmatprep.subr.bf16.mxu0 0
  %3333 = vmatpush1.bf16.msra.mxu0 %v2967
  %3334 = vmatprep.subr.bf16.mxu0 0
  %3335 = vmatpush1.bf16.msra.mxu0 %v2968
  %3336 = vmatprep.subr.bf16.mxu0 0
  %3337 = vmatpush1.bf16.msra.mxu0 %v2969
  %3338 = vmatprep.mubr.bf16.mxu0 %v2115
  %3339 = vmatmul.mubr.bf16.gmra.mrb[0].mxu0 %v2114
  %v3340 = vpop.f32.mrb[0].mxu0
  %v3341 = vadd.f32 %v3301, %v3340
  %v3342 = vpop.f32.mrb[0].mxu0
  %v3343 = vpop.f32.mrb[0].mxu0
  %v3344 = vpop.f32.mrb[0].mxu0
  %3345 = vdwg.mxu0
  %3346 = vmatprep.subr.bf16.mxu0 0
  %3347 = vmatpush1.bf16.msra.mxu0 %v2970
  %3348 = vmatprep.subr.bf16.mxu0 0
  %3349 = vmatpush1.bf16.msra.mxu0 %v2971
  %3350 = vmatprep.subr.bf16.mxu0 0
  %3351 = vmatpush1.bf16.msra.mxu0 %v2972
  %3352 = vmatprep.subr.bf16.mxu0 0
  %3353 = vmatpush1.bf16.msra.mxu0 %v2973
  %3354 = vmatprep.subr.bf16.mxu0 0
  %3355 = vmatpush1.bf16.msra.mxu0 %v2974
  %3356 = vmatprep.subr.bf16.mxu0 0
  %3357 = vmatpush1.bf16.msra.mxu0 %v2975
  %3358 = vmatprep.subr.bf16.mxu0 0
  %3359 = vmatpush1.bf16.msra.mxu0 %v2976
  %3360 = vmatprep.subr.bf16.mxu0 0
  %3361 = vmatpush1.bf16.msra.mxu0 %v2977
  %3362 = vmatprep.subr.bf16.mxu0 0
  %3363 = vmatpush1.bf16.msra.mxu0 %v2978
  %3364 = vmatprep.subr.bf16.mxu0 0
  %3365 = vmatpush1.bf16.msra.mxu0 %v2979
  %3366 = vmatprep.subr.bf16.mxu0 0
  %3367 = vmatpush1.bf16.msra.mxu0 %v2980
  %3368 = vmatprep.subr.bf16.mxu0 0
  %3369 = vmatpush1.bf16.msra.mxu0 %v2981
  %3370 = vmatprep.subr.bf16.mxu0 0
  %3371 = vmatpush1.bf16.msra.mxu0 %v2982
  %3372 = vmatprep.subr.bf16.mxu0 0
  %3373 = vmatpush1.bf16.msra.mxu0 %v2983
  %3374 = vmatprep.subr.bf16.mxu0 0
  %3375 = vmatpush1.bf16.msra.mxu0 %v2984
  %3376 = vmatprep.subr.bf16.mxu0 0
  %3377 = vmatpush1.bf16.msra.mxu0 %v2985
  %3378 = vmatprep.mubr.bf16.mxu0 %v2117
  %3379 = vmatmul.mubr.bf16.gmra.mrb[0].mxu0 %v2116
  %v3380 = vpop.f32.mrb[0].mxu0
  %v3381 = vadd.f32 %v3341, %v3380
  %v3382 = vpop.f32.mrb[0].mxu0
  %v3383 = vpop.f32.mrb[0].mxu0
  %v3384 = vpop.f32.mrb[0].mxu0
  %3385 = vdwg.mxu0
  %3386 = vmatprep.subr.bf16.mxu0 0
  %3387 = vmatpush1.bf16.msra.mxu0 %v2986
  %3388 = vmatprep.subr.bf16.mxu0 0
  %3389 = vmatpush1.bf16.msra.mxu0 %v2987
  %3390 = vmatprep.subr.bf16.mxu0 0
  %3391 = vmatpush1.bf16.msra.mxu0 %v2988
  %3392 = vmatprep.subr.bf16.mxu0 0
  %3393 = vmatpush1.bf16.msra.mxu0 %v2989
  %3394 = vmatprep.subr.bf16.mxu0 0
  %3395 = vmatpush1.bf16.msra.mxu0 %v2990
  %3396 = vmatprep.subr.bf16.mxu0 0
  %3397 = vmatpush1.bf16.msra.mxu0 %v2991
  %3398 = vmatprep.subr.bf16.mxu0 0
  %3399 = vmatpush1.bf16.msra.mxu0 %v2992
  %3400 = vmatprep.subr.bf16.mxu0 0
  %3401 = vmatpush1.bf16.msra.mxu0 %v2993
  %3402 = vmatprep.subr.bf16.mxu0 0
  %3403 = vmatpush1.bf16.msra.mxu0 %v2994
  %3404 = vmatprep.subr.bf16.mxu0 0
  %3405 = vmatpush1.bf16.msra.mxu0 %v2995
  %3406 = vmatprep.subr.bf16.mxu0 0
  %3407 = vmatpush1.bf16.msra.mxu0 %v2996
  %3408 = vmatprep.subr.bf16.mxu0 0
  %3409 = vmatpush1.bf16.msra.mxu0 %v2997
  %3410 = vmatprep.subr.bf16.mxu0 0
  %3411 = vmatpush1.bf16.msra.mxu0 %v2998
  %3412 = vmatprep.subr.bf16.mxu0 0
  %3413 = vmatpush1.bf16.msra.mxu0 %v2999
  %3414 = vmatprep.subr.bf16.mxu0 0
  %3415 = vmatpush1.bf16.msra.mxu0 %v3000
  %3416 = vmatprep.subr.bf16.mxu0 0
  %3417 = vmatpush1.bf16.msra.mxu0 %v3001
  %3418 = vmatprep.mubr.bf16.mxu0 %v2119
  %3419 = vmatmul.mubr.bf16.gmra.mrb[0].mxu0 %v2118
  %v3420 = vpop.f32.mrb[0].mxu0
  %v3421 = vadd.f32 %v3381, %v3420
  %v3422 = vpop.f32.mrb[0].mxu0
  %v3423 = vpop.f32.mrb[0].mxu0
  %v3424 = vpop.f32.mrb[0].mxu0
  %3425 = vdwg.mxu0
  %3426 = vmatprep.subr.bf16.mxu0 0
  %3427 = vmatpush1.bf16.msra.mxu0 %v3002
  %3428 = vmatprep.subr.bf16.mxu0 0
  %3429 = vmatpush1.bf16.msra.mxu0 %v3003
  %3430 = vmatprep.subr.bf16.mxu0 0
  %3431 = vmatpush1.bf16.msra.mxu0 %v3004
  %3432 = vmatprep.subr.bf16.mxu0 0
  %3433 = vmatpush1.bf16.msra.mxu0 %v3005
  %3434 = vmatprep.subr.bf16.mxu0 0
  %3435 = vmatpush1.bf16.msra.mxu0 %v3006
  %3436 = vmatprep.subr.bf16.mxu0 0
  %3437 = vmatpush1.bf16.msra.mxu0 %v3007
  %3438 = vmatprep.subr.bf16.mxu0 0
  %3439 = vmatpush1.bf16.msra.mxu0 %v3008
  %3440 = vmatprep.subr.bf16.mxu0 0
  %3441 = vmatpush1.bf16.msra.mxu0 %v3009
  %3442 = vmatprep.subr.bf16.mxu0 0
  %3443 = vmatpush1.bf16.msra.mxu0 %v3010
  %3444 = vmatprep.subr.bf16.mxu0 0
  %3445 = vmatpush1.bf16.msra.mxu0 %v3011
  %3446 = vmatprep.subr.bf16.mxu0 0
  %3447 = vmatpush1.bf16.msra.mxu0 %v3012
  %3448 = vmatprep.subr.bf16.mxu0 0
  %3449 = vmatpush1.bf16.msra.mxu0 %v3013
  %3450 = vmatprep.subr.bf16.mxu0 0
  %3451 = vmatpush1.bf16.msra.mxu0 %v3014
  %3452 = vmatprep.subr.bf16.mxu0 0
  %3453 = vmatpush1.bf16.msra.mxu0 %v3015
  %3454 = vmatprep.subr.bf16.mxu0 0
  %3455 = vmatpush1.bf16.msra.mxu0 %v3016
  %3456 = vmatprep.subr.bf16.mxu0 0
  %3457 = vmatpush1.bf16.msra.mxu0 %v3017
  %3458 = vmatprep.mubr.bf16.mxu0 %v2121
  %3459 = vmatmul.mubr.bf16.gmra.mrb[0].mxu0 %v2120
  %v3460 = vpop.f32.mrb[0].mxu0
  %v3461 = vadd.f32 %v3421, %v3460
  %v3462 = vpop.f32.mrb[0].mxu0
  %v3463 = vpop.f32.mrb[0].mxu0
  %v3464 = vpop.f32.mrb[0].mxu0
  %3465 = vdwg.mxu0
  %v3466 = vld [vmem:[%s6] sm:$0x1]
  %v3467 = vsub.f32 0.0, %v3461
  %v3468 = vmax.f32 %v3467, 0.0
  %v3469 = vsub.f32 0.0, %v3468
  %v3470 = vlaneseq
  %v3471 = vshrl.u32 %v3470, 7
  %v3472 = vsub.s32 0, %v3471
  %v3473 = vrot.slane %v3466, %v3472
  %v3474 = vmul.f32 %v3469, %v3473
  %v3475 = vadd.f32 %v3461, %v3474
  %v3476 = vld [vmem:[%s7] sm:$0xff]
  %v3477 = vld [vmem:[%s7 + $0x8] sm:$0xff]
  %v3478 = vld [vmem:[%s7 + $0x10] sm:$0xff]
  %v3479 = vld [vmem:[%s7 + $0x18] sm:$0xff]
  %v3480 = vld [vmem:[%s6 + $0x1] sm:$0x1]
  %v3481 = vlaneseq
  %v3482 = vshrl.u32 %v3481, 7
  %v3483 = vsub.s32 0, %v3482
  %v3484 = vrot.slane %v3480, %v3483
  %vm3485 = vcmask 261120
  %v3487 = vsel %vm3485, %v3475, 0
  %3489 = vmatprep.subr.mxu0 0.0
  %3490 = vmatpush1.msra.mxu0 %v3476
  %3491 = vmatprep.subr.mxu0 0.0
  %3492 = vmatpush1.msra.mxu0 %v3477
  %3493 = vmatprep.subr.mxu0 0.0
  %3494 = vmatpush1.msra.mxu0 %v3478
  %3495 = vmatprep.subr.mxu0 0.0
  %3496 = vmatpush1.msra.mxu0 %v3479
  %3497 = vmatprep.subr.mxu0 0.0
  %3498 = vmatpush1.msra.mxu0 0.0
  %3499 = vmatprep.subr.mxu0 0.0
  %3500 = vmatpush1.msra.mxu0 0.0
  %3501 = vmatprep.subr.mxu0 0.0
  %3502 = vmatpush1.msra.mxu0 0.0
  %3503 = vmatprep.subr.mxu0 0.0
  %3504 = vmatpush1.msra.mxu0 0.0
  %3505 = vmatprep.subr.mxu0 0.0
  %3506 = vmatpush1.msra.mxu0 0.0
  %3507 = vmatprep.subr.mxu0 0.0
  %3508 = vmatpush1.msra.mxu0 0.0
  %3509 = vmatprep.subr.mxu0 0.0
  %3510 = vmatpush1.msra.mxu0 0.0
  %3511 = vmatprep.subr.mxu0 0.0
  %3512 = vmatpush1.msra.mxu0 0.0
  %3513 = vmatprep.subr.mxu0 0.0
  %3514 = vmatpush1.msra.mxu0 0.0
  %3515 = vmatprep.subr.mxu0 0.0
  %3516 = vmatpush1.msra.mxu0 0.0
  %3517 = vmatprep.subr.mxu0 0.0
  %3518 = vmatpush1.msra.mxu0 0.0
  %3519 = vmatprep.subr.mxu0 0.0
  %3520 = vmatpush1.msra.mxu0 0.0
  %3521 = vmatprep.subr.mxu0 0.0
  %3522 = vmatpush1.msra.mxu0 0.0
  %3523 = vmatprep.subr.mxu0 0.0
  %3524 = vmatpush1.msra.mxu0 0.0
  %3525 = vmatprep.subr.mxu0 0.0
  %3526 = vmatpush1.msra.mxu0 0.0
  %3527 = vmatprep.subr.mxu0 0.0
  %3528 = vmatpush1.msra.mxu0 0.0
  %3529 = vmatprep.subr.mxu0 0.0
  %3530 = vmatpush1.msra.mxu0 0.0
  %3531 = vmatprep.subr.mxu0 0.0
  %3532 = vmatpush1.msra.mxu0 0.0
  %3533 = vmatprep.subr.mxu0 0.0
  %3534 = vmatpush1.msra.mxu0 0.0
  %3535 = vmatprep.subr.mxu0 0.0
  %3536 = vmatpush1.msra.mxu0 0.0
  %3537 = vmatprep.subr.mxu0 0.0
  %3538 = vmatpush1.msra.mxu0 0.0
  %3539 = vmatprep.subr.mxu0 0.0
  %3540 = vmatpush1.msra.mxu0 0.0
  %3541 = vmatprep.subr.mxu0 0.0
  %3542 = vmatpush1.msra.mxu0 0.0
  %3543 = vmatprep.subr.mxu0 0.0
  %3544 = vmatpush1.msra.mxu0 0.0
  %3545 = vmatprep.subr.mxu0 0.0
  %3546 = vmatpush1.msra.mxu0 0.0
  %3547 = vmatprep.subr.mxu0 0.0
  %3548 = vmatpush1.msra.mxu0 0.0
  %3549 = vmatprep.subr.mxu0 0.0
  %3550 = vmatpush1.msra.mxu0 0.0
  %3551 = vmatprep.subr.mxu0 0.0
  %3552 = vmatpush1.msra.mxu0 0.0
  %3553 = vmatprep.mubr.f32.mxu0 0.0
  %3554 = vmatmul.mubr.f32.gmra.mrb[0].mxu0 %v3487
  %v3555 = vpop.f32.mrb[0].mxu0
  %v3556 = vadd.f32 %v3484, %v3555
  %v3557 = vpop.f32.mrb[0].mxu0
  %3558 = vdwg.mxu0
  %v3559 = vmax.f32 %v3556, 0.0
  %v3560 = vld [vmem:[%s8] sm:$0xff]
  %v3561 = vld [vmem:[%s8 + $0x8] sm:$0xff]
  %v3562 = vld [vmem:[%s8 + $0x10] sm:$0xff]
  %v3563 = vld [vmem:[%s8 + $0x18] sm:$0xff]
  %v3564 = vld [vmem:[%s6 + $0x2] sm:$0x1]
  %v3565 = vlaneseq
  %v3566 = vshrl.u32 %v3565, 7
  %v3567 = vsub.s32 0, %v3566
  %v3568 = vrot.slane %v3564, %v3567
  %v3570 = vsel %vm3485, %v3559, 0
  %3572 = vmatprep.subr.mxu0 0.0
  %3573 = vmatpush1.msra.mxu0 %v3560
  %3574 = vmatprep.subr.mxu0 0.0
  %3575 = vmatpush1.msra.mxu0 %v3561
  %3576 = vmatprep.subr.mxu0 0.0
  %3577 = vmatpush1.msra.mxu0 %v3562
  %3578 = vmatprep.subr.mxu0 0.0
  %3579 = vmatpush1.msra.mxu0 %v3563
  %3580 = vmatprep.subr.mxu0 0.0
  %3581 = vmatpush1.msra.mxu0 0.0
  %3582 = vmatprep.subr.mxu0 0.0
  %3583 = vmatpush1.msra.mxu0 0.0
  %3584 = vmatprep.subr.mxu0 0.0
  %3585 = vmatpush1.msra.mxu0 0.0
  %3586 = vmatprep.subr.mxu0 0.0
  %3587 = vmatpush1.msra.mxu0 0.0
  %3588 = vmatprep.subr.mxu0 0.0
  %3589 = vmatpush1.msra.mxu0 0.0
  %3590 = vmatprep.subr.mxu0 0.0
  %3591 = vmatpush1.msra.mxu0 0.0
  %3592 = vmatprep.subr.mxu0 0.0
  %3593 = vmatpush1.msra.mxu0 0.0
  %3594 = vmatprep.subr.mxu0 0.0
  %3595 = vmatpush1.msra.mxu0 0.0
  %3596 = vmatprep.subr.mxu0 0.0
  %3597 = vmatpush1.msra.mxu0 0.0
  %3598 = vmatprep.subr.mxu0 0.0
  %3599 = vmatpush1.msra.mxu0 0.0
  %3600 = vmatprep.subr.mxu0 0.0
  %3601 = vmatpush1.msra.mxu0 0.0
  %3602 = vmatprep.subr.mxu0 0.0
  %3603 = vmatpush1.msra.mxu0 0.0
  %3604 = vmatprep.subr.mxu0 0.0
  %3605 = vmatpush1.msra.mxu0 0.0
  %3606 = vmatprep.subr.mxu0 0.0
  %3607 = vmatpush1.msra.mxu0 0.0
  %3608 = vmatprep.subr.mxu0 0.0
  %3609 = vmatpush1.msra.mxu0 0.0
  %3610 = vmatprep.subr.mxu0 0.0
  %3611 = vmatpush1.msra.mxu0 0.0
  %3612 = vmatprep.subr.mxu0 0.0
  %3613 = vmatpush1.msra.mxu0 0.0
  %3614 = vmatprep.subr.mxu0 0.0
  %3615 = vmatpush1.msra.mxu0 0.0
  %3616 = vmatprep.subr.mxu0 0.0
  %3617 = vmatpush1.msra.mxu0 0.0
  %3618 = vmatprep.subr.mxu0 0.0
  %3619 = vmatpush1.msra.mxu0 0.0
  %3620 = vmatprep.subr.mxu0 0.0
  %3621 = vmatpush1.msra.mxu0 0.0
  %3622 = vmatprep.subr.mxu0 0.0
  %3623 = vmatpush1.msra.mxu0 0.0
  %3624 = vmatprep.subr.mxu0 0.0
  %3625 = vmatpush1.msra.mxu0 0.0
  %3626 = vmatprep.subr.mxu0 0.0
  %3627 = vmatpush1.msra.mxu0 0.0
  %3628 = vmatprep.subr.mxu0 0.0
  %3629 = vmatpush1.msra.mxu0 0.0
  %3630 = vmatprep.subr.mxu0 0.0
  %3631 = vmatpush1.msra.mxu0 0.0
  %3632 = vmatprep.subr.mxu0 0.0
  %3633 = vmatpush1.msra.mxu0 0.0
  %3634 = vmatprep.subr.mxu0 0.0
  %3635 = vmatpush1.msra.mxu0 0.0
  %3636 = vmatprep.mubr.f32.mxu0 0.0
  %3637 = vmatmul.mubr.f32.gmra.mrb[0].mxu0 %v3570
  %v3638 = vpop.f32.mrb[0].mxu0
  %v3639 = vadd.f32 %v3568, %v3638
  %v3640 = vpop.f32.mrb[0].mxu0
  %3641 = vdwg.mxu0
  %v3642 = vmax.f32 %v3639, 0.0
  %v3643 = vld [vmem:[%s9] sm:$0xff]
  %v3644 = vld [vmem:[%s9 + $0x8] sm:$0xff]
  %v3645 = vld [vmem:[%s9 + $0x10] sm:$0xff]
  %v3646 = vld [vmem:[%s9 + $0x18] sm:$0xff]
  %v3647 = vld [vmem:[%s11] sm:$0x1]
  %v3649 = vlaneseq
  %v3650 = vshrl.u32 %v3649, 7
  %v3651 = vsub.s32 0, %v3650
  %v3652 = vrot.slane %v3647, %v3651
  %v3655 = vsel %vm3485, %v3642, 0
  %3657 = vmatprep.subr.mxu0 0.0
  %3658 = vmatpush1.msra.mxu0 %v3643
  %3659 = vmatprep.subr.mxu0 0.0
  %3660 = vmatpush1.msra.mxu0 %v3644
  %3661 = vmatprep.subr.mxu0 0.0
  %3662 = vmatpush1.msra.mxu0 %v3645
  %3663 = vmatprep.subr.mxu0 0.0
  %3664 = vmatpush1.msra.mxu0 %v3646
  %3665 = vmatprep.subr.mxu0 0.0
  %3666 = vmatpush1.msra.mxu0 0.0
  %3667 = vmatprep.subr.mxu0 0.0
  %3668 = vmatpush1.msra.mxu0 0.0
  %3669 = vmatprep.subr.mxu0 0.0
  %3670 = vmatpush1.msra.mxu0 0.0
  %3671 = vmatprep.subr.mxu0 0.0
  %3672 = vmatpush1.msra.mxu0 0.0
  %3673 = vmatprep.subr.mxu0 0.0
  %3674 = vmatpush1.msra.mxu0 0.0
  %3675 = vmatprep.subr.mxu0 0.0
  %3676 = vmatpush1.msra.mxu0 0.0
  %3677 = vmatprep.subr.mxu0 0.0
  %3678 = vmatpush1.msra.mxu0 0.0
  %3679 = vmatprep.subr.mxu0 0.0
  %3680 = vmatpush1.msra.mxu0 0.0
  %3681 = vmatprep.subr.mxu0 0.0
  %3682 = vmatpush1.msra.mxu0 0.0
  %3683 = vmatprep.subr.mxu0 0.0
  %3684 = vmatpush1.msra.mxu0 0.0
  %3685 = vmatprep.subr.mxu0 0.0
  %3686 = vmatpush1.msra.mxu0 0.0
  %3687 = vmatprep.subr.mxu0 0.0
  %3688 = vmatpush1.msra.mxu0 0.0
  %3689 = vmatprep.subr.mxu0 0.0
  %3690 = vmatpush1.msra.mxu0 0.0
  %3691 = vmatprep.subr.mxu0 0.0
  %3692 = vmatpush1.msra.mxu0 0.0
  %3693 = vmatprep.subr.mxu0 0.0
  %3694 = vmatpush1.msra.mxu0 0.0
  %3695 = vmatprep.subr.mxu0 0.0
  %3696 = vmatpush1.msra.mxu0 0.0
  %3697 = vmatprep.subr.mxu0 0.0
  %3698 = vmatpush1.msra.mxu0 0.0
  %3699 = vmatprep.subr.mxu0 0.0
  %3700 = vmatpush1.msra.mxu0 0.0
  %3701 = vmatprep.subr.mxu0 0.0
  %3702 = vmatpush1.msra.mxu0 0.0
  %3703 = vmatprep.subr.mxu0 0.0
  %3704 = vmatpush1.msra.mxu0 0.0
  %3705 = vmatprep.subr.mxu0 0.0
  %3706 = vmatpush1.msra.mxu0 0.0
  %3707 = vmatprep.subr.mxu0 0.0
  %3708 = vmatpush1.msra.mxu0 0.0
  %3709 = vmatprep.subr.mxu0 0.0
  %3710 = vmatpush1.msra.mxu0 0.0
  %3711 = vmatprep.subr.mxu0 0.0
  %3712 = vmatpush1.msra.mxu0 0.0
  %3713 = vmatprep.subr.mxu0 0.0
  %3714 = vmatpush1.msra.mxu0 0.0
  %3715 = vmatprep.subr.mxu0 0.0
  %3716 = vmatpush1.msra.mxu0 0.0
  %3717 = vmatprep.subr.mxu0 0.0
  %3718 = vmatpush1.msra.mxu0 0.0
  %3719 = vmatprep.subr.mxu0 0.0
  %3720 = vmatpush1.msra.mxu0 0.0
  %3721 = vmatprep.mubr.f32.mxu0 0.0
  %3722 = vmatmul.mubr.f32.gmra.mrb[0].mxu0 %v3655
  %v3723 = vpop.f32.mrb[0].mxu0
  %v3724 = vadd.f32 %v3652, %v3723
  %v3725 = vpop.f32.mrb[0].mxu0
  %3726 = vdwg.mxu0
  %3728 = vrot.lane.b32.xlu0 %v3724, 64
  %v3729 = vpop.permute.xlu0 %3728
  %vm3731 = vcmask 523264
  %v3732 = vsel %vm3731, %v1703, %v3729
  %3733 = vst [vmem:[%s12] sm:$0x3] %v3732
  // Predicated region
  $region50: #{linennue_forward.1} parent=0 // pred_check
    _
  $region51: #{linennue_forward.1} parent=0 // pred_check_branch
    %3735 = sbr.rel (0) target = $region53
  $region52: #{linennue_forward.1} parent=0 // pred_region
    _
  $region53: #{linennue_forward.1} parent=0 // pred_fallthru
    _
  // Predicated region
  $region54: #{linennue_forward.1} parent=0 // pred_check
    _
  $region55: #{linennue_forward.1} parent=0 // pred_check_branch
    %3737 = sbr.rel (0) target = $region57
  $region56: #{linennue_forward.1} parent=0 // pred_region
    _
  $region57: #{linennue_forward.1} parent=0 // pred_fallthru
    _

</llo_original>
